<compile_context>
chip_gen: v5e
topology: v5e:2x2
jax: 0.10.0
libtpu: 0.0.40
codegen_flags: <defaults>
</compile_context>

<pallas_src>
import functools
import math

import jax
import jax.numpy as jnp
from jax import lax
from jax.experimental import pallas as pl
from jax.experimental.pallas import tpu as pltpu

LN_EPS = 1e-5
MXU_DTYPE = jnp.bfloat16          # MXU-native input dtype on v5e/v6e/v7x.


# ----------------------------------------------------------------------------
# In-kernel helpers
# ----------------------------------------------------------------------------
def _layer_norm(z, gamma, beta, eps):
    mean = jnp.mean(z, axis=-1, keepdims=True)
    var = jnp.mean((z - mean) ** 2, axis=-1, keepdims=True)
    return gamma * ((z - mean) * lax.rsqrt(var + eps)) + beta


def _attention_sub_block(kv_in, q_in, mask, wq, bq, wk, bk, wv, bv, wo, bo,
                         gamma, beta, vhs_ref, *, num_heads, head_dim, eps):
    """LayerNorm(out_proj(attention(Q(q_in), K(kv_in), V(kv_in))) + kv_in).

    kv_in is both the K/V source and the residual branch (matches the module:
    self-attention -> kv_in == q_in == y; cross-attention -> kv_in = decoder
    state y, q_in = encoder output x).
    """
    H, Dh = num_heads, head_dim
    S, D = kv_in.shape

    kv_bf = kv_in.astype(MXU_DTYPE)
    q_bf = q_in.astype(MXU_DTYPE)
    # Projections: weights are (in, out) with head-contiguous output columns,
    # so no in-kernel weight transpose / strided per-head slicing is needed.
    q = jnp.dot(q_bf, wq, preferred_element_type=jnp.float32) + bq
    k = jnp.dot(kv_bf, wk, preferred_element_type=jnp.float32) + bk
    v = jnp.dot(kv_bf, wv, preferred_element_type=jnp.float32) + bv

    # (S, D) -> (H, S, Dh) via static per-head column slices (avoids an
    # in-kernel minor-dim reshape).
    def to_heads(m):
        if H == 1:
            return m[None, :, :]
        return jnp.stack([m[:, h * Dh:(h + 1) * Dh] for h in range(H)], axis=0)

    q3 = to_heads(q).astype(MXU_DTYPE)
    k3 = to_heads(k).astype(MXU_DTYPE)
    v3 = to_heads(v).astype(MXU_DTYPE)

    # Batched over heads: Q @ K^T (transposed-RHS form, no k.T materialized).
    scores = jnp.einsum("hqd,hkd->hqk", q3, k3,
                        preferred_element_type=jnp.float32)
    scores = scores * (1.0 / math.sqrt(Dh))
    if mask is not None:
        scores = scores + mask[None, :, :]
    scores = scores - jnp.max(scores, axis=-1, keepdims=True)
    p = jnp.exp(scores)
    p = p * pl.reciprocal(jnp.sum(p, axis=-1, keepdims=True), approx=True)
    vals = jnp.einsum("hqk,hkd->hqd", p.astype(MXU_DTYPE), v3,
                      preferred_element_type=jnp.float32)         # (H, S, Dh)

    # The module's `values.reshape(B, S, D)` is a head-major flatten: output
    # row s is the flat slice [s*D, (s+1)*D) of the (H, S, Dh) values, i.e.
    # column chunk t of the (S, D) result is rows t::H of the head-stacked
    # (H*S, Dh) matrix.  Materialize the head-stack in a small VMEM scratch
    # (H contiguous stores) and gather the chunks back with sublane-strided
    # reads -- O(H) ops instead of an O(S*H) row-slice loop.
    if H == 1:
        vals2d = vals[0]
    else:
        for h in range(H):
            vhs_ref[h * S:(h + 1) * S, :] = vals[h]
        chunks = [vhs_ref[pl.ds(t, S, stride=H), :] for t in range(H)]
        vals2d = jnp.concatenate(chunks, axis=1)                  # (S, D)

    # Fused output projection + residual add (residual == K/V source) + LN.
    # TODO(synk): dropout before the residual add is identity (eval mode).
    attn = jnp.dot(vals2d.astype(MXU_DTYPE), wo,
                   preferred_element_type=jnp.float32) + bo
    return _layer_norm(attn + kv_in, gamma, beta, eps)


def _ffn_sub_block(y, w1, b1, w2, b2, gamma, beta, *, eps):
    h = jnp.dot(y.astype(MXU_DTYPE), w1, preferred_element_type=jnp.float32) + b1
    h = jnp.maximum(h, 0.0)
    # TODO(synk): dropout inside the FFN / before the residual is identity.
    f = jnp.dot(h.astype(MXU_DTYPE), w2, preferred_element_type=jnp.float32) + b2
    return _layer_norm(f + y, gamma, beta, eps)


def _decoder_layer_kernel(*refs, num_heads, head_dim, eps):
    (x_ref, y_ref, mask_ref,
     s_wq, s_bq, s_wk, s_bk, s_wv, s_bv, s_wo, s_bo, n1_g, n1_b,
     c_wq, c_bq, c_wk, c_bk, c_wv, c_bv, c_wo, c_bo, n2_g, n2_b,
     f_w1, f_b1, f_w2, f_b2, n3_g, n3_b,
     o_ref, vhs_ref) = refs

    y = y_ref[...]                    # decoder state (S, D); also the residual
    x = x_ref[...]                    # encoder output (S, D)

    # ---- masked self-attention + residual + LayerNorm ----
    y = _attention_sub_block(
        y, y, mask_ref[...],
        s_wq[...], s_bq[...], s_wk[...], s_bk[...], s_wv[...], s_bv[...],
        s_wo[...], s_bo[...], n1_g[...], n1_b[...], vhs_ref,
        num_heads=num_heads, head_dim=head_dim, eps=eps)

    # ---- encoder-decoder cross-attention + residual + LayerNorm ----
    # Module: MultiheadCrossAttention(y, x): K/V (and the residual) come from
    # the decoder state y, Q from the encoder output x, no mask.
    y = _attention_sub_block(
        y, x, None,
        c_wq[...], c_bq[...], c_wk[...], c_bk[...], c_wv[...], c_bv[...],
        c_wo[...], c_bo[...], n2_g[...], n2_b[...], vhs_ref,
        num_heads=num_heads, head_dim=head_dim, eps=eps)

    # ---- position-wise FFN + residual + LayerNorm ----
    y = _ffn_sub_block(y, f_w1[...], f_b1[...], f_w2[...], f_b2[...],
                       n3_g[...], n3_b[...], eps=eps)

    o_ref[...] = y


# ----------------------------------------------------------------------------
# Pallas wrapper
# ----------------------------------------------------------------------------
def _full_spec(arr):
    nd = arr.ndim
    return pl.BlockSpec(arr.shape, lambda b, _nd=nd: (0,) * _nd)


def _split_fused_proj(w, b, num_heads, head_dim, n_parts):
    """Split a fused PyTorch-layout (n_parts*D, D) projection into n_parts
    separate (in=D, out=D) weights whose output columns are head-contiguous,
    matching the module's reshape(B, S, H, n_parts*Dh) + chunk semantics."""
    D = num_heads * head_dim
    w4 = w.reshape(num_heads, n_parts, head_dim, D)
    b3 = b.reshape(num_heads, n_parts, head_dim)
    outs = []
    for p in range(n_parts):
        wp = w4[:, p].reshape(D, D).T            # (in, out)
        bp = b3[:, p].reshape(1, D)
        outs.append((wp, bp))
    return outs


def _decoder_layer_forward(x, y, mask, lp, num_heads):
    B, S, D = y.shape
    assert x.shape == y.shape, "module requires matching encoder/decoder shapes"
    Dh = D // num_heads
    Hd = lp["ffn_w1"].shape[0]

    wcast = lambda a: a.astype(MXU_DTYPE)                 # MXU weights in bf16
    vec = lambda a: a.reshape(1, -1).astype(jnp.float32)  # biases / LN in f32

    (swq, sbq), (swk, sbk), (swv, sbv) = _split_fused_proj(
        lp["self_w_qkv"], lp["self_b_qkv"], num_heads, Dh, 3)
    (cwk, cbk), (cwv, cbv) = _split_fused_proj(
        lp["cross_w_kv"], lp["cross_b_kv"], num_heads, Dh, 2)

    weights = [
        # self-attention: wq, bq, wk, bk, wv, bv, wo, bo, gamma1, beta1
        wcast(swq), sbq, wcast(swk), sbk, wcast(swv), sbv,
        wcast(lp["self_w_out"].T), vec(lp["self_b_out"]),
        vec(lp["norm1_gamma"]), vec(lp["norm1_beta"]),
        # cross-attention: wq, bq, wk, bk, wv, bv, wo, bo, gamma2, beta2
        wcast(lp["cross_w_q"].T), vec(lp["cross_b_q"]),
        wcast(cwk), cbk, wcast(cwv), cbv,
        wcast(lp["cross_w_out"].T), vec(lp["cross_b_out"]),
        vec(lp["norm2_gamma"]), vec(lp["norm2_beta"]),
        # ffn: w1, b1, w2, b2, gamma3, beta3
        wcast(lp["ffn_w1"].T), vec(lp["ffn_b1"]),
        wcast(lp["ffn_w2"].T), vec(lp["ffn_b2"]),
        vec(lp["norm3_gamma"]), vec(lp["norm3_beta"]),
    ]

    act_spec = pl.BlockSpec((None, S, D), lambda b: (b, 0, 0))
    in_specs = [act_spec, act_spec, pl.BlockSpec((S, S), lambda b: (0, 0))]
    in_specs += [_full_spec(w) for w in weights]

    # VMEM budget: double-buffered activation / mask / weight blocks + the
    # head-stack scratch + headroom for in-kernel intermediates.  Re-derive
    # the 64 MiB cap per generation (== v7x physical VMEM).
    nbytes = lambda a: int(a.size) * a.dtype.itemsize
    weight_bytes = sum(nbytes(w) for w in weights)
    block_bytes = 2 * (3 * S * D * 4 + S * S * 4 + weight_bytes)
    work_bytes = 4 * (4 * num_heads * S * S + 2 * S * Hd + 16 * S * D) + S * D * 4
    vmem_limit = int(min(max(block_bytes + work_bytes + (4 << 20), 32 << 20),
                         64 << 20))

    flops = B * (16 * S * D * D + 8 * S * S * D + 4 * S * D * Hd)
    bytes_accessed = 3 * B * S * D * 4 + S * S * 4 + weight_bytes
    cost = pl.CostEstimate(flops=int(flops),
                           transcendentals=int(2 * B * num_heads * S * S),
                           bytes_accessed=int(bytes_accessed))

    kernel = functools.partial(_decoder_layer_kernel, num_heads=num_heads,
                               head_dim=Dh, eps=LN_EPS)
    return pl.pallas_call(
        kernel,
        out_shape=jax.ShapeDtypeStruct((B, S, D), jnp.float32),
        grid=(B,),
        in_specs=in_specs,
        out_specs=pl.BlockSpec((None, S, D), lambda b: (b, 0, 0)),
        scratch_shapes=[pltpu.VMEM((num_heads * S, Dh), jnp.float32)],
        compiler_params=pltpu.CompilerParams(
            dimension_semantics=("parallel",),
            vmem_limit_bytes=vmem_limit),
        cost_estimate=cost,
    )(x, y, mask, *weights)


def decoder_forward(x, y, mask, params, num_heads):
    S = y.shape[1]
    if mask is None:
        mask = jnp.zeros((S, S), jnp.float32)
    mask = mask.astype(jnp.float32)
    for lp in params["layers"]:
        y = _decoder_layer_forward(x, y, mask, lp, num_heads)
    return y


# ----------------------------------------------------------------------------
# Parameters (PyTorch-Linear-style init) and pure-JAX f32 reference
# ----------------------------------------------------------------------------
def _init_linear(key, out_features, in_features):
    kw, kb = jax.random.split(key)
    bound = 1.0 / math.sqrt(in_features)
    w = jax.random.uniform(kw, (out_features, in_features), jnp.float32, -bound, bound)
    b = jax.random.uniform(kb, (out_features,), jnp.float32, -bound, bound)
    return w, b


def init_decoder_params(key, d_model, ffn_hidden, num_layers):
    layers = []
    for _ in range(num_layers):
        key, *ks = jax.random.split(key, 8)
        w_qkv, b_qkv = _init_linear(ks[0], 3 * d_model, d_model)
        w_so, b_so = _init_linear(ks[1], d_model, d_model)
        w_kv, b_kv = _init_linear(ks[2], 2 * d_model, d_model)
        w_cq, b_cq = _init_linear(ks[3], d_model, d_model)
        w_co, b_co = _init_linear(ks[4], d_model, d_model)
        w1, b1 = _init_linear(ks[5], ffn_hidden, d_model)
        w2, b2 = _init_linear(ks[6], d_model, ffn_hidden)
        layers.append({
            "self_w_qkv": w_qkv, "self_b_qkv": b_qkv,
            "self_w_out": w_so, "self_b_out": b_so,
            "norm1_gamma": jnp.ones((d_model,), jnp.float32),
            "norm1_beta": jnp.zeros((d_model,), jnp.float32),
            "cross_w_kv": w_kv, "cross_b_kv": b_kv,
            "cross_w_q": w_cq, "cross_b_q": b_cq,
            "cross_w_out": w_co, "cross_b_out": b_co,
            "norm2_gamma": jnp.ones((d_model,), jnp.float32),
            "norm2_beta": jnp.zeros((d_model,), jnp.float32),
            "ffn_w1": w1, "ffn_b1": b1,
            "ffn_w2": w2, "ffn_b2": b2,
            "norm3_gamma": jnp.ones((d_model,), jnp.float32),
            "norm3_beta": jnp.zeros((d_model,), jnp.float32),
        })
    return {"layers": layers}


def _linear_ref(x, w, b):
    return x @ w.T + b


def _layer_norm_ref(x, gamma, beta, eps=LN_EPS):
    mean = x.mean(axis=-1, keepdims=True)
    var = ((x - mean) ** 2).mean(axis=-1, keepdims=True)
    return gamma * ((x - mean) / jnp.sqrt(var + eps)) + beta


def _sdp_ref(q, k, v, mask=None):
    d_k = q.shape[-1]
    scaled = jnp.einsum("bhqd,bhkd->bhqk", q, k) / math.sqrt(d_k)
    if mask is not None:
        scaled = scaled + mask
    attn = jax.nn.softmax(scaled, axis=-1)
    return jnp.einsum("bhqk,bhkd->bhqd", attn, v)


def _self_attention_ref(y, lp, num_heads, mask):
    B, S, D = y.shape
    Dh = D // num_heads
    qkv = _linear_ref(y, lp["self_w_qkv"], lp["self_b_qkv"])
    qkv = qkv.reshape(B, S, num_heads, 3 * Dh).transpose(0, 2, 1, 3)
    q, k, v = qkv[..., :Dh], qkv[..., Dh:2 * Dh], qkv[..., 2 * Dh:]
    values = _sdp_ref(q, k, v, mask)
    values = values.reshape(B, S, D)        # module's head-major flatten
    return _linear_ref(values, lp["self_w_out"], lp["self_b_out"])


def _cross_attention_ref(x_kv, y_q, lp, num_heads):
    B, S, D = x_kv.shape
    Dh = D // num_heads
    kv = _linear_ref(x_kv, lp["cross_w_kv"], lp["cross_b_kv"])
    q = _linear_ref(y_q, lp["cross_w_q"], lp["cross_b_q"])
    kv = kv.reshape(B, S, num_heads, 2 * Dh).transpose(0, 2, 1, 3)
    q = q.reshape(B, y_q.shape[1], num_heads, Dh).transpose(0, 2, 1, 3)
    k, v = kv[..., :Dh], kv[..., Dh:]
    values = _sdp_ref(q, k, v, None)
    values = values.reshape(B, S, D)
    return _linear_ref(values, lp["cross_w_out"], lp["cross_b_out"])


def decoder_reference(x, y, mask, params, num_heads):
    for lp in params["layers"]:
        _y = y
        y = _self_attention_ref(y, lp, num_heads, mask)
        y = _layer_norm_ref(y + _y, lp["norm1_gamma"], lp["norm1_beta"])
        _y = y
        y = _cross_attention_ref(y, x, lp, num_heads)
        y = _layer_norm_ref(y + _y, lp["norm2_gamma"], lp["norm2_beta"])
        _y = y
        h = jnp.maximum(_linear_ref(y, lp["ffn_w1"], lp["ffn_b1"]), 0.0)
        y = _linear_ref(h, lp["ffn_w2"], lp["ffn_b2"])
        y = _layer_norm_ref(y + _y, lp["norm3_gamma"], lp["norm3_beta"])
    return y


# ----------------------------------------------------------------------------
if __name__ == "__main__":
    B, S, D, H = 2, 8, 32, 4
    FFN_HIDDEN, NUM_LAYERS = 64, 2

    key = jax.random.PRNGKey(0)
    kx, ky, kp = jax.random.split(key, 3)
    x = jax.random.normal(kx, (B, S, D), jnp.float32)   # encoder output
    y = jax.random.normal(ky, (B, S, D), jnp.float32)   # decoder input
    params = init_decoder_params(kp, D, FFN_HIDDEN, NUM_LAYERS)

    # Additive causal decoder mask: 0 on/below the diagonal, -1e9 above.
    causal = jnp.triu(jnp.ones((S, S), dtype=jnp.bool_), k=1)
    mask = jnp.where(causal, -1e9, 0.0).astype(jnp.float32)

    fwd = jax.jit(functools.partial(decoder_forward, num_heads=H))
    out = fwd(x, y, mask, params)
    out = jax.block_until_ready(out)

    ref = decoder_reference(x, y, mask, params, H)
    assert out.shape == (B, S, D)
    # Kernel matmuls run on the MXU in bf16 (f32 accumulation); tolerance vs.
    # the pure-f32 reference is sized accordingly.
    max_diff = float(jnp.max(jnp.abs(out - ref)))
    assert jnp.allclose(out, ref, atol=1e-1, rtol=1e-1), (
        "mismatch vs reference: max abs diff = %e" % max_diff)

    print("KERNEL_OK")
</pallas_src>

<mosaic_0001>
module attributes {stable_mosaic.version = 11 : i64} {
  func.func @_decoder_layer_kernel(%arg0: i32, %arg1: memref<1x8x32xf32, #tpu.memory_space<vmem>>, %arg2: memref<1x8x32xf32, #tpu.memory_space<vmem>>, %arg3: memref<8x8xf32, #tpu.memory_space<vmem>>, %arg4: memref<32x32xbf16, #tpu.memory_space<vmem>>, %arg5: memref<1x32xf32, #tpu.memory_space<vmem>>, %arg6: memref<32x32xbf16, #tpu.memory_space<vmem>>, %arg7: memref<1x32xf32, #tpu.memory_space<vmem>>, %arg8: memref<32x32xbf16, #tpu.memory_space<vmem>>, %arg9: memref<1x32xf32, #tpu.memory_space<vmem>>, %arg10: memref<32x32xbf16, #tpu.memory_space<vmem>>, %arg11: memref<1x32xf32, #tpu.memory_space<vmem>>, %arg12: memref<1x32xf32, #tpu.memory_space<vmem>>, %arg13: memref<1x32xf32, #tpu.memory_space<vmem>>, %arg14: memref<32x32xbf16, #tpu.memory_space<vmem>>, %arg15: memref<1x32xf32, #tpu.memory_space<vmem>>, %arg16: memref<32x32xbf16, #tpu.memory_space<vmem>>, %arg17: memref<1x32xf32, #tpu.memory_space<vmem>>, %arg18: memref<32x32xbf16, #tpu.memory_space<vmem>>, %arg19: memref<1x32xf32, #tpu.memory_space<vmem>>, %arg20: memref<32x32xbf16, #tpu.memory_space<vmem>>, %arg21: memref<1x32xf32, #tpu.memory_space<vmem>>, %arg22: memref<1x32xf32, #tpu.memory_space<vmem>>, %arg23: memref<1x32xf32, #tpu.memory_space<vmem>>, %arg24: memref<32x64xbf16, #tpu.memory_space<vmem>>, %arg25: memref<1x64xf32, #tpu.memory_space<vmem>>, %arg26: memref<64x32xbf16, #tpu.memory_space<vmem>>, %arg27: memref<1x32xf32, #tpu.memory_space<vmem>>, %arg28: memref<1x32xf32, #tpu.memory_space<vmem>>, %arg29: memref<1x32xf32, #tpu.memory_space<vmem>>, %arg30: memref<1x8x32xf32, #tpu.memory_space<vmem>>, %arg31: memref<32x8xf32, #tpu.memory_space<vmem>>) attributes {dimension_semantics = [#tpu.dimension_semantics<parallel>], iteration_bounds = array<i64: 2>, scalar_prefetch = 0 : i64, scratch_operands = 1 : i64, tpu.core_type = #tpu.core_type<tc>, window_params = [{transform_indices = @transform_0, window_bounds = array<i64: 1, 8, 32>}, {transform_indices = @transform_1, window_bounds = array<i64: 1, 8, 32>}, {pipeline_mode = #tpu.pipeline_mode<synchronous>, transform_indices = @transform_2, window_bounds = array<i64: 8, 8>}, {pipeline_mode = #tpu.pipeline_mode<synchronous>, transform_indices = @transform_3, window_bounds = array<i64: 32, 32>}, {pipeline_mode = #tpu.pipeline_mode<synchronous>, transform_indices = @transform_4, window_bounds = array<i64: 1, 32>}, {pipeline_mode = #tpu.pipeline_mode<synchronous>, transform_indices = @transform_5, window_bounds = array<i64: 32, 32>}, {pipeline_mode = #tpu.pipeline_mode<synchronous>, transform_indices = @transform_6, window_bounds = array<i64: 1, 32>}, {pipeline_mode = #tpu.pipeline_mode<synchronous>, transform_indices = @transform_7, window_bounds = array<i64: 32, 32>}, {pipeline_mode = #tpu.pipeline_mode<synchronous>, transform_indices = @transform_8, window_bounds = array<i64: 1, 32>}, {pipeline_mode = #tpu.pipeline_mode<synchronous>, transform_indices = @transform_9, window_bounds = array<i64: 32, 32>}, {pipeline_mode = #tpu.pipeline_mode<synchronous>, transform_indices = @transform_10, window_bounds = array<i64: 1, 32>}, {pipeline_mode = #tpu.pipeline_mode<synchronous>, transform_indices = @transform_11, window_bounds = array<i64: 1, 32>}, {pipeline_mode = #tpu.pipeline_mode<synchronous>, transform_indices = @transform_12, window_bounds = array<i64: 1, 32>}, {pipeline_mode = #tpu.pipeline_mode<synchronous>, transform_indices = @transform_13, window_bounds = array<i64: 32, 32>}, {pipeline_mode = #tpu.pipeline_mode<synchronous>, transform_indices = @transform_14, window_bounds = array<i64: 1, 32>}, {pipeline_mode = #tpu.pipeline_mode<synchronous>, transform_indices = @transform_15, window_bounds = array<i64: 32, 32>}, {pipeline_mode = #tpu.pipeline_mode<synchronous>, transform_indices = @transform_16, window_bounds = array<i64: 1, 32>}, {pipeline_mode = #tpu.pipeline_mode<synchronous>, transform_indices = @transform_17, window_bounds = array<i64: 32, 32>}, {pipeline_mode = #tpu.pipeline_mode<synchronous>, transform_indices = @transform_18, window_bounds = array<i64: 1, 32>}, {pipeline_mode = #tpu.pipeline_mode<synchronous>, transform_indices = @transform_19, window_bounds = array<i64: 32, 32>}, {pipeline_mode = #tpu.pipeline_mode<synchronous>, transform_indices = @transform_20, window_bounds = array<i64: 1, 32>}, {pipeline_mode = #tpu.pipeline_mode<synchronous>, transform_indices = @transform_21, window_bounds = array<i64: 1, 32>}, {pipeline_mode = #tpu.pipeline_mode<synchronous>, transform_indices = @transform_22, window_bounds = array<i64: 1, 32>}, {pipeline_mode = #tpu.pipeline_mode<synchronous>, transform_indices = @transform_23, window_bounds = array<i64: 32, 64>}, {pipeline_mode = #tpu.pipeline_mode<synchronous>, transform_indices = @transform_24, window_bounds = array<i64: 1, 64>}, {pipeline_mode = #tpu.pipeline_mode<synchronous>, transform_indices = @transform_25, window_bounds = array<i64: 64, 32>}, {pipeline_mode = #tpu.pipeline_mode<synchronous>, transform_indices = @transform_26, window_bounds = array<i64: 1, 32>}, {pipeline_mode = #tpu.pipeline_mode<synchronous>, transform_indices = @transform_27, window_bounds = array<i64: 1, 32>}, {pipeline_mode = #tpu.pipeline_mode<synchronous>, transform_indices = @transform_28, window_bounds = array<i64: 1, 32>}, {transform_indices = @transform_29, window_bounds = array<i64: 1, 8, 32>}]} {
    %c0 = arith.constant 0 : index
    %c0_0 = arith.constant 0 : index
    %c0_1 = arith.constant 0 : index
    %0 = vector.load %arg2[%c0, %c0_0, %c0_1] : memref<1x8x32xf32, #tpu.memory_space<vmem>>, vector<1x8x32xf32>
    %1 = vector.shape_cast %0 : vector<1x8x32xf32> to vector<8x32xf32>
    %c0_2 = arith.constant 0 : index
    %c0_3 = arith.constant 0 : index
    %c0_4 = arith.constant 0 : index
    %2 = vector.load %arg1[%c0_2, %c0_3, %c0_4] : memref<1x8x32xf32, #tpu.memory_space<vmem>>, vector<1x8x32xf32>
    %3 = vector.shape_cast %2 : vector<1x8x32xf32> to vector<8x32xf32>
    %c0_5 = arith.constant 0 : index
    %c0_6 = arith.constant 0 : index
    %4 = vector.load %arg3[%c0_5, %c0_6] : memref<8x8xf32, #tpu.memory_space<vmem>>, vector<8x8xf32>
    %c0_7 = arith.constant 0 : index
    %c0_8 = arith.constant 0 : index
    %5 = vector.load %arg4[%c0_7, %c0_8] : memref<32x32xbf16, #tpu.memory_space<vmem>>, vector<32x32xbf16>
    %c0_9 = arith.constant 0 : index
    %c0_10 = arith.constant 0 : index
    %6 = vector.load %arg5[%c0_9, %c0_10] : memref<1x32xf32, #tpu.memory_space<vmem>>, vector<1x32xf32>
    %c0_11 = arith.constant 0 : index
    %c0_12 = arith.constant 0 : index
    %7 = vector.load %arg6[%c0_11, %c0_12] : memref<32x32xbf16, #tpu.memory_space<vmem>>, vector<32x32xbf16>
    %c0_13 = arith.constant 0 : index
    %c0_14 = arith.constant 0 : index
    %8 = vector.load %arg7[%c0_13, %c0_14] : memref<1x32xf32, #tpu.memory_space<vmem>>, vector<1x32xf32>
    %c0_15 = arith.constant 0 : index
    %c0_16 = arith.constant 0 : index
    %9 = vector.load %arg8[%c0_15, %c0_16] : memref<32x32xbf16, #tpu.memory_space<vmem>>, vector<32x32xbf16>
    %c0_17 = arith.constant 0 : index
    %c0_18 = arith.constant 0 : index
    %10 = vector.load %arg9[%c0_17, %c0_18] : memref<1x32xf32, #tpu.memory_space<vmem>>, vector<1x32xf32>
    %c0_19 = arith.constant 0 : index
    %c0_20 = arith.constant 0 : index
    %11 = vector.load %arg10[%c0_19, %c0_20] : memref<32x32xbf16, #tpu.memory_space<vmem>>, vector<32x32xbf16>
    %c0_21 = arith.constant 0 : index
    %c0_22 = arith.constant 0 : index
    %12 = vector.load %arg11[%c0_21, %c0_22] : memref<1x32xf32, #tpu.memory_space<vmem>>, vector<1x32xf32>
    %c0_23 = arith.constant 0 : index
    %c0_24 = arith.constant 0 : index
    %13 = vector.load %arg12[%c0_23, %c0_24] : memref<1x32xf32, #tpu.memory_space<vmem>>, vector<1x32xf32>
    %c0_25 = arith.constant 0 : index
    %c0_26 = arith.constant 0 : index
    %14 = vector.load %arg13[%c0_25, %c0_26] : memref<1x32xf32, #tpu.memory_space<vmem>>, vector<1x32xf32>
    %15 = arith.truncf %1 : vector<8x32xf32> to vector<8x32xbf16>
    %16 = arith.truncf %1 : vector<8x32xf32> to vector<8x32xbf16>
    %cst = arith.constant dense<0.000000e+00> : vector<8x32xf32>
    %17 = tpu.matmul %16, %5, %cst {dimension_numbers = #tpu.dot_dimension_numbers<[1], [0], [0], [1], [0, 0, 1, 1], [], []>} : vector<8x32xbf16>, vector<32x32xbf16>, vector<8x32xf32> -> vector<8x32xf32>
    %18 = vector.broadcast %6 : vector<1x32xf32> to vector<8x32xf32>
    %19 = arith.addf %17, %18 : vector<8x32xf32>
    %cst_27 = arith.constant dense<0.000000e+00> : vector<8x32xf32>
    %20 = tpu.matmul %15, %7, %cst_27 {dimension_numbers = #tpu.dot_dimension_numbers<[1], [0], [0], [1], [0, 0, 1, 1], [], []>} : vector<8x32xbf16>, vector<32x32xbf16>, vector<8x32xf32> -> vector<8x32xf32>
    %21 = vector.broadcast %8 : vector<1x32xf32> to vector<8x32xf32>
    %22 = arith.addf %20, %21 : vector<8x32xf32>
    %cst_28 = arith.constant dense<0.000000e+00> : vector<8x32xf32>
    %23 = tpu.matmul %15, %9, %cst_28 {dimension_numbers = #tpu.dot_dimension_numbers<[1], [0], [0], [1], [0, 0, 1, 1], [], []>} : vector<8x32xbf16>, vector<32x32xbf16>, vector<8x32xf32> -> vector<8x32xf32>
    %24 = vector.broadcast %10 : vector<1x32xf32> to vector<8x32xf32>
    %25 = arith.addf %23, %24 : vector<8x32xf32>
    %26 = vector.extract_strided_slice %19 {offsets = [0, 0], sizes = [8, 8], strides = [1, 1]} : vector<8x32xf32> to vector<8x8xf32>
    %27 = vector.extract_strided_slice %19 {offsets = [0, 8], sizes = [8, 8], strides = [1, 1]} : vector<8x32xf32> to vector<8x8xf32>
    %28 = vector.extract_strided_slice %19 {offsets = [0, 16], sizes = [8, 8], strides = [1, 1]} : vector<8x32xf32> to vector<8x8xf32>
    %29 = vector.extract_strided_slice %19 {offsets = [0, 24], sizes = [8, 8], strides = [1, 1]} : vector<8x32xf32> to vector<8x8xf32>
    %30 = vector.shape_cast %26 : vector<8x8xf32> to vector<1x8x8xf32>
    %31 = vector.shape_cast %27 : vector<8x8xf32> to vector<1x8x8xf32>
    %32 = vector.shape_cast %28 : vector<8x8xf32> to vector<1x8x8xf32>
    %33 = vector.shape_cast %29 : vector<8x8xf32> to vector<1x8x8xf32>
    %34 = tpu.concatenate %30, %31, %32, %33 in 0 : vector<1x8x8xf32>, vector<1x8x8xf32>, vector<1x8x8xf32>, vector<1x8x8xf32> -> vector<4x8x8xf32>
    %35 = arith.truncf %34 : vector<4x8x8xf32> to vector<4x8x8xbf16>
    %36 = vector.extract_strided_slice %22 {offsets = [0, 0], sizes = [8, 8], strides = [1, 1]} : vector<8x32xf32> to vector<8x8xf32>
    %37 = vector.extract_strided_slice %22 {offsets = [0, 8], sizes = [8, 8], strides = [1, 1]} : vector<8x32xf32> to vector<8x8xf32>
    %38 = vector.extract_strided_slice %22 {offsets = [0, 16], sizes = [8, 8], strides = [1, 1]} : vector<8x32xf32> to vector<8x8xf32>
    %39 = vector.extract_strided_slice %22 {offsets = [0, 24], sizes = [8, 8], strides = [1, 1]} : vector<8x32xf32> to vector<8x8xf32>
    %40 = vector.shape_cast %36 : vector<8x8xf32> to vector<1x8x8xf32>
    %41 = vector.shape_cast %37 : vector<8x8xf32> to vector<1x8x8xf32>
    %42 = vector.shape_cast %38 : vector<8x8xf32> to vector<1x8x8xf32>
    %43 = vector.shape_cast %39 : vector<8x8xf32> to vector<1x8x8xf32>
    %44 = tpu.concatenate %40, %41, %42, %43 in 0 : vector<1x8x8xf32>, vector<1x8x8xf32>, vector<1x8x8xf32>, vector<1x8x8xf32> -> vector<4x8x8xf32>
    %45 = arith.truncf %44 : vector<4x8x8xf32> to vector<4x8x8xbf16>
    %46 = vector.extract_strided_slice %25 {offsets = [0, 0], sizes = [8, 8], strides = [1, 1]} : vector<8x32xf32> to vector<8x8xf32>
    %47 = vector.extract_strided_slice %25 {offsets = [0, 8], sizes = [8, 8], strides = [1, 1]} : vector<8x32xf32> to vector<8x8xf32>
    %48 = vector.extract_strided_slice %25 {offsets = [0, 16], sizes = [8, 8], strides = [1, 1]} : vector<8x32xf32> to vector<8x8xf32>
    %49 = vector.extract_strided_slice %25 {offsets = [0, 24], sizes = [8, 8], strides = [1, 1]} : vector<8x32xf32> to vector<8x8xf32>
    %50 = vector.shape_cast %46 : vector<8x8xf32> to vector<1x8x8xf32>
    %51 = vector.shape_cast %47 : vector<8x8xf32> to vector<1x8x8xf32>
    %52 = vector.shape_cast %48 : vector<8x8xf32> to vector<1x8x8xf32>
    %53 = vector.shape_cast %49 : vector<8x8xf32> to vector<1x8x8xf32>
    %54 = tpu.concatenate %50, %51, %52, %53 in 0 : vector<1x8x8xf32>, vector<1x8x8xf32>, vector<1x8x8xf32>, vector<1x8x8xf32> -> vector<4x8x8xf32>
    %55 = arith.truncf %54 : vector<4x8x8xf32> to vector<4x8x8xbf16>
    "tpu.trace_start"() <{level = 10 : i32, message = "hqd,hkd->hqk"}> : () -> ()
    %cst_29 = arith.constant dense<0.000000e+00> : vector<4x8x8xf32>
    %56 = tpu.matmul %35, %45, %cst_29 {dimension_numbers = #tpu.dot_dimension_numbers<[2], [2], [1], [1], [0, 0, 0, 1, 1, 1], [0], [0]>} : vector<4x8x8xbf16>, vector<4x8x8xbf16>, vector<4x8x8xf32> -> vector<4x8x8xf32>
    "tpu.trace_stop"() : () -> ()
    %cst_30 = arith.constant 0.353553385 : f32
    %57 = vector.broadcast %cst_30 : f32 to vector<4x8x8xf32>
    %58 = arith.mulf %56, %57 : vector<4x8x8xf32>
    %59 = vector.shape_cast %4 : vector<8x8xf32> to vector<1x8x8xf32>
    %60 = vector.broadcast %59 : vector<1x8x8xf32> to vector<4x8x8xf32>
    %61 = arith.addf %58, %60 : vector<4x8x8xf32>
    %cst_31 = arith.constant dense<0xFF800000> : vector<4x8xf32>
    %62 = vector.multi_reduction <maximumf>, %61, %cst_31 [2] : vector<4x8x8xf32> to vector<4x8xf32>
    %63 = vector.shape_cast %62 : vector<4x8xf32> to vector<4x8x1xf32>
    %64 = vector.broadcast %63 : vector<4x8x1xf32> to vector<4x8x8xf32>
    %65 = arith.subf %61, %64 : vector<4x8x8xf32>
    %66 = math.exp %65 : vector<4x8x8xf32>
    %cst_32 = arith.constant dense<0.000000e+00> : vector<4x8xf32>
    %67 = vector.multi_reduction <add>, %66, %cst_32 [2] : vector<4x8x8xf32> to vector<4x8xf32>
    %68 = vector.shape_cast %67 : vector<4x8xf32> to vector<4x8x1xf32>
    %69 = tpu.reciprocal %68 {approx = true} : vector<4x8x1xf32> -> vector<4x8x1xf32>
    %70 = vector.broadcast %69 : vector<4x8x1xf32> to vector<4x8x8xf32>
    %71 = arith.mulf %66, %70 : vector<4x8x8xf32>
    %72 = arith.truncf %71 : vector<4x8x8xf32> to vector<4x8x8xbf16>
    "tpu.trace_start"() <{level = 10 : i32, message = "hqk,hkd->hqd"}> : () -> ()
    %cst_33 = arith.constant dense<0.000000e+00> : vector<4x8x8xf32>
    %73 = tpu.matmul %72, %55, %cst_33 {dimension_numbers = #tpu.dot_dimension_numbers<[2], [1], [1], [2], [0, 0, 0, 1, 1, 2], [0], [0]>} : vector<4x8x8xbf16>, vector<4x8x8xbf16>, vector<4x8x8xf32> -> vector<4x8x8xf32>
    "tpu.trace_stop"() : () -> ()
    %74 = vector.extract_strided_slice %73 {offsets = [0, 0, 0], sizes = [1, 8, 8], strides = [1, 1, 1]} : vector<4x8x8xf32> to vector<1x8x8xf32>
    %75 = vector.shape_cast %74 : vector<1x8x8xf32> to vector<8x8xf32>
    %c0_34 = arith.constant 0 : index
    %c0_35 = arith.constant 0 : index
    %76 = vector.load %arg31[%c0_34, %c0_35] : memref<32x8xf32, #tpu.memory_space<vmem>>, vector<8x8xf32>
    tpu.vector_store %arg31[%c0_34, %c0_35], %75 {strides = array<i32>} : memref<32x8xf32, #tpu.memory_space<vmem>>, vector<8x8xf32>,
    %77 = vector.extract_strided_slice %73 {offsets = [1, 0, 0], sizes = [1, 8, 8], strides = [1, 1, 1]} : vector<4x8x8xf32> to vector<1x8x8xf32>
    %78 = vector.shape_cast %77 : vector<1x8x8xf32> to vector<8x8xf32>
    %c8 = arith.constant 8 : index
    %c0_36 = arith.constant 0 : index
    %79 = vector.load %arg31[%c8, %c0_36] : memref<32x8xf32, #tpu.memory_space<vmem>>, vector<8x8xf32>
    tpu.vector_store %arg31[%c8, %c0_36], %78 {strides = array<i32>} : memref<32x8xf32, #tpu.memory_space<vmem>>, vector<8x8xf32>,
    %80 = vector.extract_strided_slice %73 {offsets = [2, 0, 0], sizes = [1, 8, 8], strides = [1, 1, 1]} : vector<4x8x8xf32> to vector<1x8x8xf32>
    %81 = vector.shape_cast %80 : vector<1x8x8xf32> to vector<8x8xf32>
    %c16 = arith.constant 16 : index
    %c0_37 = arith.constant 0 : index
    %82 = vector.load %arg31[%c16, %c0_37] : memref<32x8xf32, #tpu.memory_space<vmem>>, vector<8x8xf32>
    tpu.vector_store %arg31[%c16, %c0_37], %81 {strides = array<i32>} : memref<32x8xf32, #tpu.memory_space<vmem>>, vector<8x8xf32>,
    %83 = vector.extract_strided_slice %73 {offsets = [3, 0, 0], sizes = [1, 8, 8], strides = [1, 1, 1]} : vector<4x8x8xf32> to vector<1x8x8xf32>
    %84 = vector.shape_cast %83 : vector<1x8x8xf32> to vector<8x8xf32>
    %c24 = arith.constant 24 : index
    %c0_38 = arith.constant 0 : index
    %85 = vector.load %arg31[%c24, %c0_38] : memref<32x8xf32, #tpu.memory_space<vmem>>, vector<8x8xf32>
    tpu.vector_store %arg31[%c24, %c0_38], %84 {strides = array<i32>} : memref<32x8xf32, #tpu.memory_space<vmem>>, vector<8x8xf32>,
    %c0_39 = arith.constant 0 : index
    %c0_40 = arith.constant 0 : index
    %86 = tpu.strided_load %arg31[%c0_39, %c0_40] {strides = array<i32: 4, 1>} : memref<32x8xf32, #tpu.memory_space<vmem>>, vector<8x8xf32>
    %c1 = arith.constant 1 : index
    %c0_41 = arith.constant 0 : index
    %87 = tpu.strided_load %arg31[%c1, %c0_41] {strides = array<i32: 4, 1>} : memref<32x8xf32, #tpu.memory_space<vmem>>, vector<8x8xf32>
    %c2 = arith.constant 2 : index
    %c0_42 = arith.constant 0 : index
    %88 = tpu.strided_load %arg31[%c2, %c0_42] {strides = array<i32: 4, 1>} : memref<32x8xf32, #tpu.memory_space<vmem>>, vector<8x8xf32>
    %c3 = arith.constant 3 : index
    %c0_43 = arith.constant 0 : index
    %89 = tpu.strided_load %arg31[%c3, %c0_43] {strides = array<i32: 4, 1>} : memref<32x8xf32, #tpu.memory_space<vmem>>, vector<8x8xf32>
    %90 = tpu.concatenate %86, %87, %88, %89 in 1 : vector<8x8xf32>, vector<8x8xf32>, vector<8x8xf32>, vector<8x8xf32> -> vector<8x32xf32>
    %91 = arith.truncf %90 : vector<8x32xf32> to vector<8x32xbf16>
    %cst_44 = arith.constant dense<0.000000e+00> : vector<8x32xf32>
    %92 = tpu.matmul %91, %11, %cst_44 {dimension_numbers = #tpu.dot_dimension_numbers<[1], [0], [0], [1], [0, 0, 1, 1], [], []>} : vector<8x32xbf16>, vector<32x32xbf16>, vector<8x32xf32> -> vector<8x32xf32>
    %93 = vector.broadcast %12 : vector<1x32xf32> to vector<8x32xf32>
    %94 = arith.addf %92, %93 : vector<8x32xf32>
    %95 = arith.addf %94, %1 : vector<8x32xf32>
    %cst_45 = arith.constant dense<0.000000e+00> : vector<8xf32>
    %96 = vector.multi_reduction <add>, %95, %cst_45 [1] : vector<8x32xf32> to vector<8xf32>
    %97 = vector.shape_cast %96 : vector<8xf32> to vector<8x1xf32>
    %cst_46 = arith.constant 3.200000e+01 : f32
    %98 = vector.broadcast %cst_46 : f32 to vector<8x1xf32>
    %99 = arith.divf %97, %98 : vector<8x1xf32>
    %100 = vector.broadcast %99 : vector<8x1xf32> to vector<8x32xf32>
    %101 = arith.subf %95, %100 : vector<8x32xf32>
    %102 = arith.mulf %101, %101 : vector<8x32xf32>
    %cst_47 = arith.constant dense<0.000000e+00> : vector<8xf32>
    %103 = vector.multi_reduction <add>, %102, %cst_47 [1] : vector<8x32xf32> to vector<8xf32>
    %104 = vector.shape_cast %103 : vector<8xf32> to vector<8x1xf32>
    %cst_48 = arith.constant 3.200000e+01 : f32
    %105 = vector.broadcast %cst_48 : f32 to vector<8x1xf32>
    %106 = arith.divf %104, %105 : vector<8x1xf32>
    %107 = vector.broadcast %99 : vector<8x1xf32> to vector<8x32xf32>
    %108 = arith.subf %95, %107 : vector<8x32xf32>
    %cst_49 = arith.constant 9.99999974E-6 : f32
    %109 = vector.broadcast %cst_49 : f32 to vector<8x1xf32>
    %110 = arith.addf %106, %109 : vector<8x1xf32>
    %111 = math.rsqrt %110 : vector<8x1xf32>
    %112 = vector.broadcast %111 : vector<8x1xf32> to vector<8x32xf32>
    %113 = arith.mulf %108, %112 : vector<8x32xf32>
    %114 = vector.broadcast %13 : vector<1x32xf32> to vector<8x32xf32>
    %115 = arith.mulf %114, %113 : vector<8x32xf32>
    %116 = vector.broadcast %14 : vector<1x32xf32> to vector<8x32xf32>
    %117 = arith.addf %115, %116 : vector<8x32xf32>
    %c0_50 = arith.constant 0 : index
    %c0_51 = arith.constant 0 : index
    %118 = vector.load %arg14[%c0_50, %c0_51] : memref<32x32xbf16, #tpu.memory_space<vmem>>, vector<32x32xbf16>
    %c0_52 = arith.constant 0 : index
    %c0_53 = arith.constant 0 : index
    %119 = vector.load %arg15[%c0_52, %c0_53] : memref<1x32xf32, #tpu.memory_space<vmem>>, vector<1x32xf32>
    %c0_54 = arith.constant 0 : index
    %c0_55 = arith.constant 0 : index
    %120 = vector.load %arg16[%c0_54, %c0_55] : memref<32x32xbf16, #tpu.memory_space<vmem>>, vector<32x32xbf16>
    %c0_56 = arith.constant 0 : index
    %c0_57 = arith.constant 0 : index
    %121 = vector.load %arg17[%c0_56, %c0_57] : memref<1x32xf32, #tpu.memory_space<vmem>>, vector<1x32xf32>
    %c0_58 = arith.constant 0 : index
    %c0_59 = arith.constant 0 : index
    %122 = vector.load %arg18[%c0_58, %c0_59] : memref<32x32xbf16, #tpu.memory_space<vmem>>, vector<32x32xbf16>
    %c0_60 = arith.constant 0 : index
    %c0_61 = arith.constant 0 : index
    %123 = vector.load %arg19[%c0_60, %c0_61] : memref<1x32xf32, #tpu.memory_space<vmem>>, vector<1x32xf32>
    %c0_62 = arith.constant 0 : index
    %c0_63 = arith.constant 0 : index
    %124 = vector.load %arg20[%c0_62, %c0_63] : memref<32x32xbf16, #tpu.memory_space<vmem>>, vector<32x32xbf16>
    %c0_64 = arith.constant 0 : index
    %c0_65 = arith.constant 0 : index
    %125 = vector.load %arg21[%c0_64, %c0_65] : memref<1x32xf32, #tpu.memory_space<vmem>>, vector<1x32xf32>
    %c0_66 = arith.constant 0 : index
    %c0_67 = arith.constant 0 : index
    %126 = vector.load %arg22[%c0_66, %c0_67] : memref<1x32xf32, #tpu.memory_space<vmem>>, vector<1x32xf32>
    %c0_68 = arith.constant 0 : index
    %c0_69 = arith.constant 0 : index
    %127 = vector.load %arg23[%c0_68, %c0_69] : memref<1x32xf32, #tpu.memory_space<vmem>>, vector<1x32xf32>
    %128 = arith.truncf %117 : vector<8x32xf32> to vector<8x32xbf16>
    %129 = arith.truncf %3 : vector<8x32xf32> to vector<8x32xbf16>
    %cst_70 = arith.constant dense<0.000000e+00> : vector<8x32xf32>
    %130 = tpu.matmul %129, %118, %cst_70 {dimension_numbers = #tpu.dot_dimension_numbers<[1], [0], [0], [1], [0, 0, 1, 1], [], []>} : vector<8x32xbf16>, vector<32x32xbf16>, vector<8x32xf32> -> vector<8x32xf32>
    %131 = vector.broadcast %119 : vector<1x32xf32> to vector<8x32xf32>
    %132 = arith.addf %130, %131 : vector<8x32xf32>
    %cst_71 = arith.constant dense<0.000000e+00> : vector<8x32xf32>
    %133 = tpu.matmul %128, %120, %cst_71 {dimension_numbers = #tpu.dot_dimension_numbers<[1], [0], [0], [1], [0, 0, 1, 1], [], []>} : vector<8x32xbf16>, vector<32x32xbf16>, vector<8x32xf32> -> vector<8x32xf32>
    %134 = vector.broadcast %121 : vector<1x32xf32> to vector<8x32xf32>
    %135 = arith.addf %133, %134 : vector<8x32xf32>
    %cst_72 = arith.constant dense<0.000000e+00> : vector<8x32xf32>
    %136 = tpu.matmul %128, %122, %cst_72 {dimension_numbers = #tpu.dot_dimension_numbers<[1], [0], [0], [1], [0, 0, 1, 1], [], []>} : vector<8x32xbf16>, vector<32x32xbf16>, vector<8x32xf32> -> vector<8x32xf32>
    %137 = vector.broadcast %123 : vector<1x32xf32> to vector<8x32xf32>
    %138 = arith.addf %136, %137 : vector<8x32xf32>
    %139 = vector.extract_strided_slice %132 {offsets = [0, 0], sizes = [8, 8], strides = [1, 1]} : vector<8x32xf32> to vector<8x8xf32>
    %140 = vector.extract_strided_slice %132 {offsets = [0, 8], sizes = [8, 8], strides = [1, 1]} : vector<8x32xf32> to vector<8x8xf32>
    %141 = vector.extract_strided_slice %132 {offsets = [0, 16], sizes = [8, 8], strides = [1, 1]} : vector<8x32xf32> to vector<8x8xf32>
    %142 = vector.extract_strided_slice %132 {offsets = [0, 24], sizes = [8, 8], strides = [1, 1]} : vector<8x32xf32> to vector<8x8xf32>
    %143 = vector.shape_cast %139 : vector<8x8xf32> to vector<1x8x8xf32>
    %144 = vector.shape_cast %140 : vector<8x8xf32> to vector<1x8x8xf32>
    %145 = vector.shape_cast %141 : vector<8x8xf32> to vector<1x8x8xf32>
    %146 = vector.shape_cast %142 : vector<8x8xf32> to vector<1x8x8xf32>
    %147 = tpu.concatenate %143, %144, %145, %146 in 0 : vector<1x8x8xf32>, vector<1x8x8xf32>, vector<1x8x8xf32>, vector<1x8x8xf32> -> vector<4x8x8xf32>
    %148 = arith.truncf %147 : vector<4x8x8xf32> to vector<4x8x8xbf16>
    %149 = vector.extract_strided_slice %135 {offsets = [0, 0], sizes = [8, 8], strides = [1, 1]} : vector<8x32xf32> to vector<8x8xf32>
    %150 = vector.extract_strided_slice %135 {offsets = [0, 8], sizes = [8, 8], strides = [1, 1]} : vector<8x32xf32> to vector<8x8xf32>
    %151 = vector.extract_strided_slice %135 {offsets = [0, 16], sizes = [8, 8], strides = [1, 1]} : vector<8x32xf32> to vector<8x8xf32>
    %152 = vector.extract_strided_slice %135 {offsets = [0, 24], sizes = [8, 8], strides = [1, 1]} : vector<8x32xf32> to vector<8x8xf32>
    %153 = vector.shape_cast %149 : vector<8x8xf32> to vector<1x8x8xf32>
    %154 = vector.shape_cast %150 : vector<8x8xf32> to vector<1x8x8xf32>
    %155 = vector.shape_cast %151 : vector<8x8xf32> to vector<1x8x8xf32>
    %156 = vector.shape_cast %152 : vector<8x8xf32> to vector<1x8x8xf32>
    %157 = tpu.concatenate %153, %154, %155, %156 in 0 : vector<1x8x8xf32>, vector<1x8x8xf32>, vector<1x8x8xf32>, vector<1x8x8xf32> -> vector<4x8x8xf32>
    %158 = arith.truncf %157 : vector<4x8x8xf32> to vector<4x8x8xbf16>
    %159 = vector.extract_strided_slice %138 {offsets = [0, 0], sizes = [8, 8], strides = [1, 1]} : vector<8x32xf32> to vector<8x8xf32>
    %160 = vector.extract_strided_slice %138 {offsets = [0, 8], sizes = [8, 8], strides = [1, 1]} : vector<8x32xf32> to vector<8x8xf32>
    %161 = vector.extract_strided_slice %138 {offsets = [0, 16], sizes = [8, 8], strides = [1, 1]} : vector<8x32xf32> to vector<8x8xf32>
    %162 = vector.extract_strided_slice %138 {offsets = [0, 24], sizes = [8, 8], strides = [1, 1]} : vector<8x32xf32> to vector<8x8xf32>
    %163 = vector.shape_cast %159 : vector<8x8xf32> to vector<1x8x8xf32>
    %164 = vector.shape_cast %160 : vector<8x8xf32> to vector<1x8x8xf32>
    %165 = vector.shape_cast %161 : vector<8x8xf32> to vector<1x8x8xf32>
    %166 = vector.shape_cast %162 : vector<8x8xf32> to vector<1x8x8xf32>
    %167 = tpu.concatenate %163, %164, %165, %166 in 0 : vector<1x8x8xf32>, vector<1x8x8xf32>, vector<1x8x8xf32>, vector<1x8x8xf32> -> vector<4x8x8xf32>
    %168 = arith.truncf %167 : vector<4x8x8xf32> to vector<4x8x8xbf16>
    "tpu.trace_start"() <{level = 10 : i32, message = "hqd,hkd->hqk"}> : () -> ()
    %cst_73 = arith.constant dense<0.000000e+00> : vector<4x8x8xf32>
    %169 = tpu.matmul %148, %158, %cst_73 {dimension_numbers = #tpu.dot_dimension_numbers<[2], [2], [1], [1], [0, 0, 0, 1, 1, 1], [0], [0]>} : vector<4x8x8xbf16>, vector<4x8x8xbf16>, vector<4x8x8xf32> -> vector<4x8x8xf32>
    "tpu.trace_stop"() : () -> ()
    %cst_74 = arith.constant 0.353553385 : f32
    %170 = vector.broadcast %cst_74 : f32 to vector<4x8x8xf32>
    %171 = arith.mulf %169, %170 : vector<4x8x8xf32>
    %cst_75 = arith.constant dense<0xFF800000> : vector<4x8xf32>
    %172 = vector.multi_reduction <maximumf>, %171, %cst_75 [2] : vector<4x8x8xf32> to vector<4x8xf32>
    %173 = vector.shape_cast %172 : vector<4x8xf32> to vector<4x8x1xf32>
    %174 = vector.broadcast %173 : vector<4x8x1xf32> to vector<4x8x8xf32>
    %175 = arith.subf %171, %174 : vector<4x8x8xf32>
    %176 = math.exp %175 : vector<4x8x8xf32>
    %cst_76 = arith.constant dense<0.000000e+00> : vector<4x8xf32>
    %177 = vector.multi_reduction <add>, %176, %cst_76 [2] : vector<4x8x8xf32> to vector<4x8xf32>
    %178 = vector.shape_cast %177 : vector<4x8xf32> to vector<4x8x1xf32>
    %179 = tpu.reciprocal %178 {approx = true} : vector<4x8x1xf32> -> vector<4x8x1xf32>
    %180 = vector.broadcast %179 : vector<4x8x1xf32> to vector<4x8x8xf32>
    %181 = arith.mulf %176, %180 : vector<4x8x8xf32>
    %182 = arith.truncf %181 : vector<4x8x8xf32> to vector<4x8x8xbf16>
    "tpu.trace_start"() <{level = 10 : i32, message = "hqk,hkd->hqd"}> : () -> ()
    %cst_77 = arith.constant dense<0.000000e+00> : vector<4x8x8xf32>
    %183 = tpu.matmul %182, %168, %cst_77 {dimension_numbers = #tpu.dot_dimension_numbers<[2], [1], [1], [2], [0, 0, 0, 1, 1, 2], [0], [0]>} : vector<4x8x8xbf16>, vector<4x8x8xbf16>, vector<4x8x8xf32> -> vector<4x8x8xf32>
    "tpu.trace_stop"() : () -> ()
    %184 = vector.extract_strided_slice %183 {offsets = [0, 0, 0], sizes = [1, 8, 8], strides = [1, 1, 1]} : vector<4x8x8xf32> to vector<1x8x8xf32>
    %185 = vector.shape_cast %184 : vector<1x8x8xf32> to vector<8x8xf32>
    %c0_78 = arith.constant 0 : index
    %c0_79 = arith.constant 0 : index
    %186 = vector.load %arg31[%c0_78, %c0_79] : memref<32x8xf32, #tpu.memory_space<vmem>>, vector<8x8xf32>
    tpu.vector_store %arg31[%c0_78, %c0_79], %185 {strides = array<i32>} : memref<32x8xf32, #tpu.memory_space<vmem>>, vector<8x8xf32>,
    %187 = vector.extract_strided_slice %183 {offsets = [1, 0, 0], sizes = [1, 8, 8], strides = [1, 1, 1]} : vector<4x8x8xf32> to vector<1x8x8xf32>
    %188 = vector.shape_cast %187 : vector<1x8x8xf32> to vector<8x8xf32>
    %c8_80 = arith.constant 8 : index
    %c0_81 = arith.constant 0 : index
    %189 = vector.load %arg31[%c8_80, %c0_81] : memref<32x8xf32, #tpu.memory_space<vmem>>, vector<8x8xf32>
    tpu.vector_store %arg31[%c8_80, %c0_81], %188 {strides = array<i32>} : memref<32x8xf32, #tpu.memory_space<vmem>>, vector<8x8xf32>,
    %190 = vector.extract_strided_slice %183 {offsets = [2, 0, 0], sizes = [1, 8, 8], strides = [1, 1, 1]} : vector<4x8x8xf32> to vector<1x8x8xf32>
    %191 = vector.shape_cast %190 : vector<1x8x8xf32> to vector<8x8xf32>
    %c16_82 = arith.constant 16 : index
    %c0_83 = arith.constant 0 : index
    %192 = vector.load %arg31[%c16_82, %c0_83] : memref<32x8xf32, #tpu.memory_space<vmem>>, vector<8x8xf32>
    tpu.vector_store %arg31[%c16_82, %c0_83], %191 {strides = array<i32>} : memref<32x8xf32, #tpu.memory_space<vmem>>, vector<8x8xf32>,
    %193 = vector.extract_strided_slice %183 {offsets = [3, 0, 0], sizes = [1, 8, 8], strides = [1, 1, 1]} : vector<4x8x8xf32> to vector<1x8x8xf32>
    %194 = vector.shape_cast %193 : vector<1x8x8xf32> to vector<8x8xf32>
    %c24_84 = arith.constant 24 : index
    %c0_85 = arith.constant 0 : index
    %195 = vector.load %arg31[%c24_84, %c0_85] : memref<32x8xf32, #tpu.memory_space<vmem>>, vector<8x8xf32>
    tpu.vector_store %arg31[%c24_84, %c0_85], %194 {strides = array<i32>} : memref<32x8xf32, #tpu.memory_space<vmem>>, vector<8x8xf32>,
    %c0_86 = arith.constant 0 : index
    %c0_87 = arith.constant 0 : index
    %196 = tpu.strided_load %arg31[%c0_86, %c0_87] {strides = array<i32: 4, 1>} : memref<32x8xf32, #tpu.memory_space<vmem>>, vector<8x8xf32>
    %c1_88 = arith.constant 1 : index
    %c0_89 = arith.constant 0 : index
    %197 = tpu.strided_load %arg31[%c1_88, %c0_89] {strides = array<i32: 4, 1>} : memref<32x8xf32, #tpu.memory_space<vmem>>, vector<8x8xf32>
    %c2_90 = arith.constant 2 : index
    %c0_91 = arith.constant 0 : index
    %198 = tpu.strided_load %arg31[%c2_90, %c0_91] {strides = array<i32: 4, 1>} : memref<32x8xf32, #tpu.memory_space<vmem>>, vector<8x8xf32>
    %c3_92 = arith.constant 3 : index
    %c0_93 = arith.constant 0 : index
    %199 = tpu.strided_load %arg31[%c3_92, %c0_93] {strides = array<i32: 4, 1>} : memref<32x8xf32, #tpu.memory_space<vmem>>, vector<8x8xf32>
    %200 = tpu.concatenate %196, %197, %198, %199 in 1 : vector<8x8xf32>, vector<8x8xf32>, vector<8x8xf32>, vector<8x8xf32> -> vector<8x32xf32>
    %201 = arith.truncf %200 : vector<8x32xf32> to vector<8x32xbf16>
    %cst_94 = arith.constant dense<0.000000e+00> : vector<8x32xf32>
    %202 = tpu.matmul %201, %124, %cst_94 {dimension_numbers = #tpu.dot_dimension_numbers<[1], [0], [0], [1], [0, 0, 1, 1], [], []>} : vector<8x32xbf16>, vector<32x32xbf16>, vector<8x32xf32> -> vector<8x32xf32>
    %203 = vector.broadcast %125 : vector<1x32xf32> to vector<8x32xf32>
    %204 = arith.addf %202, %203 : vector<8x32xf32>
    %205 = arith.addf %204, %117 : vector<8x32xf32>
    %cst_95 = arith.constant dense<0.000000e+00> : vector<8xf32>
    %206 = vector.multi_reduction <add>, %205, %cst_95 [1] : vector<8x32xf32> to vector<8xf32>
    %207 = vector.shape_cast %206 : vector<8xf32> to vector<8x1xf32>
    %cst_96 = arith.constant 3.200000e+01 : f32
    %208 = vector.broadcast %cst_96 : f32 to vector<8x1xf32>
    %209 = arith.divf %207, %208 : vector<8x1xf32>
    %210 = vector.broadcast %209 : vector<8x1xf32> to vector<8x32xf32>
    %211 = arith.subf %205, %210 : vector<8x32xf32>
    %212 = arith.mulf %211, %211 : vector<8x32xf32>
    %cst_97 = arith.constant dense<0.000000e+00> : vector<8xf32>
    %213 = vector.multi_reduction <add>, %212, %cst_97 [1] : vector<8x32xf32> to vector<8xf32>
    %214 = vector.shape_cast %213 : vector<8xf32> to vector<8x1xf32>
    %cst_98 = arith.constant 3.200000e+01 : f32
    %215 = vector.broadcast %cst_98 : f32 to vector<8x1xf32>
    %216 = arith.divf %214, %215 : vector<8x1xf32>
    %217 = vector.broadcast %209 : vector<8x1xf32> to vector<8x32xf32>
    %218 = arith.subf %205, %217 : vector<8x32xf32>
    %cst_99 = arith.constant 9.99999974E-6 : f32
    %219 = vector.broadcast %cst_99 : f32 to vector<8x1xf32>
    %220 = arith.addf %216, %219 : vector<8x1xf32>
    %221 = math.rsqrt %220 : vector<8x1xf32>
    %222 = vector.broadcast %221 : vector<8x1xf32> to vector<8x32xf32>
    %223 = arith.mulf %218, %222 : vector<8x32xf32>
    %224 = vector.broadcast %126 : vector<1x32xf32> to vector<8x32xf32>
    %225 = arith.mulf %224, %223 : vector<8x32xf32>
    %226 = vector.broadcast %127 : vector<1x32xf32> to vector<8x32xf32>
    %227 = arith.addf %225, %226 : vector<8x32xf32>
    %c0_100 = arith.constant 0 : index
    %c0_101 = arith.constant 0 : index
    %228 = vector.load %arg24[%c0_100, %c0_101] : memref<32x64xbf16, #tpu.memory_space<vmem>>, vector<32x64xbf16>
    %c0_102 = arith.constant 0 : index
    %c0_103 = arith.constant 0 : index
    %229 = vector.load %arg25[%c0_102, %c0_103] : memref<1x64xf32, #tpu.memory_space<vmem>>, vector<1x64xf32>
    %c0_104 = arith.constant 0 : index
    %c0_105 = arith.constant 0 : index
    %230 = vector.load %arg26[%c0_104, %c0_105] : memref<64x32xbf16, #tpu.memory_space<vmem>>, vector<64x32xbf16>
    %c0_106 = arith.constant 0 : index
    %c0_107 = arith.constant 0 : index
    %231 = vector.load %arg27[%c0_106, %c0_107] : memref<1x32xf32, #tpu.memory_space<vmem>>, vector<1x32xf32>
    %c0_108 = arith.constant 0 : index
    %c0_109 = arith.constant 0 : index
    %232 = vector.load %arg28[%c0_108, %c0_109] : memref<1x32xf32, #tpu.memory_space<vmem>>, vector<1x32xf32>
    %c0_110 = arith.constant 0 : index
    %c0_111 = arith.constant 0 : index
    %233 = vector.load %arg29[%c0_110, %c0_111] : memref<1x32xf32, #tpu.memory_space<vmem>>, vector<1x32xf32>
    %234 = arith.truncf %227 : vector<8x32xf32> to vector<8x32xbf16>
    %cst_112 = arith.constant dense<0.000000e+00> : vector<8x64xf32>
    %235 = tpu.matmul %234, %228, %cst_112 {dimension_numbers = #tpu.dot_dimension_numbers<[1], [0], [0], [1], [0, 0, 1, 1], [], []>} : vector<8x32xbf16>, vector<32x64xbf16>, vector<8x64xf32> -> vector<8x64xf32>
    %236 = vector.broadcast %229 : vector<1x64xf32> to vector<8x64xf32>
    %237 = arith.addf %235, %236 : vector<8x64xf32>
    %cst_113 = arith.constant 0.000000e+00 : f32
    %238 = vector.broadcast %cst_113 : f32 to vector<8x64xf32>
    %239 = arith.maximumf %237, %238 : vector<8x64xf32>
    %240 = arith.truncf %239 : vector<8x64xf32> to vector<8x64xbf16>
    %cst_114 = arith.constant dense<0.000000e+00> : vector<8x32xf32>
    %241 = tpu.matmul %240, %230, %cst_114 {dimension_numbers = #tpu.dot_dimension_numbers<[1], [0], [0], [1], [0, 0, 1, 1], [], []>} : vector<8x64xbf16>, vector<64x32xbf16>, vector<8x32xf32> -> vector<8x32xf32>
    %242 = vector.broadcast %231 : vector<1x32xf32> to vector<8x32xf32>
    %243 = arith.addf %241, %242 : vector<8x32xf32>
    %244 = arith.addf %243, %227 : vector<8x32xf32>
    %cst_115 = arith.constant dense<0.000000e+00> : vector<8xf32>
    %245 = vector.multi_reduction <add>, %244, %cst_115 [1] : vector<8x32xf32> to vector<8xf32>
    %246 = vector.shape_cast %245 : vector<8xf32> to vector<8x1xf32>
    %cst_116 = arith.constant 3.200000e+01 : f32
    %247 = vector.broadcast %cst_116 : f32 to vector<8x1xf32>
    %248 = arith.divf %246, %247 : vector<8x1xf32>
    %249 = vector.broadcast %248 : vector<8x1xf32> to vector<8x32xf32>
    %250 = arith.subf %244, %249 : vector<8x32xf32>
    %251 = arith.mulf %250, %250 : vector<8x32xf32>
    %cst_117 = arith.constant dense<0.000000e+00> : vector<8xf32>
    %252 = vector.multi_reduction <add>, %251, %cst_117 [1] : vector<8x32xf32> to vector<8xf32>
    %253 = vector.shape_cast %252 : vector<8xf32> to vector<8x1xf32>
    %cst_118 = arith.constant 3.200000e+01 : f32
    %254 = vector.broadcast %cst_118 : f32 to vector<8x1xf32>
    %255 = arith.divf %253, %254 : vector<8x1xf32>
    %256 = vector.broadcast %248 : vector<8x1xf32> to vector<8x32xf32>
    %257 = arith.subf %244, %256 : vector<8x32xf32>
    %cst_119 = arith.constant 9.99999974E-6 : f32
    %258 = vector.broadcast %cst_119 : f32 to vector<8x1xf32>
    %259 = arith.addf %255, %258 : vector<8x1xf32>
    %260 = math.rsqrt %259 : vector<8x1xf32>
    %261 = vector.broadcast %260 : vector<8x1xf32> to vector<8x32xf32>
    %262 = arith.mulf %257, %261 : vector<8x32xf32>
    %263 = vector.broadcast %232 : vector<1x32xf32> to vector<8x32xf32>
    %264 = arith.mulf %263, %262 : vector<8x32xf32>
    %265 = vector.broadcast %233 : vector<1x32xf32> to vector<8x32xf32>
    %266 = arith.addf %264, %265 : vector<8x32xf32>
    %c0_120 = arith.constant 0 : index
    %c0_121 = arith.constant 0 : index
    %c0_122 = arith.constant 0 : index
    %267 = vector.load %arg30[%c0_120, %c0_121, %c0_122] : memref<1x8x32xf32, #tpu.memory_space<vmem>>, vector<1x8x32xf32>
    %268 = vector.shape_cast %267 : vector<1x8x32xf32> to vector<8x32xf32>
    %269 = vector.shape_cast %266 : vector<8x32xf32> to vector<1x8x32xf32>
    tpu.vector_store %arg30[%c0_120, %c0_121, %c0_122], %269 {strides = array<i32>} : memref<1x8x32xf32, #tpu.memory_space<vmem>>, vector<1x8x32xf32>,
    return
  }
  func.func @transform_0(%arg0: i32) -> (i32, i32, i32) {
    %c0_i32 = arith.constant 0 : i32
    %c0_i32_0 = arith.constant 0 : i32
    %c0_i32_1 = arith.constant 0 : i32
    return %arg0, %c0_i32, %c0_i32_0 : i32, i32, i32
  }
  func.func @transform_1(%arg0: i32) -> (i32, i32, i32) {
    %c0_i32 = arith.constant 0 : i32
    %c0_i32_0 = arith.constant 0 : i32
    %c0_i32_1 = arith.constant 0 : i32
    return %arg0, %c0_i32, %c0_i32_0 : i32, i32, i32
  }
  func.func @transform_2(%arg0: i32) -> (i32, i32) {
    %c0_i32 = arith.constant 0 : i32
    %c0_i32_0 = arith.constant 0 : i32
    %c0_i32_1 = arith.constant 0 : i32
    return %c0_i32, %c0_i32_0 : i32, i32
  }
  func.func @transform_3(%arg0: i32) -> (i32, i32) {
    %c0_i32 = arith.constant 0 : i32
    %c0_i32_0 = arith.constant 0 : i32
    %c0_i32_1 = arith.constant 0 : i32
    return %c0_i32, %c0_i32_0 : i32, i32
  }
  func.func @transform_4(%arg0: i32) -> (i32, i32) {
    %c0_i32 = arith.constant 0 : i32
    %c0_i32_0 = arith.constant 0 : i32
    %c0_i32_1 = arith.constant 0 : i32
    return %c0_i32, %c0_i32_0 : i32, i32
  }
  func.func @transform_5(%arg0: i32) -> (i32, i32) {
    %c0_i32 = arith.constant 0 : i32
    %c0_i32_0 = arith.constant 0 : i32
    %c0_i32_1 = arith.constant 0 : i32
    return %c0_i32, %c0_i32_0 : i32, i32
  }
  func.func @transform_6(%arg0: i32) -> (i32, i32) {
    %c0_i32 = arith.constant 0 : i32
    %c0_i32_0 = arith.constant 0 : i32
    %c0_i32_1 = arith.constant 0 : i32
    return %c0_i32, %c0_i32_0 : i32, i32
  }
  func.func @transform_7(%arg0: i32) -> (i32, i32) {
    %c0_i32 = arith.constant 0 : i32
    %c0_i32_0 = arith.constant 0 : i32
    %c0_i32_1 = arith.constant 0 : i32
    return %c0_i32, %c0_i32_0 : i32, i32
  }
  func.func @transform_8(%arg0: i32) -> (i32, i32) {
    %c0_i32 = arith.constant 0 : i32
    %c0_i32_0 = arith.constant 0 : i32
    %c0_i32_1 = arith.constant 0 : i32
    return %c0_i32, %c0_i32_0 : i32, i32
  }
  func.func @transform_9(%arg0: i32) -> (i32, i32) {
    %c0_i32 = arith.constant 0 : i32
    %c0_i32_0 = arith.constant 0 : i32
    %c0_i32_1 = arith.constant 0 : i32
    return %c0_i32, %c0_i32_0 : i32, i32
  }
  func.func @transform_10(%arg0: i32) -> (i32, i32) {
    %c0_i32 = arith.constant 0 : i32
    %c0_i32_0 = arith.constant 0 : i32
    %c0_i32_1 = arith.constant 0 : i32
    return %c0_i32, %c0_i32_0 : i32, i32
  }
  func.func @transform_11(%arg0: i32) -> (i32, i32) {
    %c0_i32 = arith.constant 0 : i32
    %c0_i32_0 = arith.constant 0 : i32
    %c0_i32_1 = arith.constant 0 : i32
    return %c0_i32, %c0_i32_0 : i32, i32
  }
  func.func @transform_12(%arg0: i32) -> (i32, i32) {
    %c0_i32 = arith.constant 0 : i32
    %c0_i32_0 = arith.constant 0 : i32
    %c0_i32_1 = arith.constant 0 : i32
    return %c0_i32, %c0_i32_0 : i32, i32
  }
  func.func @transform_13(%arg0: i32) -> (i32, i32) {
    %c0_i32 = arith.constant 0 : i32
    %c0_i32_0 = arith.constant 0 : i32
    %c0_i32_1 = arith.constant 0 : i32
    return %c0_i32, %c0_i32_0 : i32, i32
  }
  func.func @transform_14(%arg0: i32) -> (i32, i32) {
    %c0_i32 = arith.constant 0 : i32
    %c0_i32_0 = arith.constant 0 : i32
    %c0_i32_1 = arith.constant 0 : i32
    return %c0_i32, %c0_i32_0 : i32, i32
  }
  func.func @transform_15(%arg0: i32) -> (i32, i32) {
    %c0_i32 = arith.constant 0 : i32
    %c0_i32_0 = arith.constant 0 : i32
    %c0_i32_1 = arith.constant 0 : i32
    return %c0_i32, %c0_i32_0 : i32, i32
  }
  func.func @transform_16(%arg0: i32) -> (i32, i32) {
    %c0_i32 = arith.constant 0 : i32
    %c0_i32_0 = arith.constant 0 : i32
    %c0_i32_1 = arith.constant 0 : i32
    return %c0_i32, %c0_i32_0 : i32, i32
  }
  func.func @transform_17(%arg0: i32) -> (i32, i32) {
    %c0_i32 = arith.constant 0 : i32
    %c0_i32_0 = arith.constant 0 : i32
    %c0_i32_1 = arith.constant 0 : i32
    return %c0_i32, %c0_i32_0 : i32, i32
  }
  func.func @transform_18(%arg0: i32) -> (i32, i32) {
    %c0_i32 = arith.constant 0 : i32
    %c0_i32_0 = arith.constant 0 : i32
    %c0_i32_1 = arith.constant 0 : i32
    return %c0_i32, %c0_i32_0 : i32, i32
  }
  func.func @transform_19(%arg0: i32) -> (i32, i32) {
    %c0_i32 = arith.constant 0 : i32
    %c0_i32_0 = arith.constant 0 : i32
    %c0_i32_1 = arith.constant 0 : i32
    return %c0_i32, %c0_i32_0 : i32, i32
  }
  func.func @transform_20(%arg0: i32) -> (i32, i32) {
    %c0_i32 = arith.constant 0 : i32
    %c0_i32_0 = arith.constant 0 : i32
    %c0_i32_1 = arith.constant 0 : i32
    return %c0_i32, %c0_i32_0 : i32, i32
  }
  func.func @transform_21(%arg0: i32) -> (i32, i32) {
    %c0_i32 = arith.constant 0 : i32
    %c0_i32_0 = arith.constant 0 : i32
    %c0_i32_1 = arith.constant 0 : i32
    return %c0_i32, %c0_i32_0 : i32, i32
  }
  func.func @transform_22(%arg0: i32) -> (i32, i32) {
    %c0_i32 = arith.constant 0 : i32
    %c0_i32_0 = arith.constant 0 : i32
    %c0_i32_1 = arith.constant 0 : i32
    return %c0_i32, %c0_i32_0 : i32, i32
  }
  func.func @transform_23(%arg0: i32) -> (i32, i32) {
    %c0_i32 = arith.constant 0 : i32
    %c0_i32_0 = arith.constant 0 : i32
    %c0_i32_1 = arith.constant 0 : i32
    return %c0_i32, %c0_i32_0 : i32, i32
  }
  func.func @transform_24(%arg0: i32) -> (i32, i32) {
    %c0_i32 = arith.constant 0 : i32
    %c0_i32_0 = arith.constant 0 : i32
    %c0_i32_1 = arith.constant 0 : i32
    return %c0_i32, %c0_i32_0 : i32, i32
  }
  func.func @transform_25(%arg0: i32) -> (i32, i32) {
    %c0_i32 = arith.constant 0 : i32
    %c0_i32_0 = arith.constant 0 : i32
    %c0_i32_1 = arith.constant 0 : i32
    return %c0_i32, %c0_i32_0 : i32, i32
  }
  func.func @transform_26(%arg0: i32) -> (i32, i32) {
    %c0_i32 = arith.constant 0 : i32
    %c0_i32_0 = arith.constant 0 : i32
    %c0_i32_1 = arith.constant 0 : i32
    return %c0_i32, %c0_i32_0 : i32, i32
  }
  func.func @transform_27(%arg0: i32) -> (i32, i32) {
    %c0_i32 = arith.constant 0 : i32
    %c0_i32_0 = arith.constant 0 : i32
    %c0_i32_1 = arith.constant 0 : i32
    return %c0_i32, %c0_i32_0 : i32, i32
  }
  func.func @transform_28(%arg0: i32) -> (i32, i32) {
    %c0_i32 = arith.constant 0 : i32
    %c0_i32_0 = arith.constant 0 : i32
    %c0_i32_1 = arith.constant 0 : i32
    return %c0_i32, %c0_i32_0 : i32, i32
  }
  func.func @transform_29(%arg0: i32) -> (i32, i32, i32) {
    %c0_i32 = arith.constant 0 : i32
    %c0_i32_0 = arith.constant 0 : i32
    %c0_i32_1 = arith.constant 0 : i32
    return %arg0, %c0_i32, %c0_i32_0 : i32, i32, i32
  }
}

module attributes {stable_mosaic.version = 11 : i64} {
  func.func @_decoder_layer_kernel(%arg0: i32, %arg1: memref<1x8x32xf32, #tpu.memory_space<vmem>>, %arg2: memref<1x8x32xf32, #tpu.memory_space<vmem>>, %arg3: memref<8x8xf32, #tpu.memory_space<vmem>>, %arg4: memref<32x32xbf16, #tpu.memory_space<vmem>>, %arg5: memref<1x32xf32, #tpu.memory_space<vmem>>, %arg6: memref<32x32xbf16, #tpu.memory_space<vmem>>, %arg7: memref<1x32xf32, #tpu.memory_space<vmem>>, %arg8: memref<32x32xbf16, #tpu.memory_space<vmem>>, %arg9: memref<1x32xf32, #tpu.memory_space<vmem>>, %arg10: memref<32x32xbf16, #tpu.memory_space<vmem>>, %arg11: memref<1x32xf32, #tpu.memory_space<vmem>>, %arg12: memref<1x32xf32, #tpu.memory_space<vmem>>, %arg13: memref<1x32xf32, #tpu.memory_space<vmem>>, %arg14: memref<32x32xbf16, #tpu.memory_space<vmem>>, %arg15: memref<1x32xf32, #tpu.memory_space<vmem>>, %arg16: memref<32x32xbf16, #tpu.memory_space<vmem>>, %arg17: memref<1x32xf32, #tpu.memory_space<vmem>>, %arg18: memref<32x32xbf16, #tpu.memory_space<vmem>>, %arg19: memref<1x32xf32, #tpu.memory_space<vmem>>, %arg20: memref<32x32xbf16, #tpu.memory_space<vmem>>, %arg21: memref<1x32xf32, #tpu.memory_space<vmem>>, %arg22: memref<1x32xf32, #tpu.memory_space<vmem>>, %arg23: memref<1x32xf32, #tpu.memory_space<vmem>>, %arg24: memref<32x64xbf16, #tpu.memory_space<vmem>>, %arg25: memref<1x64xf32, #tpu.memory_space<vmem>>, %arg26: memref<64x32xbf16, #tpu.memory_space<vmem>>, %arg27: memref<1x32xf32, #tpu.memory_space<vmem>>, %arg28: memref<1x32xf32, #tpu.memory_space<vmem>>, %arg29: memref<1x32xf32, #tpu.memory_space<vmem>>, %arg30: memref<1x8x32xf32, #tpu.memory_space<vmem>>, %arg31: memref<32x8xf32, #tpu.memory_space<vmem>>) attributes {dimension_semantics = [#tpu.dimension_semantics<parallel>], iteration_bounds = array<i64: 2>, scalar_prefetch = 0 : i64, scratch_operands = 1 : i64, tpu.core_type = #tpu.core_type<tc>, window_params = [{transform_indices = @transform_0, window_bounds = array<i64: 1, 8, 32>}, {transform_indices = @transform_1, window_bounds = array<i64: 1, 8, 32>}, {pipeline_mode = #tpu.pipeline_mode<synchronous>, transform_indices = @transform_2, window_bounds = array<i64: 8, 8>}, {pipeline_mode = #tpu.pipeline_mode<synchronous>, transform_indices = @transform_3, window_bounds = array<i64: 32, 32>}, {pipeline_mode = #tpu.pipeline_mode<synchronous>, transform_indices = @transform_4, window_bounds = array<i64: 1, 32>}, {pipeline_mode = #tpu.pipeline_mode<synchronous>, transform_indices = @transform_5, window_bounds = array<i64: 32, 32>}, {pipeline_mode = #tpu.pipeline_mode<synchronous>, transform_indices = @transform_6, window_bounds = array<i64: 1, 32>}, {pipeline_mode = #tpu.pipeline_mode<synchronous>, transform_indices = @transform_7, window_bounds = array<i64: 32, 32>}, {pipeline_mode = #tpu.pipeline_mode<synchronous>, transform_indices = @transform_8, window_bounds = array<i64: 1, 32>}, {pipeline_mode = #tpu.pipeline_mode<synchronous>, transform_indices = @transform_9, window_bounds = array<i64: 32, 32>}, {pipeline_mode = #tpu.pipeline_mode<synchronous>, transform_indices = @transform_10, window_bounds = array<i64: 1, 32>}, {pipeline_mode = #tpu.pipeline_mode<synchronous>, transform_indices = @transform_11, window_bounds = array<i64: 1, 32>}, {pipeline_mode = #tpu.pipeline_mode<synchronous>, transform_indices = @transform_12, window_bounds = array<i64: 1, 32>}, {pipeline_mode = #tpu.pipeline_mode<synchronous>, transform_indices = @transform_13, window_bounds = array<i64: 32, 32>}, {pipeline_mode = #tpu.pipeline_mode<synchronous>, transform_indices = @transform_14, window_bounds = array<i64: 1, 32>}, {pipeline_mode = #tpu.pipeline_mode<synchronous>, transform_indices = @transform_15, window_bounds = array<i64: 32, 32>}, {pipeline_mode = #tpu.pipeline_mode<synchronous>, transform_indices = @transform_16, window_bounds = array<i64: 1, 32>}, {pipeline_mode = #tpu.pipeline_mode<synchronous>, transform_indices = @transform_17, window_bounds = array<i64: 32, 32>}, {pipeline_mode = #tpu.pipeline_mode<synchronous>, transform_indices = @transform_18, window_bounds = array<i64: 1, 32>}, {pipeline_mode = #tpu.pipeline_mode<synchronous>, transform_indices = @transform_19, window_bounds = array<i64: 32, 32>}, {pipeline_mode = #tpu.pipeline_mode<synchronous>, transform_indices = @transform_20, window_bounds = array<i64: 1, 32>}, {pipeline_mode = #tpu.pipeline_mode<synchronous>, transform_indices = @transform_21, window_bounds = array<i64: 1, 32>}, {pipeline_mode = #tpu.pipeline_mode<synchronous>, transform_indices = @transform_22, window_bounds = array<i64: 1, 32>}, {pipeline_mode = #tpu.pipeline_mode<synchronous>, transform_indices = @transform_23, window_bounds = array<i64: 32, 64>}, {pipeline_mode = #tpu.pipeline_mode<synchronous>, transform_indices = @transform_24, window_bounds = array<i64: 1, 64>}, {pipeline_mode = #tpu.pipeline_mode<synchronous>, transform_indices = @transform_25, window_bounds = array<i64: 64, 32>}, {pipeline_mode = #tpu.pipeline_mode<synchronous>, transform_indices = @transform_26, window_bounds = array<i64: 1, 32>}, {pipeline_mode = #tpu.pipeline_mode<synchronous>, transform_indices = @transform_27, window_bounds = array<i64: 1, 32>}, {pipeline_mode = #tpu.pipeline_mode<synchronous>, transform_indices = @transform_28, window_bounds = array<i64: 1, 32>}, {transform_indices = @transform_29, window_bounds = array<i64: 1, 8, 32>}]} {
    %c0 = arith.constant 0 : index
    %c0_0 = arith.constant 0 : index
    %c0_1 = arith.constant 0 : index
    %0 = vector.load %arg2[%c0, %c0_0, %c0_1] : memref<1x8x32xf32, #tpu.memory_space<vmem>>, vector<1x8x32xf32>
    %1 = vector.shape_cast %0 : vector<1x8x32xf32> to vector<8x32xf32>
    %c0_2 = arith.constant 0 : index
    %c0_3 = arith.constant 0 : index
    %c0_4 = arith.constant 0 : index
    %2 = vector.load %arg1[%c0_2, %c0_3, %c0_4] : memref<1x8x32xf32, #tpu.memory_space<vmem>>, vector<1x8x32xf32>
    %3 = vector.shape_cast %2 : vector<1x8x32xf32> to vector<8x32xf32>
    %c0_5 = arith.constant 0 : index
    %c0_6 = arith.constant 0 : index
    %4 = vector.load %arg3[%c0_5, %c0_6] : memref<8x8xf32, #tpu.memory_space<vmem>>, vector<8x8xf32>
    %c0_7 = arith.constant 0 : index
    %c0_8 = arith.constant 0 : index
    %5 = vector.load %arg4[%c0_7, %c0_8] : memref<32x32xbf16, #tpu.memory_space<vmem>>, vector<32x32xbf16>
    %c0_9 = arith.constant 0 : index
    %c0_10 = arith.constant 0 : index
    %6 = vector.load %arg5[%c0_9, %c0_10] : memref<1x32xf32, #tpu.memory_space<vmem>>, vector<1x32xf32>
    %c0_11 = arith.constant 0 : index
    %c0_12 = arith.constant 0 : index
    %7 = vector.load %arg6[%c0_11, %c0_12] : memref<32x32xbf16, #tpu.memory_space<vmem>>, vector<32x32xbf16>
    %c0_13 = arith.constant 0 : index
    %c0_14 = arith.constant 0 : index
    %8 = vector.load %arg7[%c0_13, %c0_14] : memref<1x32xf32, #tpu.memory_space<vmem>>, vector<1x32xf32>
    %c0_15 = arith.constant 0 : index
    %c0_16 = arith.constant 0 : index
    %9 = vector.load %arg8[%c0_15, %c0_16] : memref<32x32xbf16, #tpu.memory_space<vmem>>, vector<32x32xbf16>
    %c0_17 = arith.constant 0 : index
    %c0_18 = arith.constant 0 : index
    %10 = vector.load %arg9[%c0_17, %c0_18] : memref<1x32xf32, #tpu.memory_space<vmem>>, vector<1x32xf32>
    %c0_19 = arith.constant 0 : index
    %c0_20 = arith.constant 0 : index
    %11 = vector.load %arg10[%c0_19, %c0_20] : memref<32x32xbf16, #tpu.memory_space<vmem>>, vector<32x32xbf16>
    %c0_21 = arith.constant 0 : index
    %c0_22 = arith.constant 0 : index
    %12 = vector.load %arg11[%c0_21, %c0_22] : memref<1x32xf32, #tpu.memory_space<vmem>>, vector<1x32xf32>
    %c0_23 = arith.constant 0 : index
    %c0_24 = arith.constant 0 : index
    %13 = vector.load %arg12[%c0_23, %c0_24] : memref<1x32xf32, #tpu.memory_space<vmem>>, vector<1x32xf32>
    %c0_25 = arith.constant 0 : index
    %c0_26 = arith.constant 0 : index
    %14 = vector.load %arg13[%c0_25, %c0_26] : memref<1x32xf32, #tpu.memory_space<vmem>>, vector<1x32xf32>
    %15 = arith.truncf %1 : vector<8x32xf32> to vector<8x32xbf16>
    %16 = arith.truncf %1 : vector<8x32xf32> to vector<8x32xbf16>
    %cst = arith.constant dense<0.000000e+00> : vector<8x32xf32>
    %17 = tpu.matmul %16, %5, %cst {dimension_numbers = #tpu.dot_dimension_numbers<[1], [0], [0], [1], [0, 0, 1, 1], [], []>} : vector<8x32xbf16>, vector<32x32xbf16>, vector<8x32xf32> -> vector<8x32xf32>
    %18 = vector.broadcast %6 : vector<1x32xf32> to vector<8x32xf32>
    %19 = arith.addf %17, %18 : vector<8x32xf32>
    %cst_27 = arith.constant dense<0.000000e+00> : vector<8x32xf32>
    %20 = tpu.matmul %15, %7, %cst_27 {dimension_numbers = #tpu.dot_dimension_numbers<[1], [0], [0], [1], [0, 0, 1, 1], [], []>} : vector<8x32xbf16>, vector<32x32xbf16>, vector<8x32xf32> -> vector<8x32xf32>
    %21 = vector.broadcast %8 : vector<1x32xf32> to vector<8x32xf32>
    %22 = arith.addf %20, %21 : vector<8x32xf32>
    %cst_28 = arith.constant dense<0.000000e+00> : vector<8x32xf32>
    %23 = tpu.matmul %15, %9, %cst_28 {dimension_numbers = #tpu.dot_dimension_numbers<[1], [0], [0], [1], [0, 0, 1, 1], [], []>} : vector<8x32xbf16>, vector<32x32xbf16>, vector<8x32xf32> -> vector<8x32xf32>
    %24 = vector.broadcast %10 : vector<1x32xf32> to vector<8x32xf32>
    %25 = arith.addf %23, %24 : vector<8x32xf32>
    %26 = vector.extract_strided_slice %19 {offsets = [0, 0], sizes = [8, 8], strides = [1, 1]} : vector<8x32xf32> to vector<8x8xf32>
    %27 = vector.extract_strided_slice %19 {offsets = [0, 8], sizes = [8, 8], strides = [1, 1]} : vector<8x32xf32> to vector<8x8xf32>
    %28 = vector.extract_strided_slice %19 {offsets = [0, 16], sizes = [8, 8], strides = [1, 1]} : vector<8x32xf32> to vector<8x8xf32>
    %29 = vector.extract_strided_slice %19 {offsets = [0, 24], sizes = [8, 8], strides = [1, 1]} : vector<8x32xf32> to vector<8x8xf32>
    %30 = vector.shape_cast %26 : vector<8x8xf32> to vector<1x8x8xf32>
    %31 = vector.shape_cast %27 : vector<8x8xf32> to vector<1x8x8xf32>
    %32 = vector.shape_cast %28 : vector<8x8xf32> to vector<1x8x8xf32>
    %33 = vector.shape_cast %29 : vector<8x8xf32> to vector<1x8x8xf32>
    %34 = tpu.concatenate %30, %31, %32, %33 in 0 : vector<1x8x8xf32>, vector<1x8x8xf32>, vector<1x8x8xf32>, vector<1x8x8xf32> -> vector<4x8x8xf32>
    %35 = arith.truncf %34 : vector<4x8x8xf32> to vector<4x8x8xbf16>
    %36 = vector.extract_strided_slice %22 {offsets = [0, 0], sizes = [8, 8], strides = [1, 1]} : vector<8x32xf32> to vector<8x8xf32>
    %37 = vector.extract_strided_slice %22 {offsets = [0, 8], sizes = [8, 8], strides = [1, 1]} : vector<8x32xf32> to vector<8x8xf32>
    %38 = vector.extract_strided_slice %22 {offsets = [0, 16], sizes = [8, 8], strides = [1, 1]} : vector<8x32xf32> to vector<8x8xf32>
    %39 = vector.extract_strided_slice %22 {offsets = [0, 24], sizes = [8, 8], strides = [1, 1]} : vector<8x32xf32> to vector<8x8xf32>
    %40 = vector.shape_cast %36 : vector<8x8xf32> to vector<1x8x8xf32>
    %41 = vector.shape_cast %37 : vector<8x8xf32> to vector<1x8x8xf32>
    %42 = vector.shape_cast %38 : vector<8x8xf32> to vector<1x8x8xf32>
    %43 = vector.shape_cast %39 : vector<8x8xf32> to vector<1x8x8xf32>
    %44 = tpu.concatenate %40, %41, %42, %43 in 0 : vector<1x8x8xf32>, vector<1x8x8xf32>, vector<1x8x8xf32>, vector<1x8x8xf32> -> vector<4x8x8xf32>
    %45 = arith.truncf %44 : vector<4x8x8xf32> to vector<4x8x8xbf16>
    %46 = vector.extract_strided_slice %25 {offsets = [0, 0], sizes = [8, 8], strides = [1, 1]} : vector<8x32xf32> to vector<8x8xf32>
    %47 = vector.extract_strided_slice %25 {offsets = [0, 8], sizes = [8, 8], strides = [1, 1]} : vector<8x32xf32> to vector<8x8xf32>
    %48 = vector.extract_strided_slice %25 {offsets = [0, 16], sizes = [8, 8], strides = [1, 1]} : vector<8x32xf32> to vector<8x8xf32>
    %49 = vector.extract_strided_slice %25 {offsets = [0, 24], sizes = [8, 8], strides = [1, 1]} : vector<8x32xf32> to vector<8x8xf32>
    %50 = vector.shape_cast %46 : vector<8x8xf32> to vector<1x8x8xf32>
    %51 = vector.shape_cast %47 : vector<8x8xf32> to vector<1x8x8xf32>
    %52 = vector.shape_cast %48 : vector<8x8xf32> to vector<1x8x8xf32>
    %53 = vector.shape_cast %49 : vector<8x8xf32> to vector<1x8x8xf32>
    %54 = tpu.concatenate %50, %51, %52, %53 in 0 : vector<1x8x8xf32>, vector<1x8x8xf32>, vector<1x8x8xf32>, vector<1x8x8xf32> -> vector<4x8x8xf32>
    %55 = arith.truncf %54 : vector<4x8x8xf32> to vector<4x8x8xbf16>
    "tpu.trace_start"() <{level = 10 : i32, message = "hqd,hkd->hqk"}> : () -> ()
    %cst_29 = arith.constant dense<0.000000e+00> : vector<4x8x8xf32>
    %56 = tpu.matmul %35, %45, %cst_29 {dimension_numbers = #tpu.dot_dimension_numbers<[2], [2], [1], [1], [0, 0, 0, 1, 1, 1], [0], [0]>} : vector<4x8x8xbf16>, vector<4x8x8xbf16>, vector<4x8x8xf32> -> vector<4x8x8xf32>
    "tpu.trace_stop"() : () -> ()
    %cst_30 = arith.constant 0.353553385 : f32
    %57 = vector.broadcast %cst_30 : f32 to vector<4x8x8xf32>
    %58 = arith.mulf %56, %57 : vector<4x8x8xf32>
    %59 = vector.shape_cast %4 : vector<8x8xf32> to vector<1x8x8xf32>
    %60 = vector.broadcast %59 : vector<1x8x8xf32> to vector<4x8x8xf32>
    %61 = arith.addf %58, %60 : vector<4x8x8xf32>
    %cst_31 = arith.constant dense<0xFF800000> : vector<4x8xf32>
    %62 = vector.multi_reduction <maximumf>, %61, %cst_31 [2] : vector<4x8x8xf32> to vector<4x8xf32>
    %63 = vector.shape_cast %62 : vector<4x8xf32> to vector<4x8x1xf32>
    %64 = vector.broadcast %63 : vector<4x8x1xf32> to vector<4x8x8xf32>
    %65 = arith.subf %61, %64 : vector<4x8x8xf32>
    %66 = math.exp %65 : vector<4x8x8xf32>
    %cst_32 = arith.constant dense<0.000000e+00> : vector<4x8xf32>
    %67 = vector.multi_reduction <add>, %66, %cst_32 [2] : vector<4x8x8xf32> to vector<4x8xf32>
    %68 = vector.shape_cast %67 : vector<4x8xf32> to vector<4x8x1xf32>
    %69 = tpu.reciprocal %68 {approx = true} : vector<4x8x1xf32> -> vector<4x8x1xf32>
    %70 = vector.broadcast %69 : vector<4x8x1xf32> to vector<4x8x8xf32>
    %71 = arith.mulf %66, %70 : vector<4x8x8xf32>
    %72 = arith.truncf %71 : vector<4x8x8xf32> to vector<4x8x8xbf16>
    "tpu.trace_start"() <{level = 10 : i32, message = "hqk,hkd->hqd"}> : () -> ()
    %cst_33 = arith.constant dense<0.000000e+00> : vector<4x8x8xf32>
    %73 = tpu.matmul %72, %55, %cst_33 {dimension_numbers = #tpu.dot_dimension_numbers<[2], [1], [1], [2], [0, 0, 0, 1, 1, 2], [0], [0]>} : vector<4x8x8xbf16>, vector<4x8x8xbf16>, vector<4x8x8xf32> -> vector<4x8x8xf32>
    "tpu.trace_stop"() : () -> ()
    %74 = vector.extract_strided_slice %73 {offsets = [0, 0, 0], sizes = [1, 8, 8], strides = [1, 1, 1]} : vector<4x8x8xf32> to vector<1x8x8xf32>
    %75 = vector.shape_cast %74 : vector<1x8x8xf32> to vector<8x8xf32>
    %c0_34 = arith.constant 0 : index
    %c0_35 = arith.constant 0 : index
    %76 = vector.load %arg31[%c0_34, %c0_35] : memref<32x8xf32, #tpu.memory_space<vmem>>, vector<8x8xf32>
    tpu.vector_store %arg31[%c0_34, %c0_35], %75 {strides = array<i32>} : memref<32x8xf32, #tpu.memory_space<vmem>>, vector<8x8xf32>,
    %77 = vector.extract_strided_slice %73 {offsets = [1, 0, 0], sizes = [1, 8, 8], strides = [1, 1, 1]} : vector<4x8x8xf32> to vector<1x8x8xf32>
    %78 = vector.shape_cast %77 : vector<1x8x8xf32> to vector<8x8xf32>
    %c8 = arith.constant 8 : index
    %c0_36 = arith.constant 0 : index
    %79 = vector.load %arg31[%c8, %c0_36] : memref<32x8xf32, #tpu.memory_space<vmem>>, vector<8x8xf32>
    tpu.vector_store %arg31[%c8, %c0_36], %78 {strides = array<i32>} : memref<32x8xf32, #tpu.memory_space<vmem>>, vector<8x8xf32>,
    %80 = vector.extract_strided_slice %73 {offsets = [2, 0, 0], sizes = [1, 8, 8], strides = [1, 1, 1]} : vector<4x8x8xf32> to vector<1x8x8xf32>
    %81 = vector.shape_cast %80 : vector<1x8x8xf32> to vector<8x8xf32>
    %c16 = arith.constant 16 : index
    %c0_37 = arith.constant 0 : index
    %82 = vector.load %arg31[%c16, %c0_37] : memref<32x8xf32, #tpu.memory_space<vmem>>, vector<8x8xf32>
    tpu.vector_store %arg31[%c16, %c0_37], %81 {strides = array<i32>} : memref<32x8xf32, #tpu.memory_space<vmem>>, vector<8x8xf32>,
    %83 = vector.extract_strided_slice %73 {offsets = [3, 0, 0], sizes = [1, 8, 8], strides = [1, 1, 1]} : vector<4x8x8xf32> to vector<1x8x8xf32>
    %84 = vector.shape_cast %83 : vector<1x8x8xf32> to vector<8x8xf32>
    %c24 = arith.constant 24 : index
    %c0_38 = arith.constant 0 : index
    %85 = vector.load %arg31[%c24, %c0_38] : memref<32x8xf32, #tpu.memory_space<vmem>>, vector<8x8xf32>
    tpu.vector_store %arg31[%c24, %c0_38], %84 {strides = array<i32>} : memref<32x8xf32, #tpu.memory_space<vmem>>, vector<8x8xf32>,
    %c0_39 = arith.constant 0 : index
    %c0_40 = arith.constant 0 : index
    %86 = tpu.strided_load %arg31[%c0_39, %c0_40] {strides = array<i32: 4, 1>} : memref<32x8xf32, #tpu.memory_space<vmem>>, vector<8x8xf32>
    %c1 = arith.constant 1 : index
    %c0_41 = arith.constant 0 : index
    %87 = tpu.strided_load %arg31[%c1, %c0_41] {strides = array<i32: 4, 1>} : memref<32x8xf32, #tpu.memory_space<vmem>>, vector<8x8xf32>
    %c2 = arith.constant 2 : index
    %c0_42 = arith.constant 0 : index
    %88 = tpu.strided_load %arg31[%c2, %c0_42] {strides = array<i32: 4, 1>} : memref<32x8xf32, #tpu.memory_space<vmem>>, vector<8x8xf32>
    %c3 = arith.constant 3 : index
    %c0_43 = arith.constant 0 : index
    %89 = tpu.strided_load %arg31[%c3, %c0_43] {strides = array<i32: 4, 1>} : memref<32x8xf32, #tpu.memory_space<vmem>>, vector<8x8xf32>
    %90 = tpu.concatenate %86, %87, %88, %89 in 1 : vector<8x8xf32>, vector<8x8xf32>, vector<8x8xf32>, vector<8x8xf32> -> vector<8x32xf32>
    %91 = arith.truncf %90 : vector<8x32xf32> to vector<8x32xbf16>
    %cst_44 = arith.constant dense<0.000000e+00> : vector<8x32xf32>
    %92 = tpu.matmul %91, %11, %cst_44 {dimension_numbers = #tpu.dot_dimension_numbers<[1], [0], [0], [1], [0, 0, 1, 1], [], []>} : vector<8x32xbf16>, vector<32x32xbf16>, vector<8x32xf32> -> vector<8x32xf32>
    %93 = vector.broadcast %12 : vector<1x32xf32> to vector<8x32xf32>
    %94 = arith.addf %92, %93 : vector<8x32xf32>
    %95 = arith.addf %94, %1 : vector<8x32xf32>
    %cst_45 = arith.constant dense<0.000000e+00> : vector<8xf32>
    %96 = vector.multi_reduction <add>, %95, %cst_45 [1] : vector<8x32xf32> to vector<8xf32>
    %97 = vector.shape_cast %96 : vector<8xf32> to vector<8x1xf32>
    %cst_46 = arith.constant 3.200000e+01 : f32
    %98 = vector.broadcast %cst_46 : f32 to vector<8x1xf32>
    %99 = arith.divf %97, %98 : vector<8x1xf32>
    %100 = vector.broadcast %99 : vector<8x1xf32> to vector<8x32xf32>
    %101 = arith.subf %95, %100 : vector<8x32xf32>
    %102 = arith.mulf %101, %101 : vector<8x32xf32>
    %cst_47 = arith.constant dense<0.000000e+00> : vector<8xf32>
    %103 = vector.multi_reduction <add>, %102, %cst_47 [1] : vector<8x32xf32> to vector<8xf32>
    %104 = vector.shape_cast %103 : vector<8xf32> to vector<8x1xf32>
    %cst_48 = arith.constant 3.200000e+01 : f32
    %105 = vector.broadcast %cst_48 : f32 to vector<8x1xf32>
    %106 = arith.divf %104, %105 : vector<8x1xf32>
    %107 = vector.broadcast %99 : vector<8x1xf32> to vector<8x32xf32>
    %108 = arith.subf %95, %107 : vector<8x32xf32>
    %cst_49 = arith.constant 9.99999974E-6 : f32
    %109 = vector.broadcast %cst_49 : f32 to vector<8x1xf32>
    %110 = arith.addf %106, %109 : vector<8x1xf32>
    %111 = math.rsqrt %110 : vector<8x1xf32>
    %112 = vector.broadcast %111 : vector<8x1xf32> to vector<8x32xf32>
    %113 = arith.mulf %108, %112 : vector<8x32xf32>
    %114 = vector.broadcast %13 : vector<1x32xf32> to vector<8x32xf32>
    %115 = arith.mulf %114, %113 : vector<8x32xf32>
    %116 = vector.broadcast %14 : vector<1x32xf32> to vector<8x32xf32>
    %117 = arith.addf %115, %116 : vector<8x32xf32>
    %c0_50 = arith.constant 0 : index
    %c0_51 = arith.constant 0 : index
    %118 = vector.load %arg14[%c0_50, %c0_51] : memref<32x32xbf16, #tpu.memory_space<vmem>>, vector<32x32xbf16>
    %c0_52 = arith.constant 0 : index
    %c0_53 = arith.constant 0 : index
    %119 = vector.load %arg15[%c0_52, %c0_53] : memref<1x32xf32, #tpu.memory_space<vmem>>, vector<1x32xf32>
    %c0_54 = arith.constant 0 : index
    %c0_55 = arith.constant 0 : index
    %120 = vector.load %arg16[%c0_54, %c0_55] : memref<32x32xbf16, #tpu.memory_space<vmem>>, vector<32x32xbf16>
    %c0_56 = arith.constant 0 : index
    %c0_57 = arith.constant 0 : index
    %121 = vector.load %arg17[%c0_56, %c0_57] : memref<1x32xf32, #tpu.memory_space<vmem>>, vector<1x32xf32>
    %c0_58 = arith.constant 0 : index
    %c0_59 = arith.constant 0 : index
    %122 = vector.load %arg18[%c0_58, %c0_59] : memref<32x32xbf16, #tpu.memory_space<vmem>>, vector<32x32xbf16>
    %c0_60 = arith.constant 0 : index
    %c0_61 = arith.constant 0 : index
    %123 = vector.load %arg19[%c0_60, %c0_61] : memref<1x32xf32, #tpu.memory_space<vmem>>, vector<1x32xf32>
    %c0_62 = arith.constant 0 : index
    %c0_63 = arith.constant 0 : index
    %124 = vector.load %arg20[%c0_62, %c0_63] : memref<32x32xbf16, #tpu.memory_space<vmem>>, vector<32x32xbf16>
    %c0_64 = arith.constant 0 : index
    %c0_65 = arith.constant 0 : index
    %125 = vector.load %arg21[%c0_64, %c0_65] : memref<1x32xf32, #tpu.memory_space<vmem>>, vector<1x32xf32>
    %c0_66 = arith.constant 0 : index
    %c0_67 = arith.constant 0 : index
    %126 = vector.load %arg22[%c0_66, %c0_67] : memref<1x32xf32, #tpu.memory_space<vmem>>, vector<1x32xf32>
    %c0_68 = arith.constant 0 : index
    %c0_69 = arith.constant 0 : index
    %127 = vector.load %arg23[%c0_68, %c0_69] : memref<1x32xf32, #tpu.memory_space<vmem>>, vector<1x32xf32>
    %128 = arith.truncf %117 : vector<8x32xf32> to vector<8x32xbf16>
    %129 = arith.truncf %3 : vector<8x32xf32> to vector<8x32xbf16>
    %cst_70 = arith.constant dense<0.000000e+00> : vector<8x32xf32>
    %130 = tpu.matmul %129, %118, %cst_70 {dimension_numbers = #tpu.dot_dimension_numbers<[1], [0], [0], [1], [0, 0, 1, 1], [], []>} : vector<8x32xbf16>, vector<32x32xbf16>, vector<8x32xf32> -> vector<8x32xf32>
    %131 = vector.broadcast %119 : vector<1x32xf32> to vector<8x32xf32>
    %132 = arith.addf %130, %131 : vector<8x32xf32>
    %cst_71 = arith.constant dense<0.000000e+00> : vector<8x32xf32>
    %133 = tpu.matmul %128, %120, %cst_71 {dimension_numbers = #tpu.dot_dimension_numbers<[1], [0], [0], [1], [0, 0, 1, 1], [], []>} : vector<8x32xbf16>, vector<32x32xbf16>, vector<8x32xf32> -> vector<8x32xf32>
    %134 = vector.broadcast %121 : vector<1x32xf32> to vector<8x32xf32>
    %135 = arith.addf %133, %134 : vector<8x32xf32>
    %cst_72 = arith.constant dense<0.000000e+00> : vector<8x32xf32>
    %136 = tpu.matmul %128, %122, %cst_72 {dimension_numbers = #tpu.dot_dimension_numbers<[1], [0], [0], [1], [0, 0, 1, 1], [], []>} : vector<8x32xbf16>, vector<32x32xbf16>, vector<8x32xf32> -> vector<8x32xf32>
    %137 = vector.broadcast %123 : vector<1x32xf32> to vector<8x32xf32>
    %138 = arith.addf %136, %137 : vector<8x32xf32>
    %139 = vector.extract_strided_slice %132 {offsets = [0, 0], sizes = [8, 8], strides = [1, 1]} : vector<8x32xf32> to vector<8x8xf32>
    %140 = vector.extract_strided_slice %132 {offsets = [0, 8], sizes = [8, 8], strides = [1, 1]} : vector<8x32xf32> to vector<8x8xf32>
    %141 = vector.extract_strided_slice %132 {offsets = [0, 16], sizes = [8, 8], strides = [1, 1]} : vector<8x32xf32> to vector<8x8xf32>
    %142 = vector.extract_strided_slice %132 {offsets = [0, 24], sizes = [8, 8], strides = [1, 1]} : vector<8x32xf32> to vector<8x8xf32>
    %143 = vector.shape_cast %139 : vector<8x8xf32> to vector<1x8x8xf32>
    %144 = vector.shape_cast %140 : vector<8x8xf32> to vector<1x8x8xf32>
    %145 = vector.shape_cast %141 : vector<8x8xf32> to vector<1x8x8xf32>
    %146 = vector.shape_cast %142 : vector<8x8xf32> to vector<1x8x8xf32>
    %147 = tpu.concatenate %143, %144, %145, %146 in 0 : vector<1x8x8xf32>, vector<1x8x8xf32>, vector<1x8x8xf32>, vector<1x8x8xf32> -> vector<4x8x8xf32>
    %148 = arith.truncf %147 : vector<4x8x8xf32> to vector<4x8x8xbf16>
    %149 = vector.extract_strided_slice %135 {offsets = [0, 0], sizes = [8, 8], strides = [1, 1]} : vector<8x32xf32> to vector<8x8xf32>
    %150 = vector.extract_strided_slice %135 {offsets = [0, 8], sizes = [8, 8], strides = [1, 1]} : vector<8x32xf32> to vector<8x8xf32>
    %151 = vector.extract_strided_slice %135 {offsets = [0, 16], sizes = [8, 8], strides = [1, 1]} : vector<8x32xf32> to vector<8x8xf32>
    %152 = vector.extract_strided_slice %135 {offsets = [0, 24], sizes = [8, 8], strides = [1, 1]} : vector<8x32xf32> to vector<8x8xf32>
    %153 = vector.shape_cast %149 : vector<8x8xf32> to vector<1x8x8xf32>
    %154 = vector.shape_cast %150 : vector<8x8xf32> to vector<1x8x8xf32>
    %155 = vector.shape_cast %151 : vector<8x8xf32> to vector<1x8x8xf32>
    %156 = vector.shape_cast %152 : vector<8x8xf32> to vector<1x8x8xf32>
    %157 = tpu.concatenate %153, %154, %155, %156 in 0 : vector<1x8x8xf32>, vector<1x8x8xf32>, vector<1x8x8xf32>, vector<1x8x8xf32> -> vector<4x8x8xf32>
    %158 = arith.truncf %157 : vector<4x8x8xf32> to vector<4x8x8xbf16>
    %159 = vector.extract_strided_slice %138 {offsets = [0, 0], sizes = [8, 8], strides = [1, 1]} : vector<8x32xf32> to vector<8x8xf32>
    %160 = vector.extract_strided_slice %138 {offsets = [0, 8], sizes = [8, 8], strides = [1, 1]} : vector<8x32xf32> to vector<8x8xf32>
    %161 = vector.extract_strided_slice %138 {offsets = [0, 16], sizes = [8, 8], strides = [1, 1]} : vector<8x32xf32> to vector<8x8xf32>
    %162 = vector.extract_strided_slice %138 {offsets = [0, 24], sizes = [8, 8], strides = [1, 1]} : vector<8x32xf32> to vector<8x8xf32>
    %163 = vector.shape_cast %159 : vector<8x8xf32> to vector<1x8x8xf32>
    %164 = vector.shape_cast %160 : vector<8x8xf32> to vector<1x8x8xf32>
    %165 = vector.shape_cast %161 : vector<8x8xf32> to vector<1x8x8xf32>
    %166 = vector.shape_cast %162 : vector<8x8xf32> to vector<1x8x8xf32>
    %167 = tpu.concatenate %163, %164, %165, %166 in 0 : vector<1x8x8xf32>, vector<1x8x8xf32>, vector<1x8x8xf32>, vector<1x8x8xf32> -> vector<4x8x8xf32>
    %168 = arith.truncf %167 : vector<4x8x8xf32> to vector<4x8x8xbf16>
    "tpu.trace_start"() <{level = 10 : i32, message = "hqd,hkd->hqk"}> : () -> ()
    %cst_73 = arith.constant dense<0.000000e+00> : vector<4x8x8xf32>
    %169 = tpu.matmul %148, %158, %cst_73 {dimension_numbers = #tpu.dot_dimension_numbers<[2], [2], [1], [1], [0, 0, 0, 1, 1, 1], [0], [0]>} : vector<4x8x8xbf16>, vector<4x8x8xbf16>, vector<4x8x8xf32> -> vector<4x8x8xf32>
    "tpu.trace_stop"() : () -> ()
    %cst_74 = arith.constant 0.353553385 : f32
    %170 = vector.broadcast %cst_74 : f32 to vector<4x8x8xf32>
    %171 = arith.mulf %169, %170 : vector<4x8x8xf32>
    %cst_75 = arith.constant dense<0xFF800000> : vector<4x8xf32>
    %172 = vector.multi_reduction <maximumf>, %171, %cst_75 [2] : vector<4x8x8xf32> to vector<4x8xf32>
    %173 = vector.shape_cast %172 : vector<4x8xf32> to vector<4x8x1xf32>
    %174 = vector.broadcast %173 : vector<4x8x1xf32> to vector<4x8x8xf32>
    %175 = arith.subf %171, %174 : vector<4x8x8xf32>
    %176 = math.exp %175 : vector<4x8x8xf32>
    %cst_76 = arith.constant dense<0.000000e+00> : vector<4x8xf32>
    %177 = vector.multi_reduction <add>, %176, %cst_76 [2] : vector<4x8x8xf32> to vector<4x8xf32>
    %178 = vector.shape_cast %177 : vector<4x8xf32> to vector<4x8x1xf32>
    %179 = tpu.reciprocal %178 {approx = true} : vector<4x8x1xf32> -> vector<4x8x1xf32>
    %180 = vector.broadcast %179 : vector<4x8x1xf32> to vector<4x8x8xf32>
    %181 = arith.mulf %176, %180 : vector<4x8x8xf32>
    %182 = arith.truncf %181 : vector<4x8x8xf32> to vector<4x8x8xbf16>
    "tpu.trace_start"() <{level = 10 : i32, message = "hqk,hkd->hqd"}> : () -> ()
    %cst_77 = arith.constant dense<0.000000e+00> : vector<4x8x8xf32>
    %183 = tpu.matmul %182, %168, %cst_77 {dimension_numbers = #tpu.dot_dimension_numbers<[2], [1], [1], [2], [0, 0, 0, 1, 1, 2], [0], [0]>} : vector<4x8x8xbf16>, vector<4x8x8xbf16>, vector<4x8x8xf32> -> vector<4x8x8xf32>
    "tpu.trace_stop"() : () -> ()
    %184 = vector.extract_strided_slice %183 {offsets = [0, 0, 0], sizes = [1, 8, 8], strides = [1, 1, 1]} : vector<4x8x8xf32> to vector<1x8x8xf32>
    %185 = vector.shape_cast %184 : vector<1x8x8xf32> to vector<8x8xf32>
    %c0_78 = arith.constant 0 : index
    %c0_79 = arith.constant 0 : index
    %186 = vector.load %arg31[%c0_78, %c0_79] : memref<32x8xf32, #tpu.memory_space<vmem>>, vector<8x8xf32>
    tpu.vector_store %arg31[%c0_78, %c0_79], %185 {strides = array<i32>} : memref<32x8xf32, #tpu.memory_space<vmem>>, vector<8x8xf32>,
    %187 = vector.extract_strided_slice %183 {offsets = [1, 0, 0], sizes = [1, 8, 8], strides = [1, 1, 1]} : vector<4x8x8xf32> to vector<1x8x8xf32>
    %188 = vector.shape_cast %187 : vector<1x8x8xf32> to vector<8x8xf32>
    %c8_80 = arith.constant 8 : index
    %c0_81 = arith.constant 0 : index
    %189 = vector.load %arg31[%c8_80, %c0_81] : memref<32x8xf32, #tpu.memory_space<vmem>>, vector<8x8xf32>
    tpu.vector_store %arg31[%c8_80, %c0_81], %188 {strides = array<i32>} : memref<32x8xf32, #tpu.memory_space<vmem>>, vector<8x8xf32>,
    %190 = vector.extract_strided_slice %183 {offsets = [2, 0, 0], sizes = [1, 8, 8], strides = [1, 1, 1]} : vector<4x8x8xf32> to vector<1x8x8xf32>
    %191 = vector.shape_cast %190 : vector<1x8x8xf32> to vector<8x8xf32>
    %c16_82 = arith.constant 16 : index
    %c0_83 = arith.constant 0 : index
    %192 = vector.load %arg31[%c16_82, %c0_83] : memref<32x8xf32, #tpu.memory_space<vmem>>, vector<8x8xf32>
    tpu.vector_store %arg31[%c16_82, %c0_83], %191 {strides = array<i32>} : memref<32x8xf32, #tpu.memory_space<vmem>>, vector<8x8xf32>,
    %193 = vector.extract_strided_slice %183 {offsets = [3, 0, 0], sizes = [1, 8, 8], strides = [1, 1, 1]} : vector<4x8x8xf32> to vector<1x8x8xf32>
    %194 = vector.shape_cast %193 : vector<1x8x8xf32> to vector<8x8xf32>
    %c24_84 = arith.constant 24 : index
    %c0_85 = arith.constant 0 : index
    %195 = vector.load %arg31[%c24_84, %c0_85] : memref<32x8xf32, #tpu.memory_space<vmem>>, vector<8x8xf32>
    tpu.vector_store %arg31[%c24_84, %c0_85], %194 {strides = array<i32>} : memref<32x8xf32, #tpu.memory_space<vmem>>, vector<8x8xf32>,
    %c0_86 = arith.constant 0 : index
    %c0_87 = arith.constant 0 : index
    %196 = tpu.strided_load %arg31[%c0_86, %c0_87] {strides = array<i32: 4, 1>} : memref<32x8xf32, #tpu.memory_space<vmem>>, vector<8x8xf32>
    %c1_88 = arith.constant 1 : index
    %c0_89 = arith.constant 0 : index
    %197 = tpu.strided_load %arg31[%c1_88, %c0_89] {strides = array<i32: 4, 1>} : memref<32x8xf32, #tpu.memory_space<vmem>>, vector<8x8xf32>
    %c2_90 = arith.constant 2 : index
    %c0_91 = arith.constant 0 : index
    %198 = tpu.strided_load %arg31[%c2_90, %c0_91] {strides = array<i32: 4, 1>} : memref<32x8xf32, #tpu.memory_space<vmem>>, vector<8x8xf32>
    %c3_92 = arith.constant 3 : index
    %c0_93 = arith.constant 0 : index
    %199 = tpu.strided_load %arg31[%c3_92, %c0_93] {strides = array<i32: 4, 1>} : memref<32x8xf32, #tpu.memory_space<vmem>>, vector<8x8xf32>
    %200 = tpu.concatenate %196, %197, %198, %199 in 1 : vector<8x8xf32>, vector<8x8xf32>, vector<8x8xf32>, vector<8x8xf32> -> vector<8x32xf32>
    %201 = arith.truncf %200 : vector<8x32xf32> to vector<8x32xbf16>
    %cst_94 = arith.constant dense<0.000000e+00> : vector<8x32xf32>
    %202 = tpu.matmul %201, %124, %cst_94 {dimension_numbers = #tpu.dot_dimension_numbers<[1], [0], [0], [1], [0, 0, 1, 1], [], []>} : vector<8x32xbf16>, vector<32x32xbf16>, vector<8x32xf32> -> vector<8x32xf32>
    %203 = vector.broadcast %125 : vector<1x32xf32> to vector<8x32xf32>
    %204 = arith.addf %202, %203 : vector<8x32xf32>
    %205 = arith.addf %204, %117 : vector<8x32xf32>
    %cst_95 = arith.constant dense<0.000000e+00> : vector<8xf32>
    %206 = vector.multi_reduction <add>, %205, %cst_95 [1] : vector<8x32xf32> to vector<8xf32>
    %207 = vector.shape_cast %206 : vector<8xf32> to vector<8x1xf32>
    %cst_96 = arith.constant 3.200000e+01 : f32
    %208 = vector.broadcast %cst_96 : f32 to vector<8x1xf32>
    %209 = arith.divf %207, %208 : vector<8x1xf32>
    %210 = vector.broadcast %209 : vector<8x1xf32> to vector<8x32xf32>
    %211 = arith.subf %205, %210 : vector<8x32xf32>
    %212 = arith.mulf %211, %211 : vector<8x32xf32>
    %cst_97 = arith.constant dense<0.000000e+00> : vector<8xf32>
    %213 = vector.multi_reduction <add>, %212, %cst_97 [1] : vector<8x32xf32> to vector<8xf32>
    %214 = vector.shape_cast %213 : vector<8xf32> to vector<8x1xf32>
    %cst_98 = arith.constant 3.200000e+01 : f32
    %215 = vector.broadcast %cst_98 : f32 to vector<8x1xf32>
    %216 = arith.divf %214, %215 : vector<8x1xf32>
    %217 = vector.broadcast %209 : vector<8x1xf32> to vector<8x32xf32>
    %218 = arith.subf %205, %217 : vector<8x32xf32>
    %cst_99 = arith.constant 9.99999974E-6 : f32
    %219 = vector.broadcast %cst_99 : f32 to vector<8x1xf32>
    %220 = arith.addf %216, %219 : vector<8x1xf32>
    %221 = math.rsqrt %220 : vector<8x1xf32>
    %222 = vector.broadcast %221 : vector<8x1xf32> to vector<8x32xf32>
    %223 = arith.mulf %218, %222 : vector<8x32xf32>
    %224 = vector.broadcast %126 : vector<1x32xf32> to vector<8x32xf32>
    %225 = arith.mulf %224, %223 : vector<8x32xf32>
    %226 = vector.broadcast %127 : vector<1x32xf32> to vector<8x32xf32>
    %227 = arith.addf %225, %226 : vector<8x32xf32>
    %c0_100 = arith.constant 0 : index
    %c0_101 = arith.constant 0 : index
    %228 = vector.load %arg24[%c0_100, %c0_101] : memref<32x64xbf16, #tpu.memory_space<vmem>>, vector<32x64xbf16>
    %c0_102 = arith.constant 0 : index
    %c0_103 = arith.constant 0 : index
    %229 = vector.load %arg25[%c0_102, %c0_103] : memref<1x64xf32, #tpu.memory_space<vmem>>, vector<1x64xf32>
    %c0_104 = arith.constant 0 : index
    %c0_105 = arith.constant 0 : index
    %230 = vector.load %arg26[%c0_104, %c0_105] : memref<64x32xbf16, #tpu.memory_space<vmem>>, vector<64x32xbf16>
    %c0_106 = arith.constant 0 : index
    %c0_107 = arith.constant 0 : index
    %231 = vector.load %arg27[%c0_106, %c0_107] : memref<1x32xf32, #tpu.memory_space<vmem>>, vector<1x32xf32>
    %c0_108 = arith.constant 0 : index
    %c0_109 = arith.constant 0 : index
    %232 = vector.load %arg28[%c0_108, %c0_109] : memref<1x32xf32, #tpu.memory_space<vmem>>, vector<1x32xf32>
    %c0_110 = arith.constant 0 : index
    %c0_111 = arith.constant 0 : index
    %233 = vector.load %arg29[%c0_110, %c0_111] : memref<1x32xf32, #tpu.memory_space<vmem>>, vector<1x32xf32>
    %234 = arith.truncf %227 : vector<8x32xf32> to vector<8x32xbf16>
    %cst_112 = arith.constant dense<0.000000e+00> : vector<8x64xf32>
    %235 = tpu.matmul %234, %228, %cst_112 {dimension_numbers = #tpu.dot_dimension_numbers<[1], [0], [0], [1], [0, 0, 1, 1], [], []>} : vector<8x32xbf16>, vector<32x64xbf16>, vector<8x64xf32> -> vector<8x64xf32>
    %236 = vector.broadcast %229 : vector<1x64xf32> to vector<8x64xf32>
    %237 = arith.addf %235, %236 : vector<8x64xf32>
    %cst_113 = arith.constant 0.000000e+00 : f32
    %238 = vector.broadcast %cst_113 : f32 to vector<8x64xf32>
    %239 = arith.maximumf %237, %238 : vector<8x64xf32>
    %240 = arith.truncf %239 : vector<8x64xf32> to vector<8x64xbf16>
    %cst_114 = arith.constant dense<0.000000e+00> : vector<8x32xf32>
    %241 = tpu.matmul %240, %230, %cst_114 {dimension_numbers = #tpu.dot_dimension_numbers<[1], [0], [0], [1], [0, 0, 1, 1], [], []>} : vector<8x64xbf16>, vector<64x32xbf16>, vector<8x32xf32> -> vector<8x32xf32>
    %242 = vector.broadcast %231 : vector<1x32xf32> to vector<8x32xf32>
    %243 = arith.addf %241, %242 : vector<8x32xf32>
    %244 = arith.addf %243, %227 : vector<8x32xf32>
    %cst_115 = arith.constant dense<0.000000e+00> : vector<8xf32>
    %245 = vector.multi_reduction <add>, %244, %cst_115 [1] : vector<8x32xf32> to vector<8xf32>
    %246 = vector.shape_cast %245 : vector<8xf32> to vector<8x1xf32>
    %cst_116 = arith.constant 3.200000e+01 : f32
    %247 = vector.broadcast %cst_116 : f32 to vector<8x1xf32>
    %248 = arith.divf %246, %247 : vector<8x1xf32>
    %249 = vector.broadcast %248 : vector<8x1xf32> to vector<8x32xf32>
    %250 = arith.subf %244, %249 : vector<8x32xf32>
    %251 = arith.mulf %250, %250 : vector<8x32xf32>
    %cst_117 = arith.constant dense<0.000000e+00> : vector<8xf32>
    %252 = vector.multi_reduction <add>, %251, %cst_117 [1] : vector<8x32xf32> to vector<8xf32>
    %253 = vector.shape_cast %252 : vector<8xf32> to vector<8x1xf32>
    %cst_118 = arith.constant 3.200000e+01 : f32
    %254 = vector.broadcast %cst_118 : f32 to vector<8x1xf32>
    %255 = arith.divf %253, %254 : vector<8x1xf32>
    %256 = vector.broadcast %248 : vector<8x1xf32> to vector<8x32xf32>
    %257 = arith.subf %244, %256 : vector<8x32xf32>
    %cst_119 = arith.constant 9.99999974E-6 : f32
    %258 = vector.broadcast %cst_119 : f32 to vector<8x1xf32>
    %259 = arith.addf %255, %258 : vector<8x1xf32>
    %260 = math.rsqrt %259 : vector<8x1xf32>
    %261 = vector.broadcast %260 : vector<8x1xf32> to vector<8x32xf32>
    %262 = arith.mulf %257, %261 : vector<8x32xf32>
    %263 = vector.broadcast %232 : vector<1x32xf32> to vector<8x32xf32>
    %264 = arith.mulf %263, %262 : vector<8x32xf32>
    %265 = vector.broadcast %233 : vector<1x32xf32> to vector<8x32xf32>
    %266 = arith.addf %264, %265 : vector<8x32xf32>
    %c0_120 = arith.constant 0 : index
    %c0_121 = arith.constant 0 : index
    %c0_122 = arith.constant 0 : index
    %267 = vector.load %arg30[%c0_120, %c0_121, %c0_122] : memref<1x8x32xf32, #tpu.memory_space<vmem>>, vector<1x8x32xf32>
    %268 = vector.shape_cast %267 : vector<1x8x32xf32> to vector<8x32xf32>
    %269 = vector.shape_cast %266 : vector<8x32xf32> to vector<1x8x32xf32>
    tpu.vector_store %arg30[%c0_120, %c0_121, %c0_122], %269 {strides = array<i32>} : memref<1x8x32xf32, #tpu.memory_space<vmem>>, vector<1x8x32xf32>,
    return
  }
  func.func @transform_0(%arg0: i32) -> (i32, i32, i32) {
    %c0_i32 = arith.constant 0 : i32
    %c0_i32_0 = arith.constant 0 : i32
    %c0_i32_1 = arith.constant 0 : i32
    return %arg0, %c0_i32, %c0_i32_0 : i32, i32, i32
  }
  func.func @transform_1(%arg0: i32) -> (i32, i32, i32) {
    %c0_i32 = arith.constant 0 : i32
    %c0_i32_0 = arith.constant 0 : i32
    %c0_i32_1 = arith.constant 0 : i32
    return %arg0, %c0_i32, %c0_i32_0 : i32, i32, i32
  }
  func.func @transform_2(%arg0: i32) -> (i32, i32) {
    %c0_i32 = arith.constant 0 : i32
    %c0_i32_0 = arith.constant 0 : i32
    %c0_i32_1 = arith.constant 0 : i32
    return %c0_i32, %c0_i32_0 : i32, i32
  }
  func.func @transform_3(%arg0: i32) -> (i32, i32) {
    %c0_i32 = arith.constant 0 : i32
    %c0_i32_0 = arith.constant 0 : i32
    %c0_i32_1 = arith.constant 0 : i32
    return %c0_i32, %c0_i32_0 : i32, i32
  }
  func.func @transform_4(%arg0: i32) -> (i32, i32) {
    %c0_i32 = arith.constant 0 : i32
    %c0_i32_0 = arith.constant 0 : i32
    %c0_i32_1 = arith.constant 0 : i32
    return %c0_i32, %c0_i32_0 : i32, i32
  }
  func.func @transform_5(%arg0: i32) -> (i32, i32) {
    %c0_i32 = arith.constant 0 : i32
    %c0_i32_0 = arith.constant 0 : i32
    %c0_i32_1 = arith.constant 0 : i32
    return %c0_i32, %c0_i32_0 : i32, i32
  }
  func.func @transform_6(%arg0: i32) -> (i32, i32) {
    %c0_i32 = arith.constant 0 : i32
    %c0_i32_0 = arith.constant 0 : i32
    %c0_i32_1 = arith.constant 0 : i32
    return %c0_i32, %c0_i32_0 : i32, i32
  }
  func.func @transform_7(%arg0: i32) -> (i32, i32) {
    %c0_i32 = arith.constant 0 : i32
    %c0_i32_0 = arith.constant 0 : i32
    %c0_i32_1 = arith.constant 0 : i32
    return %c0_i32, %c0_i32_0 : i32, i32
  }
  func.func @transform_8(%arg0: i32) -> (i32, i32) {
    %c0_i32 = arith.constant 0 : i32
    %c0_i32_0 = arith.constant 0 : i32
    %c0_i32_1 = arith.constant 0 : i32
    return %c0_i32, %c0_i32_0 : i32, i32
  }
  func.func @transform_9(%arg0: i32) -> (i32, i32) {
    %c0_i32 = arith.constant 0 : i32
    %c0_i32_0 = arith.constant 0 : i32
    %c0_i32_1 = arith.constant 0 : i32
    return %c0_i32, %c0_i32_0 : i32, i32
  }
  func.func @transform_10(%arg0: i32) -> (i32, i32) {
    %c0_i32 = arith.constant 0 : i32
    %c0_i32_0 = arith.constant 0 : i32
    %c0_i32_1 = arith.constant 0 : i32
    return %c0_i32, %c0_i32_0 : i32, i32
  }
  func.func @transform_11(%arg0: i32) -> (i32, i32) {
    %c0_i32 = arith.constant 0 : i32
    %c0_i32_0 = arith.constant 0 : i32
    %c0_i32_1 = arith.constant 0 : i32
    return %c0_i32, %c0_i32_0 : i32, i32
  }
  func.func @transform_12(%arg0: i32) -> (i32, i32) {
    %c0_i32 = arith.constant 0 : i32
    %c0_i32_0 = arith.constant 0 : i32
    %c0_i32_1 = arith.constant 0 : i32
    return %c0_i32, %c0_i32_0 : i32, i32
  }
  func.func @transform_13(%arg0: i32) -> (i32, i32) {
    %c0_i32 = arith.constant 0 : i32
    %c0_i32_0 = arith.constant 0 : i32
    %c0_i32_1 = arith.constant 0 : i32
    return %c0_i32, %c0_i32_0 : i32, i32
  }
  func.func @transform_14(%arg0: i32) -> (i32, i32) {
    %c0_i32 = arith.constant 0 : i32
    %c0_i32_0 = arith.constant 0 : i32
    %c0_i32_1 = arith.constant 0 : i32
    return %c0_i32, %c0_i32_0 : i32, i32
  }
  func.func @transform_15(%arg0: i32) -> (i32, i32) {
    %c0_i32 = arith.constant 0 : i32
    %c0_i32_0 = arith.constant 0 : i32
    %c0_i32_1 = arith.constant 0 : i32
    return %c0_i32, %c0_i32_0 : i32, i32
  }
  func.func @transform_16(%arg0: i32) -> (i32, i32) {
    %c0_i32 = arith.constant 0 : i32
    %c0_i32_0 = arith.constant 0 : i32
    %c0_i32_1 = arith.constant 0 : i32
    return %c0_i32, %c0_i32_0 : i32, i32
  }
  func.func @transform_17(%arg0: i32) -> (i32, i32) {
    %c0_i32 = arith.constant 0 : i32
    %c0_i32_0 = arith.constant 0 : i32
    %c0_i32_1 = arith.constant 0 : i32
    return %c0_i32, %c0_i32_0 : i32, i32
  }
  func.func @transform_18(%arg0: i32) -> (i32, i32) {
    %c0_i32 = arith.constant 0 : i32
    %c0_i32_0 = arith.constant 0 : i32
    %c0_i32_1 = arith.constant 0 : i32
    return %c0_i32, %c0_i32_0 : i32, i32
  }
  func.func @transform_19(%arg0: i32) -> (i32, i32) {
    %c0_i32 = arith.constant 0 : i32
    %c0_i32_0 = arith.constant 0 : i32
    %c0_i32_1 = arith.constant 0 : i32
    return %c0_i32, %c0_i32_0 : i32, i32
  }
  func.func @transform_20(%arg0: i32) -> (i32, i32) {
    %c0_i32 = arith.constant 0 : i32
    %c0_i32_0 = arith.constant 0 : i32
    %c0_i32_1 = arith.constant 0 : i32
    return %c0_i32, %c0_i32_0 : i32, i32
  }
  func.func @transform_21(%arg0: i32) -> (i32, i32) {
    %c0_i32 = arith.constant 0 : i32
    %c0_i32_0 = arith.constant 0 : i32
    %c0_i32_1 = arith.constant 0 : i32
    return %c0_i32, %c0_i32_0 : i32, i32
  }
  func.func @transform_22(%arg0: i32) -> (i32, i32) {
    %c0_i32 = arith.constant 0 : i32
    %c0_i32_0 = arith.constant 0 : i32
    %c0_i32_1 = arith.constant 0 : i32
    return %c0_i32, %c0_i32_0 : i32, i32
  }
  func.func @transform_23(%arg0: i32) -> (i32, i32) {
    %c0_i32 = arith.constant 0 : i32
    %c0_i32_0 = arith.constant 0 : i32
    %c0_i32_1 = arith.constant 0 : i32
    return %c0_i32, %c0_i32_0 : i32, i32
  }
  func.func @transform_24(%arg0: i32) -> (i32, i32) {
    %c0_i32 = arith.constant 0 : i32
    %c0_i32_0 = arith.constant 0 : i32
    %c0_i32_1 = arith.constant 0 : i32
    return %c0_i32, %c0_i32_0 : i32, i32
  }
  func.func @transform_25(%arg0: i32) -> (i32, i32) {
    %c0_i32 = arith.constant 0 : i32
    %c0_i32_0 = arith.constant 0 : i32
    %c0_i32_1 = arith.constant 0 : i32
    return %c0_i32, %c0_i32_0 : i32, i32
  }
  func.func @transform_26(%arg0: i32) -> (i32, i32) {
    %c0_i32 = arith.constant 0 : i32
    %c0_i32_0 = arith.constant 0 : i32
    %c0_i32_1 = arith.constant 0 : i32
    return %c0_i32, %c0_i32_0 : i32, i32
  }
  func.func @transform_27(%arg0: i32) -> (i32, i32) {
    %c0_i32 = arith.constant 0 : i32
    %c0_i32_0 = arith.constant 0 : i32
    %c0_i32_1 = arith.constant 0 : i32
    return %c0_i32, %c0_i32_0 : i32, i32
  }
  func.func @transform_28(%arg0: i32) -> (i32, i32) {
    %c0_i32 = arith.constant 0 : i32
    %c0_i32_0 = arith.constant 0 : i32
    %c0_i32_1 = arith.constant 0 : i32
    return %c0_i32, %c0_i32_0 : i32, i32
  }
  func.func @transform_29(%arg0: i32) -> (i32, i32, i32) {
    %c0_i32 = arith.constant 0 : i32
    %c0_i32_0 = arith.constant 0 : i32
    %c0_i32_1 = arith.constant 0 : i32
    return %arg0, %c0_i32, %c0_i32_0 : i32, i32, i32
  }
}

</mosaic_0001>

<llo_original>
// kernel: squeeze.21
$region0: #{squeeze.21}
  %s0 = inlined_call_operand.vmem [shape: f32[4,8], index: 0, kind: input, shape index: {}]
  %s1 = inlined_call_operand.vmem [shape: f32[1,32], index: 1, kind: output, shape index: {}]
  $region1: #{squeeze.21} parent=0
    #allocation0 [shape = 'u8[4096]{0}', space=vmem, size = 0x1000, scoped, tag = 'scoped mem for output reshape']
    #allocation1 [shape = 'u8[4096]{0}', space=vmem, size = 0x1000, scoped, tag = 'scoped mem for input reshape']
    %s3 = ssub.s32 16, 1
    %v4 = vld [vmem:[%s0] sm:%s3]
    %5 = vst [vmem:[#allocation1] sm:%s3] %v4
    %v6 = vld [vmem:[#allocation1] sm:$0x1]
    %vm7 = vcmask 64512
    %8 = vst.msk [vmem:[#allocation0] sm:$0x1] %vm7, %v6
    %s9 = scalar_lea.vmem [#allocation1], 3
    %v10 = vld [vmem:[%s9] sm:$0x1]
    %11 = vrot.lane.b32.xlu0 %v10, 24
    %v12 = vpop.permute.xlu0 %11
    %vm13 = vcmask 261312
    %14 = vst.msk [vmem:[#allocation0] sm:$0x1] %vm13, %v12
    %s15 = scalar_lea.vmem [#allocation1], 2
    %v16 = vld [vmem:[%s15] sm:$0x1]
    %17 = vrot.lane.b32.xlu0 %v16, 16
    %v18 = vpop.permute.xlu0 %17
    %vm19 = vcmask 195712
    %20 = vst.msk [vmem:[#allocation0] sm:$0x1] %vm19, %v18
    %s21 = scalar_lea.vmem [#allocation1], 1
    %v22 = vld [vmem:[%s21] sm:$0x1]
    %23 = vrot.lane.b32.xlu0 %v22, 8
    %v24 = vpop.permute.xlu0 %23
    %vm25 = vcmask 130112
    %26 = vst.msk [vmem:[#allocation0] sm:$0x1] %vm25, %v24
    %s28 = ssub.s32 2, 1
    %v29 = vld [vmem:[#allocation0] sm:%s28]
    %s31 = ssub.s32 2, 1
    %32 = vst [vmem:[%s1] sm:%s31] %v29

// kernel: decoder_forward.3
$region0: #{decoder_forward.3}
  #allocation0 [shape = 'u32[]', space=smem, size = 0x4, offset = 0x4, fixed_abs, tag = 'smem constant byte address 0x4 - core index']
  #allocation1 [shape = 'u32[72,128]{1,0:T(1,128)}', space=vmem, size = 0x9000, scoped, tag = 'internal scratch']
  #allocation2 [shape = 'f32[32,8]{1,0:T(8,128)}', space=vmem, size = 0x4000, scoped, tag = 'scratch operand']
  %s0 = inlined_call_operand.smem [shape: u32[30], index: -1, kind: input, shape index: {}]
  %s1 = sld [smem:[%s0]]
  %s2 = scalar_lea.smem %s0, 1
  %s3 = sld [smem:[%s2]]
  %s4 = scalar_lea.smem %s0, 2
  %s5 = sld [smem:[%s4]]
  %s6 = scalar_lea.smem %s0, 3
  %s7 = sld [smem:[%s6]]
  %s8 = scalar_lea.smem %s0, 4
  %s9 = sld [smem:[%s8]]
  %s10 = scalar_lea.smem %s0, 5
  %s11 = sld [smem:[%s10]]
  %s12 = scalar_lea.smem %s0, 6
  %s13 = sld [smem:[%s12]]
  %s14 = scalar_lea.smem %s0, 7
  %s15 = sld [smem:[%s14]]
  %s16 = scalar_lea.smem %s0, 8
  %s17 = sld [smem:[%s16]]
  %s18 = scalar_lea.smem %s0, 9
  %s19 = sld [smem:[%s18]]
  %s20 = scalar_lea.smem %s0, 10
  %s21 = sld [smem:[%s20]]
  %s22 = scalar_lea.smem %s0, 11
  %s23 = sld [smem:[%s22]]
  %s24 = scalar_lea.smem %s0, 12
  %s25 = sld [smem:[%s24]]
  %s26 = scalar_lea.smem %s0, 13
  %s27 = sld [smem:[%s26]]
  %s28 = scalar_lea.smem %s0, 14
  %s29 = sld [smem:[%s28]]
  %s30 = scalar_lea.smem %s0, 15
  %s31 = sld [smem:[%s30]]
  %s32 = scalar_lea.smem %s0, 16
  %s33 = sld [smem:[%s32]]
  %s34 = scalar_lea.smem %s0, 17
  %s35 = sld [smem:[%s34]]
  %s36 = scalar_lea.smem %s0, 18
  %s37 = sld [smem:[%s36]]
  %s38 = scalar_lea.smem %s0, 19
  %s39 = sld [smem:[%s38]]
  %s40 = scalar_lea.smem %s0, 20
  %s41 = sld [smem:[%s40]]
  %s42 = scalar_lea.smem %s0, 21
  %s43 = sld [smem:[%s42]]
  %s44 = scalar_lea.smem %s0, 22
  %s45 = sld [smem:[%s44]]
  %s46 = scalar_lea.smem %s0, 23
  %s47 = sld [smem:[%s46]]
  %s48 = scalar_lea.smem %s0, 24
  %s49 = sld [smem:[%s48]]
  %s50 = scalar_lea.smem %s0, 25
  %s51 = sld [smem:[%s50]]
  %s52 = scalar_lea.smem %s0, 26
  %s53 = sld [smem:[%s52]]
  %s54 = scalar_lea.smem %s0, 27
  %s55 = sld [smem:[%s54]]
  %s56 = scalar_lea.smem %s0, 28
  %s57 = sld [smem:[%s56]]
  %s58 = scalar_lea.smem %s0, 29
  %s59 = sld [smem:[%s58]]
  %s60 = sld [smem:[#allocation0]]
  $region149: #{decoder_forward.3} parent=0
    _
  %s62 = ssub.s32 1, %s60
  %s63 = scalar_select 0, %s62, %s60
  $region1: #{decoder_forward.3} parent=0
    #allocation3 [shape = 'u8[8192]{0}', space=vmem, size = 0x2000, scoped, tag = 'output window, operand 0']
    #allocation4 [shape = 's32[2]{0}', space=sflag, size = 0x8, scoped, tag = 'scoped memory for decoder_forward.3']
    %64 = vsyncpa [#allocation4], 0
    %s65 = scalar_lea.sflag [#allocation4], 1
    %66 = vsyncpa %s65, 0
    loop: start=0, step=1, limit=4
    $region2: #{decoder_forward.3} parent=1 // loop_pre_header
      _
    $region3: #{decoder_forward.3} parent=1 // loop_header
      %s68 = sphi 0, %s72
      %p69 = scmp.ge.s32.totalorder %s68, 4
      %s78 = sphi 0, %s80
      %s81 = sphi 0, %s78
      %s82 = sphi 0, %s81
      %s98 = sphi 0, %s82
      %s104 = sphi 0, %s106
      %s107 = sphi 0, %s104
      %s108 = sphi 0, %s107
      %s124 = sphi 0, %s108
      %s128 = sphi 0, %s128
      %s130 = sphi 0, %s128
      %s131 = sphi 0, %s130
      %s145 = sphi 0, %s131
      %s149 = sphi 0, %s149
      %s151 = sphi 0, %s149
      %s152 = sphi 0, %s151
      %s166 = sphi 0, %s152
      %s170 = sphi 0, %s170
      %s172 = sphi 0, %s170
      %s173 = sphi 0, %s172
      %s187 = sphi 0, %s173
      %s191 = sphi 0, %s191
      %s193 = sphi 0, %s191
      %s194 = sphi 0, %s193
      %s208 = sphi 0, %s194
      %s212 = sphi 0, %s212
      %s214 = sphi 0, %s212
      %s215 = sphi 0, %s214
      %s229 = sphi 0, %s215
      %s233 = sphi 0, %s233
      %s235 = sphi 0, %s233
      %s236 = sphi 0, %s235
      %s250 = sphi 0, %s236
      %s254 = sphi 0, %s254
      %s256 = sphi 0, %s254
      %s257 = sphi 0, %s256
      %s271 = sphi 0, %s257
      %s275 = sphi 0, %s275
      %s277 = sphi 0, %s275
      %s278 = sphi 0, %s277
      %s292 = sphi 0, %s278
      %s296 = sphi 0, %s296
      %s298 = sphi 0, %s296
      %s299 = sphi 0, %s298
      %s313 = sphi 0, %s299
      %s317 = sphi 0, %s317
      %s319 = sphi 0, %s317
      %s320 = sphi 0, %s319
      %s334 = sphi 0, %s320
      %s338 = sphi 0, %s338
      %s340 = sphi 0, %s338
      %s341 = sphi 0, %s340
      %s355 = sphi 0, %s341
      %s359 = sphi 0, %s359
      %s361 = sphi 0, %s359
      %s362 = sphi 0, %s361
      %s376 = sphi 0, %s362
      %s380 = sphi 0, %s380
      %s382 = sphi 0, %s380
      %s383 = sphi 0, %s382
      %s397 = sphi 0, %s383
      %s401 = sphi 0, %s401
      %s403 = sphi 0, %s401
      %s404 = sphi 0, %s403
      %s418 = sphi 0, %s404
      %s422 = sphi 0, %s422
      %s424 = sphi 0, %s422
      %s425 = sphi 0, %s424
      %s439 = sphi 0, %s425
      %s443 = sphi 0, %s443
      %s445 = sphi 0, %s443
      %s446 = sphi 0, %s445
      %s460 = sphi 0, %s446
      %s464 = sphi 0, %s464
      %s466 = sphi 0, %s464
      %s467 = sphi 0, %s466
      %s481 = sphi 0, %s467
      %s485 = sphi 0, %s485
      %s487 = sphi 0, %s485
      %s488 = sphi 0, %s487
      %s502 = sphi 0, %s488
      %s506 = sphi 0, %s506
      %s508 = sphi 0, %s506
      %s509 = sphi 0, %s508
      %s523 = sphi 0, %s509
      %s527 = sphi 0, %s527
      %s529 = sphi 0, %s527
      %s530 = sphi 0, %s529
      %s544 = sphi 0, %s530
      %s548 = sphi 0, %s548
      %s550 = sphi 0, %s548
      %s551 = sphi 0, %s550
      %s565 = sphi 0, %s551
      %s569 = sphi 0, %s569
      %s571 = sphi 0, %s569
      %s572 = sphi 0, %s571
      %s586 = sphi 0, %s572
      %s590 = sphi 0, %s590
      %s592 = sphi 0, %s590
      %s593 = sphi 0, %s592
      %s607 = sphi 0, %s593
      %s611 = sphi 0, %s611
      %s613 = sphi 0, %s611
      %s614 = sphi 0, %s613
      %s628 = sphi 0, %s614
      %s632 = sphi 0, %s632
      %s634 = sphi 0, %s632
      %s635 = sphi 0, %s634
      %s649 = sphi 0, %s635
      %s653 = sphi 0, %s653
      %s655 = sphi 0, %s653
      %s656 = sphi 0, %s655
      %s670 = sphi 0, %s656
      %s674 = sphi 0, %s674
      %s676 = sphi 0, %s674
      %s677 = sphi 0, %s676
      %s691 = sphi 0, %s677
      %s697 = sphi 0, %s699
      %s700 = sphi 0, %s697
      %s701 = sphi 0, %s700
      %s717 = sphi 0, %s701
    $region4: #{decoder_forward.3} parent=1 // loop_header_branch
      %71 = sbr.rel (%p69) target = $region8
    $region5: #{decoder_forward.3} parent=1 // loop_body
      %s73 = ssub.s32 %s68, 1
      %s74 = ssub.s32 %s68, 2
      %s75 = sadd.s32 %s68, 1
      %s76 = ssub.s32 %s68, %s75
      %p77 = scmp.eq.s32.totalorder %s76, 0
      %s79 = sadd.s32 %s78, 1
      %s80 = scalar_select %p77, %s78, %s79
      %p83 = pneg %p77
      %p84 = scmp.eq.s32.totalorder %s68, 1
      %p85 = por %p83, %p84
      %p86 = scmp.ne.s32.totalorder %s78, %s81
      %p87 = scmp.eq.s32.totalorder %s68, 0
      %p88 = por %p86, %p87
      %p89 = scmp.ne.s32.totalorder %s78, %s81
      %p90 = scmp.eq.s32.totalorder %s73, 1
      %p91 = por %p89, %p90
      %p92 = scmp.ne.s32.totalorder %s81, %s82
      %p93 = scmp.eq.s32.totalorder %s73, 0
      %p94 = por %p92, %p93
      %p95 = scmp.ne.s32.totalorder %s81, %s82
      %p96 = scmp.eq.s32.totalorder %s74, 1
      %p97 = por %p95, %p96
      %p99 = scmp.ne.s32.totalorder %s82, %s98
      %p100 = scmp.eq.s32.totalorder %s74, 0
      %p101 = por %p99, %p100
      %s102 = ssub.s32 %s68, %s75
      %p103 = scmp.eq.s32.totalorder %s102, 0
      %s105 = sadd.s32 %s104, 1
      %s106 = scalar_select %p103, %s104, %s105
      %p109 = pneg %p103
      %p110 = scmp.eq.s32.totalorder %s68, 1
      %p111 = por %p109, %p110
      %p112 = scmp.ne.s32.totalorder %s104, %s107
      %p113 = scmp.eq.s32.totalorder %s68, 0
      %p114 = por %p112, %p113
      %p115 = scmp.ne.s32.totalorder %s104, %s107
      %p116 = scmp.eq.s32.totalorder %s73, 1
      %p117 = por %p115, %p116
      %p118 = scmp.ne.s32.totalorder %s107, %s108
      %p119 = scmp.eq.s32.totalorder %s73, 0
      %p120 = por %p118, %p119
      %p121 = scmp.ne.s32.totalorder %s107, %s108
      %p122 = scmp.eq.s32.totalorder %s74, 1
      %p123 = por %p121, %p122
      %p125 = scmp.ne.s32.totalorder %s108, %s124
      %p126 = scmp.eq.s32.totalorder %s74, 0
      %p127 = por %p125, %p126
      %s129 = sadd.s32 %s128, 1
      %p132 = scmp.eq.s32.totalorder %s68, 1
      %p133 = scmp.ne.s32.totalorder %s128, %s130
      %p134 = scmp.eq.s32.totalorder %s68, 0
      %p135 = por %p133, %p134
      %p136 = scmp.ne.s32.totalorder %s128, %s130
      %p137 = scmp.eq.s32.totalorder %s73, 1
      %p138 = por %p136, %p137
      %p139 = scmp.ne.s32.totalorder %s130, %s131
      %p140 = scmp.eq.s32.totalorder %s73, 0
      %p141 = por %p139, %p140
      %p142 = scmp.ne.s32.totalorder %s130, %s131
      %p143 = scmp.eq.s32.totalorder %s74, 1
      %p144 = por %p142, %p143
      %p146 = scmp.ne.s32.totalorder %s131, %s145
      %p147 = scmp.eq.s32.totalorder %s74, 0
      %p148 = por %p146, %p147
      %s150 = sadd.s32 %s149, 1
      %p153 = scmp.eq.s32.totalorder %s68, 1
      %p154 = scmp.ne.s32.totalorder %s149, %s151
      %p155 = scmp.eq.s32.totalorder %s68, 0
      %p156 = por %p154, %p155
      %p157 = scmp.ne.s32.totalorder %s149, %s151
      %p158 = scmp.eq.s32.totalorder %s73, 1
      %p159 = por %p157, %p158
      %p160 = scmp.ne.s32.totalorder %s151, %s152
      %p161 = scmp.eq.s32.totalorder %s73, 0
      %p162 = por %p160, %p161
      %p163 = scmp.ne.s32.totalorder %s151, %s152
      %p164 = scmp.eq.s32.totalorder %s74, 1
      %p165 = por %p163, %p164
      %p167 = scmp.ne.s32.totalorder %s152, %s166
      %p168 = scmp.eq.s32.totalorder %s74, 0
      %p169 = por %p167, %p168
      %s171 = sadd.s32 %s170, 1
      %p174 = scmp.eq.s32.totalorder %s68, 1
      %p175 = scmp.ne.s32.totalorder %s170, %s172
      %p176 = scmp.eq.s32.totalorder %s68, 0
      %p177 = por %p175, %p176
      %p178 = scmp.ne.s32.totalorder %s170, %s172
      %p179 = scmp.eq.s32.totalorder %s73, 1
      %p180 = por %p178, %p179
      %p181 = scmp.ne.s32.totalorder %s172, %s173
      %p182 = scmp.eq.s32.totalorder %s73, 0
      %p183 = por %p181, %p182
      %p184 = scmp.ne.s32.totalorder %s172, %s173
      %p185 = scmp.eq.s32.totalorder %s74, 1
      %p186 = por %p184, %p185
      %p188 = scmp.ne.s32.totalorder %s173, %s187
      %p189 = scmp.eq.s32.totalorder %s74, 0
      %p190 = por %p188, %p189
      %s192 = sadd.s32 %s191, 1
      %p195 = scmp.eq.s32.totalorder %s68, 1
      %p196 = scmp.ne.s32.totalorder %s191, %s193
      %p197 = scmp.eq.s32.totalorder %s68, 0
      %p198 = por %p196, %p197
      %p199 = scmp.ne.s32.totalorder %s191, %s193
      %p200 = scmp.eq.s32.totalorder %s73, 1
      %p201 = por %p199, %p200
      %p202 = scmp.ne.s32.totalorder %s193, %s194
      %p203 = scmp.eq.s32.totalorder %s73, 0
      %p204 = por %p202, %p203
      %p205 = scmp.ne.s32.totalorder %s193, %s194
      %p206 = scmp.eq.s32.totalorder %s74, 1
      %p207 = por %p205, %p206
      %p209 = scmp.ne.s32.totalorder %s194, %s208
      %p210 = scmp.eq.s32.totalorder %s74, 0
      %p211 = por %p209, %p210
      %s213 = sadd.s32 %s212, 1
      %p216 = scmp.eq.s32.totalorder %s68, 1
      %p217 = scmp.ne.s32.totalorder %s212, %s214
      %p218 = scmp.eq.s32.totalorder %s68, 0
      %p219 = por %p217, %p218
      %p220 = scmp.ne.s32.totalorder %s212, %s214
      %p221 = scmp.eq.s32.totalorder %s73, 1
      %p222 = por %p220, %p221
      %p223 = scmp.ne.s32.totalorder %s214, %s215
      %p224 = scmp.eq.s32.totalorder %s73, 0
      %p225 = por %p223, %p224
      %p226 = scmp.ne.s32.totalorder %s214, %s215
      %p227 = scmp.eq.s32.totalorder %s74, 1
      %p228 = por %p226, %p227
      %p230 = scmp.ne.s32.totalorder %s215, %s229
      %p231 = scmp.eq.s32.totalorder %s74, 0
      %p232 = por %p230, %p231
      %s234 = sadd.s32 %s233, 1
      %p237 = scmp.eq.s32.totalorder %s68, 1
      %p238 = scmp.ne.s32.totalorder %s233, %s235
      %p239 = scmp.eq.s32.totalorder %s68, 0
      %p240 = por %p238, %p239
      %p241 = scmp.ne.s32.totalorder %s233, %s235
      %p242 = scmp.eq.s32.totalorder %s73, 1
      %p243 = por %p241, %p242
      %p244 = scmp.ne.s32.totalorder %s235, %s236
      %p245 = scmp.eq.s32.totalorder %s73, 0
      %p246 = por %p244, %p245
      %p247 = scmp.ne.s32.totalorder %s235, %s236
      %p248 = scmp.eq.s32.totalorder %s74, 1
      %p249 = por %p247, %p248
      %p251 = scmp.ne.s32.totalorder %s236, %s250
      %p252 = scmp.eq.s32.totalorder %s74, 0
      %p253 = por %p251, %p252
      %s255 = sadd.s32 %s254, 1
      %p258 = scmp.eq.s32.totalorder %s68, 1
      %p259 = scmp.ne.s32.totalorder %s254, %s256
      %p260 = scmp.eq.s32.totalorder %s68, 0
      %p261 = por %p259, %p260
      %p262 = scmp.ne.s32.totalorder %s254, %s256
      %p263 = scmp.eq.s32.totalorder %s73, 1
      %p264 = por %p262, %p263
      %p265 = scmp.ne.s32.totalorder %s256, %s257
      %p266 = scmp.eq.s32.totalorder %s73, 0
      %p267 = por %p265, %p266
      %p268 = scmp.ne.s32.totalorder %s256, %s257
      %p269 = scmp.eq.s32.totalorder %s74, 1
      %p270 = por %p268, %p269
      %p272 = scmp.ne.s32.totalorder %s257, %s271
      %p273 = scmp.eq.s32.totalorder %s74, 0
      %p274 = por %p272, %p273
      %s276 = sadd.s32 %s275, 1
      %p279 = scmp.eq.s32.totalorder %s68, 1
      %p280 = scmp.ne.s32.totalorder %s275, %s277
      %p281 = scmp.eq.s32.totalorder %s68, 0
      %p282 = por %p280, %p281
      %p283 = scmp.ne.s32.totalorder %s275, %s277
      %p284 = scmp.eq.s32.totalorder %s73, 1
      %p285 = por %p283, %p284
      %p286 = scmp.ne.s32.totalorder %s277, %s278
      %p287 = scmp.eq.s32.totalorder %s73, 0
      %p288 = por %p286, %p287
      %p289 = scmp.ne.s32.totalorder %s277, %s278
      %p290 = scmp.eq.s32.totalorder %s74, 1
      %p291 = por %p289, %p290
      %p293 = scmp.ne.s32.totalorder %s278, %s292
      %p294 = scmp.eq.s32.totalorder %s74, 0
      %p295 = por %p293, %p294
      %s297 = sadd.s32 %s296, 1
      %p300 = scmp.eq.s32.totalorder %s68, 1
      %p301 = scmp.ne.s32.totalorder %s296, %s298
      %p302 = scmp.eq.s32.totalorder %s68, 0
      %p303 = por %p301, %p302
      %p304 = scmp.ne.s32.totalorder %s296, %s298
      %p305 = scmp.eq.s32.totalorder %s73, 1
      %p306 = por %p304, %p305
      %p307 = scmp.ne.s32.totalorder %s298, %s299
      %p308 = scmp.eq.s32.totalorder %s73, 0
      %p309 = por %p307, %p308
      %p310 = scmp.ne.s32.totalorder %s298, %s299
      %p311 = scmp.eq.s32.totalorder %s74, 1
      %p312 = por %p310, %p311
      %p314 = scmp.ne.s32.totalorder %s299, %s313
      %p315 = scmp.eq.s32.totalorder %s74, 0
      %p316 = por %p314, %p315
      %s318 = sadd.s32 %s317, 1
      %p321 = scmp.eq.s32.totalorder %s68, 1
      %p322 = scmp.ne.s32.totalorder %s317, %s319
      %p323 = scmp.eq.s32.totalorder %s68, 0
      %p324 = por %p322, %p323
      %p325 = scmp.ne.s32.totalorder %s317, %s319
      %p326 = scmp.eq.s32.totalorder %s73, 1
      %p327 = por %p325, %p326
      %p328 = scmp.ne.s32.totalorder %s319, %s320
      %p329 = scmp.eq.s32.totalorder %s73, 0
      %p330 = por %p328, %p329
      %p331 = scmp.ne.s32.totalorder %s319, %s320
      %p332 = scmp.eq.s32.totalorder %s74, 1
      %p333 = por %p331, %p332
      %p335 = scmp.ne.s32.totalorder %s320, %s334
      %p336 = scmp.eq.s32.totalorder %s74, 0
      %p337 = por %p335, %p336
      %s339 = sadd.s32 %s338, 1
      %p342 = scmp.eq.s32.totalorder %s68, 1
      %p343 = scmp.ne.s32.totalorder %s338, %s340
      %p344 = scmp.eq.s32.totalorder %s68, 0
      %p345 = por %p343, %p344
      %p346 = scmp.ne.s32.totalorder %s338, %s340
      %p347 = scmp.eq.s32.totalorder %s73, 1
      %p348 = por %p346, %p347
      %p349 = scmp.ne.s32.totalorder %s340, %s341
      %p350 = scmp.eq.s32.totalorder %s73, 0
      %p351 = por %p349, %p350
      %p352 = scmp.ne.s32.totalorder %s340, %s341
      %p353 = scmp.eq.s32.totalorder %s74, 1
      %p354 = por %p352, %p353
      %p356 = scmp.ne.s32.totalorder %s341, %s355
      %p357 = scmp.eq.s32.totalorder %s74, 0
      %p358 = por %p356, %p357
      %s360 = sadd.s32 %s359, 1
      %p363 = scmp.eq.s32.totalorder %s68, 1
      %p364 = scmp.ne.s32.totalorder %s359, %s361
      %p365 = scmp.eq.s32.totalorder %s68, 0
      %p366 = por %p364, %p365
      %p367 = scmp.ne.s32.totalorder %s359, %s361
      %p368 = scmp.eq.s32.totalorder %s73, 1
      %p369 = por %p367, %p368
      %p370 = scmp.ne.s32.totalorder %s361, %s362
      %p371 = scmp.eq.s32.totalorder %s73, 0
      %p372 = por %p370, %p371
      %p373 = scmp.ne.s32.totalorder %s361, %s362
      %p374 = scmp.eq.s32.totalorder %s74, 1
      %p375 = por %p373, %p374
      %p377 = scmp.ne.s32.totalorder %s362, %s376
      %p378 = scmp.eq.s32.totalorder %s74, 0
      %p379 = por %p377, %p378
      %s381 = sadd.s32 %s380, 1
      %p384 = scmp.eq.s32.totalorder %s68, 1
      %p385 = scmp.ne.s32.totalorder %s380, %s382
      %p386 = scmp.eq.s32.totalorder %s68, 0
      %p387 = por %p385, %p386
      %p388 = scmp.ne.s32.totalorder %s380, %s382
      %p389 = scmp.eq.s32.totalorder %s73, 1
      %p390 = por %p388, %p389
      %p391 = scmp.ne.s32.totalorder %s382, %s383
      %p392 = scmp.eq.s32.totalorder %s73, 0
      %p393 = por %p391, %p392
      %p394 = scmp.ne.s32.totalorder %s382, %s383
      %p395 = scmp.eq.s32.totalorder %s74, 1
      %p396 = por %p394, %p395
      %p398 = scmp.ne.s32.totalorder %s383, %s397
      %p399 = scmp.eq.s32.totalorder %s74, 0
      %p400 = por %p398, %p399
      %s402 = sadd.s32 %s401, 1
      %p405 = scmp.eq.s32.totalorder %s68, 1
      %p406 = scmp.ne.s32.totalorder %s401, %s403
      %p407 = scmp.eq.s32.totalorder %s68, 0
      %p408 = por %p406, %p407
      %p409 = scmp.ne.s32.totalorder %s401, %s403
      %p410 = scmp.eq.s32.totalorder %s73, 1
      %p411 = por %p409, %p410
      %p412 = scmp.ne.s32.totalorder %s403, %s404
      %p413 = scmp.eq.s32.totalorder %s73, 0
      %p414 = por %p412, %p413
      %p415 = scmp.ne.s32.totalorder %s403, %s404
      %p416 = scmp.eq.s32.totalorder %s74, 1
      %p417 = por %p415, %p416
      %p419 = scmp.ne.s32.totalorder %s404, %s418
      %p420 = scmp.eq.s32.totalorder %s74, 0
      %p421 = por %p419, %p420
      %s423 = sadd.s32 %s422, 1
      %p426 = scmp.eq.s32.totalorder %s68, 1
      %p427 = scmp.ne.s32.totalorder %s422, %s424
      %p428 = scmp.eq.s32.totalorder %s68, 0
      %p429 = por %p427, %p428
      %p430 = scmp.ne.s32.totalorder %s422, %s424
      %p431 = scmp.eq.s32.totalorder %s73, 1
      %p432 = por %p430, %p431
      %p433 = scmp.ne.s32.totalorder %s424, %s425
      %p434 = scmp.eq.s32.totalorder %s73, 0
      %p435 = por %p433, %p434
      %p436 = scmp.ne.s32.totalorder %s424, %s425
      %p437 = scmp.eq.s32.totalorder %s74, 1
      %p438 = por %p436, %p437
      %p440 = scmp.ne.s32.totalorder %s425, %s439
      %p441 = scmp.eq.s32.totalorder %s74, 0
      %p442 = por %p440, %p441
      %s444 = sadd.s32 %s443, 1
      %p447 = scmp.eq.s32.totalorder %s68, 1
      %p448 = scmp.ne.s32.totalorder %s443, %s445
      %p449 = scmp.eq.s32.totalorder %s68, 0
      %p450 = por %p448, %p449
      %p451 = scmp.ne.s32.totalorder %s443, %s445
      %p452 = scmp.eq.s32.totalorder %s73, 1
      %p453 = por %p451, %p452
      %p454 = scmp.ne.s32.totalorder %s445, %s446
      %p455 = scmp.eq.s32.totalorder %s73, 0
      %p456 = por %p454, %p455
      %p457 = scmp.ne.s32.totalorder %s445, %s446
      %p458 = scmp.eq.s32.totalorder %s74, 1
      %p459 = por %p457, %p458
      %p461 = scmp.ne.s32.totalorder %s446, %s460
      %p462 = scmp.eq.s32.totalorder %s74, 0
      %p463 = por %p461, %p462
      %s465 = sadd.s32 %s464, 1
      %p468 = scmp.eq.s32.totalorder %s68, 1
      %p469 = scmp.ne.s32.totalorder %s464, %s466
      %p470 = scmp.eq.s32.totalorder %s68, 0
      %p471 = por %p469, %p470
      %p472 = scmp.ne.s32.totalorder %s464, %s466
      %p473 = scmp.eq.s32.totalorder %s73, 1
      %p474 = por %p472, %p473
      %p475 = scmp.ne.s32.totalorder %s466, %s467
      %p476 = scmp.eq.s32.totalorder %s73, 0
      %p477 = por %p475, %p476
      %p478 = scmp.ne.s32.totalorder %s466, %s467
      %p479 = scmp.eq.s32.totalorder %s74, 1
      %p480 = por %p478, %p479
      %p482 = scmp.ne.s32.totalorder %s467, %s481
      %p483 = scmp.eq.s32.totalorder %s74, 0
      %p484 = por %p482, %p483
      %s486 = sadd.s32 %s485, 1
      %p489 = scmp.eq.s32.totalorder %s68, 1
      %p490 = scmp.ne.s32.totalorder %s485, %s487
      %p491 = scmp.eq.s32.totalorder %s68, 0
      %p492 = por %p490, %p491
      %p493 = scmp.ne.s32.totalorder %s485, %s487
      %p494 = scmp.eq.s32.totalorder %s73, 1
      %p495 = por %p493, %p494
      %p496 = scmp.ne.s32.totalorder %s487, %s488
      %p497 = scmp.eq.s32.totalorder %s73, 0
      %p498 = por %p496, %p497
      %p499 = scmp.ne.s32.totalorder %s487, %s488
      %p500 = scmp.eq.s32.totalorder %s74, 1
      %p501 = por %p499, %p500
      %p503 = scmp.ne.s32.totalorder %s488, %s502
      %p504 = scmp.eq.s32.totalorder %s74, 0
      %p505 = por %p503, %p504
      %s507 = sadd.s32 %s506, 1
      %p510 = scmp.eq.s32.totalorder %s68, 1
      %p511 = scmp.ne.s32.totalorder %s506, %s508
      %p512 = scmp.eq.s32.totalorder %s68, 0
      %p513 = por %p511, %p512
      %p514 = scmp.ne.s32.totalorder %s506, %s508
      %p515 = scmp.eq.s32.totalorder %s73, 1
      %p516 = por %p514, %p515
      %p517 = scmp.ne.s32.totalorder %s508, %s509
      %p518 = scmp.eq.s32.totalorder %s73, 0
      %p519 = por %p517, %p518
      %p520 = scmp.ne.s32.totalorder %s508, %s509
      %p521 = scmp.eq.s32.totalorder %s74, 1
      %p522 = por %p520, %p521
      %p524 = scmp.ne.s32.totalorder %s509, %s523
      %p525 = scmp.eq.s32.totalorder %s74, 0
      %p526 = por %p524, %p525
      %s528 = sadd.s32 %s527, 1
      %p531 = scmp.eq.s32.totalorder %s68, 1
      %p532 = scmp.ne.s32.totalorder %s527, %s529
      %p533 = scmp.eq.s32.totalorder %s68, 0
      %p534 = por %p532, %p533
      %p535 = scmp.ne.s32.totalorder %s527, %s529
      %p536 = scmp.eq.s32.totalorder %s73, 1
      %p537 = por %p535, %p536
      %p538 = scmp.ne.s32.totalorder %s529, %s530
      %p539 = scmp.eq.s32.totalorder %s73, 0
      %p540 = por %p538, %p539
      %p541 = scmp.ne.s32.totalorder %s529, %s530
      %p542 = scmp.eq.s32.totalorder %s74, 1
      %p543 = por %p541, %p542
      %p545 = scmp.ne.s32.totalorder %s530, %s544
      %p546 = scmp.eq.s32.totalorder %s74, 0
      %p547 = por %p545, %p546
      %s549 = sadd.s32 %s548, 1
      %p552 = scmp.eq.s32.totalorder %s68, 1
      %p553 = scmp.ne.s32.totalorder %s548, %s550
      %p554 = scmp.eq.s32.totalorder %s68, 0
      %p555 = por %p553, %p554
      %p556 = scmp.ne.s32.totalorder %s548, %s550
      %p557 = scmp.eq.s32.totalorder %s73, 1
      %p558 = por %p556, %p557
      %p559 = scmp.ne.s32.totalorder %s550, %s551
      %p560 = scmp.eq.s32.totalorder %s73, 0
      %p561 = por %p559, %p560
      %p562 = scmp.ne.s32.totalorder %s550, %s551
      %p563 = scmp.eq.s32.totalorder %s74, 1
      %p564 = por %p562, %p563
      %p566 = scmp.ne.s32.totalorder %s551, %s565
      %p567 = scmp.eq.s32.totalorder %s74, 0
      %p568 = por %p566, %p567
      %s570 = sadd.s32 %s569, 1
      %p573 = scmp.eq.s32.totalorder %s68, 1
      %p574 = scmp.ne.s32.totalorder %s569, %s571
      %p575 = scmp.eq.s32.totalorder %s68, 0
      %p576 = por %p574, %p575
      %p577 = scmp.ne.s32.totalorder %s569, %s571
      %p578 = scmp.eq.s32.totalorder %s73, 1
      %p579 = por %p577, %p578
      %p580 = scmp.ne.s32.totalorder %s571, %s572
      %p581 = scmp.eq.s32.totalorder %s73, 0
      %p582 = por %p580, %p581
      %p583 = scmp.ne.s32.totalorder %s571, %s572
      %p584 = scmp.eq.s32.totalorder %s74, 1
      %p585 = por %p583, %p584
      %p587 = scmp.ne.s32.totalorder %s572, %s586
      %p588 = scmp.eq.s32.totalorder %s74, 0
      %p589 = por %p587, %p588
      %s591 = sadd.s32 %s590, 1
      %p594 = scmp.eq.s32.totalorder %s68, 1
      %p595 = scmp.ne.s32.totalorder %s590, %s592
      %p596 = scmp.eq.s32.totalorder %s68, 0
      %p597 = por %p595, %p596
      %p598 = scmp.ne.s32.totalorder %s590, %s592
      %p599 = scmp.eq.s32.totalorder %s73, 1
      %p600 = por %p598, %p599
      %p601 = scmp.ne.s32.totalorder %s592, %s593
      %p602 = scmp.eq.s32.totalorder %s73, 0
      %p603 = por %p601, %p602
      %p604 = scmp.ne.s32.totalorder %s592, %s593
      %p605 = scmp.eq.s32.totalorder %s74, 1
      %p606 = por %p604, %p605
      %p608 = scmp.ne.s32.totalorder %s593, %s607
      %p609 = scmp.eq.s32.totalorder %s74, 0
      %p610 = por %p608, %p609
      %s612 = sadd.s32 %s611, 1
      %p615 = scmp.eq.s32.totalorder %s68, 1
      %p616 = scmp.ne.s32.totalorder %s611, %s613
      %p617 = scmp.eq.s32.totalorder %s68, 0
      %p618 = por %p616, %p617
      %p619 = scmp.ne.s32.totalorder %s611, %s613
      %p620 = scmp.eq.s32.totalorder %s73, 1
      %p621 = por %p619, %p620
      %p622 = scmp.ne.s32.totalorder %s613, %s614
      %p623 = scmp.eq.s32.totalorder %s73, 0
      %p624 = por %p622, %p623
      %p625 = scmp.ne.s32.totalorder %s613, %s614
      %p626 = scmp.eq.s32.totalorder %s74, 1
      %p627 = por %p625, %p626
      %p629 = scmp.ne.s32.totalorder %s614, %s628
      %p630 = scmp.eq.s32.totalorder %s74, 0
      %p631 = por %p629, %p630
      %s633 = sadd.s32 %s632, 1
      %p636 = scmp.eq.s32.totalorder %s68, 1
      %p637 = scmp.ne.s32.totalorder %s632, %s634
      %p638 = scmp.eq.s32.totalorder %s68, 0
      %p639 = por %p637, %p638
      %p640 = scmp.ne.s32.totalorder %s632, %s634
      %p641 = scmp.eq.s32.totalorder %s73, 1
      %p642 = por %p640, %p641
      %p643 = scmp.ne.s32.totalorder %s634, %s635
      %p644 = scmp.eq.s32.totalorder %s73, 0
      %p645 = por %p643, %p644
      %p646 = scmp.ne.s32.totalorder %s634, %s635
      %p647 = scmp.eq.s32.totalorder %s74, 1
      %p648 = por %p646, %p647
      %p650 = scmp.ne.s32.totalorder %s635, %s649
      %p651 = scmp.eq.s32.totalorder %s74, 0
      %p652 = por %p650, %p651
      %s654 = sadd.s32 %s653, 1
      %p657 = scmp.eq.s32.totalorder %s68, 1
      %p658 = scmp.ne.s32.totalorder %s653, %s655
      %p659 = scmp.eq.s32.totalorder %s68, 0
      %p660 = por %p658, %p659
      %p661 = scmp.ne.s32.totalorder %s653, %s655
      %p662 = scmp.eq.s32.totalorder %s73, 1
      %p663 = por %p661, %p662
      %p664 = scmp.ne.s32.totalorder %s655, %s656
      %p665 = scmp.eq.s32.totalorder %s73, 0
      %p666 = por %p664, %p665
      %p667 = scmp.ne.s32.totalorder %s655, %s656
      %p668 = scmp.eq.s32.totalorder %s74, 1
      %p669 = por %p667, %p668
      %p671 = scmp.ne.s32.totalorder %s656, %s670
      %p672 = scmp.eq.s32.totalorder %s74, 0
      %p673 = por %p671, %p672
      %s675 = sadd.s32 %s674, 1
      %p678 = scmp.eq.s32.totalorder %s68, 1
      %p679 = scmp.ne.s32.totalorder %s674, %s676
      %p680 = scmp.eq.s32.totalorder %s68, 0
      %p681 = por %p679, %p680
      %p682 = scmp.ne.s32.totalorder %s674, %s676
      %p683 = scmp.eq.s32.totalorder %s73, 1
      %p684 = por %p682, %p683
      %p685 = scmp.ne.s32.totalorder %s676, %s677
      %p686 = scmp.eq.s32.totalorder %s73, 0
      %p687 = por %p685, %p686
      %p688 = scmp.ne.s32.totalorder %s676, %s677
      %p689 = scmp.eq.s32.totalorder %s74, 1
      %p690 = por %p688, %p689
      %p692 = scmp.ne.s32.totalorder %s677, %s691
      %p693 = scmp.eq.s32.totalorder %s74, 0
      %p694 = por %p692, %p693
      %s695 = ssub.s32 %s68, %s75
      %p696 = scmp.eq.s32.totalorder %s695, 0
      %s698 = sadd.s32 %s697, 1
      %s699 = scalar_select %p696, %s697, %s698
      %p702 = pneg %p696
      %p703 = scmp.eq.s32.totalorder %s68, 1
      %p704 = por %p702, %p703
      %p705 = scmp.ne.s32.totalorder %s697, %s700
      %p706 = scmp.eq.s32.totalorder %s68, 0
      %p707 = por %p705, %p706
      %p708 = scmp.ne.s32.totalorder %s697, %s700
      %p709 = scmp.eq.s32.totalorder %s73, 1
      %p710 = por %p708, %p709
      %p711 = scmp.ne.s32.totalorder %s700, %s701
      %p712 = scmp.eq.s32.totalorder %s73, 0
      %p713 = por %p711, %p712
      %p714 = scmp.ne.s32.totalorder %s700, %s701
      %p715 = scmp.eq.s32.totalorder %s74, 1
      %p716 = por %p714, %p715
      %p718 = scmp.ne.s32.totalorder %s701, %s717
      %p719 = scmp.eq.s32.totalorder %s74, 0
      %p720 = por %p718, %p719
      %p721 = scmp.le.s32.totalorder 1, %s68
      %p722 = scmp.lt.s32.totalorder %s68, 3
      %p723 = pnand %p721, %p722
      %p724 = pneg %p723
      // Predicated region
      $region9: #{decoder_forward.3} parent=5 // pred_check
        _
      $region10: #{decoder_forward.3} parent=5 // pred_check_branch
        %726 = sbr.rel (%p723) target = $region12
      $region11: #{decoder_forward.3} parent=5 // pred_region
        %s727 = ssub.s32 %s68, 1
        // Predicated region
        $region13: #{decoder_forward.3} parent=11 // pred_check
          %p728 = pneg %p141
        $region14: #{decoder_forward.3} parent=11 // pred_check_branch
          %730 = sbr.rel (%p728) target = $region16
        $region15: #{decoder_forward.3} parent=11 // pred_region
          _
        $region16: #{decoder_forward.3} parent=11 // pred_fallthru
          _
        // Predicated region
        $region17: #{decoder_forward.3} parent=11 // pred_check
          %p731 = pneg %p162
        $region18: #{decoder_forward.3} parent=11 // pred_check_branch
          %733 = sbr.rel (%p731) target = $region20
        $region19: #{decoder_forward.3} parent=11 // pred_region
          _
        $region20: #{decoder_forward.3} parent=11 // pred_fallthru
          _
        // Predicated region
        $region21: #{decoder_forward.3} parent=11 // pred_check
          %p734 = pneg %p183
        $region22: #{decoder_forward.3} parent=11 // pred_check_branch
          %736 = sbr.rel (%p734) target = $region24
        $region23: #{decoder_forward.3} parent=11 // pred_region
          _
        $region24: #{decoder_forward.3} parent=11 // pred_fallthru
          _
        // Predicated region
        $region25: #{decoder_forward.3} parent=11 // pred_check
          %p737 = pneg %p204
        $region26: #{decoder_forward.3} parent=11 // pred_check_branch
          %739 = sbr.rel (%p737) target = $region28
        $region27: #{decoder_forward.3} parent=11 // pred_region
          _
        $region28: #{decoder_forward.3} parent=11 // pred_fallthru
          _
        // Predicated region
        $region29: #{decoder_forward.3} parent=11 // pred_check
          %p740 = pneg %p225
        $region30: #{decoder_forward.3} parent=11 // pred_check_branch
          %742 = sbr.rel (%p740) target = $region32
        $region31: #{decoder_forward.3} parent=11 // pred_region
          _
        $region32: #{decoder_forward.3} parent=11 // pred_fallthru
          _
        // Predicated region
        $region33: #{decoder_forward.3} parent=11 // pred_check
          %p743 = pneg %p246
        $region34: #{decoder_forward.3} parent=11 // pred_check_branch
          %745 = sbr.rel (%p743) target = $region36
        $region35: #{decoder_forward.3} parent=11 // pred_region
          _
        $region36: #{decoder_forward.3} parent=11 // pred_fallthru
          _
        // Predicated region
        $region37: #{decoder_forward.3} parent=11 // pred_check
          %p746 = pneg %p267
        $region38: #{decoder_forward.3} parent=11 // pred_check_branch
          %748 = sbr.rel (%p746) target = $region40
        $region39: #{decoder_forward.3} parent=11 // pred_region
          _
        $region40: #{decoder_forward.3} parent=11 // pred_fallthru
          _
        // Predicated region
        $region41: #{decoder_forward.3} parent=11 // pred_check
          %p749 = pneg %p288
        $region42: #{decoder_forward.3} parent=11 // pred_check_branch
          %751 = sbr.rel (%p749) target = $region44
        $region43: #{decoder_forward.3} parent=11 // pred_region
          _
        $region44: #{decoder_forward.3} parent=11 // pred_fallthru
          _
        // Predicated region
        $region45: #{decoder_forward.3} parent=11 // pred_check
          %p752 = pneg %p309
        $region46: #{decoder_forward.3} parent=11 // pred_check_branch
          %754 = sbr.rel (%p752) target = $region48
        $region47: #{decoder_forward.3} parent=11 // pred_region
          _
        $region48: #{decoder_forward.3} parent=11 // pred_fallthru
          _
        // Predicated region
        $region49: #{decoder_forward.3} parent=11 // pred_check
          %p755 = pneg %p330
        $region50: #{decoder_forward.3} parent=11 // pred_check_branch
          %757 = sbr.rel (%p755) target = $region52
        $region51: #{decoder_forward.3} parent=11 // pred_region
          _
        $region52: #{decoder_forward.3} parent=11 // pred_fallthru
          _
        // Predicated region
        $region53: #{decoder_forward.3} parent=11 // pred_check
          %p758 = pneg %p351
        $region54: #{decoder_forward.3} parent=11 // pred_check_branch
          %760 = sbr.rel (%p758) target = $region56
        $region55: #{decoder_forward.3} parent=11 // pred_region
          _
        $region56: #{decoder_forward.3} parent=11 // pred_fallthru
          _
        // Predicated region
        $region57: #{decoder_forward.3} parent=11 // pred_check
          %p761 = pneg %p372
        $region58: #{decoder_forward.3} parent=11 // pred_check_branch
          %763 = sbr.rel (%p761) target = $region60
        $region59: #{decoder_forward.3} parent=11 // pred_region
          _
        $region60: #{decoder_forward.3} parent=11 // pred_fallthru
          _
        // Predicated region
        $region61: #{decoder_forward.3} parent=11 // pred_check
          %p764 = pneg %p393
        $region62: #{decoder_forward.3} parent=11 // pred_check_branch
          %766 = sbr.rel (%p764) target = $region64
        $region63: #{decoder_forward.3} parent=11 // pred_region
          _
        $region64: #{decoder_forward.3} parent=11 // pred_fallthru
          _
        // Predicated region
        $region65: #{decoder_forward.3} parent=11 // pred_check
          %p767 = pneg %p414
        $region66: #{decoder_forward.3} parent=11 // pred_check_branch
          %769 = sbr.rel (%p767) target = $region68
        $region67: #{decoder_forward.3} parent=11 // pred_region
          _
        $region68: #{decoder_forward.3} parent=11 // pred_fallthru
          _
        // Predicated region
        $region69: #{decoder_forward.3} parent=11 // pred_check
          %p770 = pneg %p435
        $region70: #{decoder_forward.3} parent=11 // pred_check_branch
          %772 = sbr.rel (%p770) target = $region72
        $region71: #{decoder_forward.3} parent=11 // pred_region
          _
        $region72: #{decoder_forward.3} parent=11 // pred_fallthru
          _
        // Predicated region
        $region73: #{decoder_forward.3} parent=11 // pred_check
          %p773 = pneg %p456
        $region74: #{decoder_forward.3} parent=11 // pred_check_branch
          %775 = sbr.rel (%p773) target = $region76
        $region75: #{decoder_forward.3} parent=11 // pred_region
          _
        $region76: #{decoder_forward.3} parent=11 // pred_fallthru
          _
        // Predicated region
        $region77: #{decoder_forward.3} parent=11 // pred_check
          %p776 = pneg %p477
        $region78: #{decoder_forward.3} parent=11 // pred_check_branch
          %778 = sbr.rel (%p776) target = $region80
        $region79: #{decoder_forward.3} parent=11 // pred_region
          _
        $region80: #{decoder_forward.3} parent=11 // pred_fallthru
          _
        // Predicated region
        $region81: #{decoder_forward.3} parent=11 // pred_check
          %p779 = pneg %p498
        $region82: #{decoder_forward.3} parent=11 // pred_check_branch
          %781 = sbr.rel (%p779) target = $region84
        $region83: #{decoder_forward.3} parent=11 // pred_region
          _
        $region84: #{decoder_forward.3} parent=11 // pred_fallthru
          _
        // Predicated region
        $region85: #{decoder_forward.3} parent=11 // pred_check
          %p782 = pneg %p519
        $region86: #{decoder_forward.3} parent=11 // pred_check_branch
          %784 = sbr.rel (%p782) target = $region88
        $region87: #{decoder_forward.3} parent=11 // pred_region
          _
        $region88: #{decoder_forward.3} parent=11 // pred_fallthru
          _
        // Predicated region
        $region89: #{decoder_forward.3} parent=11 // pred_check
          %p785 = pneg %p540
        $region90: #{decoder_forward.3} parent=11 // pred_check_branch
          %787 = sbr.rel (%p785) target = $region92
        $region91: #{decoder_forward.3} parent=11 // pred_region
          _
        $region92: #{decoder_forward.3} parent=11 // pred_fallthru
          _
        // Predicated region
        $region93: #{decoder_forward.3} parent=11 // pred_check
          %p788 = pneg %p561
        $region94: #{decoder_forward.3} parent=11 // pred_check_branch
          %790 = sbr.rel (%p788) target = $region96
        $region95: #{decoder_forward.3} parent=11 // pred_region
          _
        $region96: #{decoder_forward.3} parent=11 // pred_fallthru
          _
        // Predicated region
        $region97: #{decoder_forward.3} parent=11 // pred_check
          %p791 = pneg %p582
        $region98: #{decoder_forward.3} parent=11 // pred_check_branch
          %793 = sbr.rel (%p791) target = $region100
        $region99: #{decoder_forward.3} parent=11 // pred_region
          _
        $region100: #{decoder_forward.3} parent=11 // pred_fallthru
          _
        // Predicated region
        $region101: #{decoder_forward.3} parent=11 // pred_check
          %p794 = pneg %p603
        $region102: #{decoder_forward.3} parent=11 // pred_check_branch
          %796 = sbr.rel (%p794) target = $region104
        $region103: #{decoder_forward.3} parent=11 // pred_region
          _
        $region104: #{decoder_forward.3} parent=11 // pred_fallthru
          _
        // Predicated region
        $region105: #{decoder_forward.3} parent=11 // pred_check
          %p797 = pneg %p624
        $region106: #{decoder_forward.3} parent=11 // pred_check_branch
          %799 = sbr.rel (%p797) target = $region108
        $region107: #{decoder_forward.3} parent=11 // pred_region
          _
        $region108: #{decoder_forward.3} parent=11 // pred_fallthru
          _
        // Predicated region
        $region109: #{decoder_forward.3} parent=11 // pred_check
          %p800 = pneg %p645
        $region110: #{decoder_forward.3} parent=11 // pred_check_branch
          %802 = sbr.rel (%p800) target = $region112
        $region111: #{decoder_forward.3} parent=11 // pred_region
          _
        $region112: #{decoder_forward.3} parent=11 // pred_fallthru
          _
        // Predicated region
        $region113: #{decoder_forward.3} parent=11 // pred_check
          %p803 = pneg %p666
        $region114: #{decoder_forward.3} parent=11 // pred_check_branch
          %805 = sbr.rel (%p803) target = $region116
        $region115: #{decoder_forward.3} parent=11 // pred_region
          _
        $region116: #{decoder_forward.3} parent=11 // pred_fallthru
          _
        // Predicated region
        $region117: #{decoder_forward.3} parent=11 // pred_check
          %p806 = pneg %p687
        $region118: #{decoder_forward.3} parent=11 // pred_check_branch
          %808 = sbr.rel (%p806) target = $region120
        $region119: #{decoder_forward.3} parent=11 // pred_region
          _
        $region120: #{decoder_forward.3} parent=11 // pred_fallthru
          _
      $region12: #{decoder_forward.3} parent=5 // pred_fallthru
        _
      %p809 = scmp.lt.s32.totalorder %s68, 2
      // Predicated region
      $region121: #{decoder_forward.3} parent=5 // pred_check
        %p810 = pneg %p809
      $region122: #{decoder_forward.3} parent=5 // pred_check_branch
        %812 = sbr.rel (%p810) target = $region124
      $region123: #{decoder_forward.3} parent=5 // pred_region
        // Predicated region
        $region125: #{decoder_forward.3} parent=123 // pred_check
          %p813 = pneg %p88
        $region126: #{decoder_forward.3} parent=123 // pred_check_branch
          %815 = sbr.rel (%p813) target = $region128
        $region127: #{decoder_forward.3} parent=123 // pred_region
          %p816 = scmp.lt.s32.totalorder %s68, 1
          %s817 = scalar_select %p816, %s68, 1
          %s818 = smul.addr %s817, 8
          %s819 = scalar_lea.vmem %s1, %s818
        $region128: #{decoder_forward.3} parent=123 // pred_fallthru
          _
        // Predicated region
        $region129: #{decoder_forward.3} parent=123 // pred_check
          %p820 = pneg %p114
        $region130: #{decoder_forward.3} parent=123 // pred_check_branch
          %822 = sbr.rel (%p820) target = $region132
        $region131: #{decoder_forward.3} parent=123 // pred_region
          %p823 = scmp.lt.s32.totalorder %s68, 1
          %s824 = scalar_select %p823, %s68, 1
          %s825 = smul.addr %s824, 8
          %s826 = scalar_lea.vmem %s3, %s825
        $region132: #{decoder_forward.3} parent=123 // pred_fallthru
          _
      $region124: #{decoder_forward.3} parent=5 // pred_fallthru
        _
      %p827 = scmp.le.s32.totalorder 1, %s68
      %p828 = scmp.lt.s32.totalorder %s68, 3
      %p829 = pnand %p827, %p828
      %p830 = pneg %p829
      // Predicated region
      $region133: #{decoder_forward.3} parent=5 // pred_check
        _
      $region134: #{decoder_forward.3} parent=5 // pred_check_branch
        %832 = sbr.rel (%p829) target = $region136
      $region135: #{decoder_forward.3} parent=5 // pred_region
        %s833 = ssub.s32 %s68, 1
        %p834 = scmp.lt.s32.totalorder %s73, 1
        %s835 = scalar_select %p834, %s73, 1
        %s836 = smul.addr %s835, 8
        %s837 = scalar_lea.vmem %s1, %s836
        %p838 = pneg %p94
        %p839 = pneg %p91
        %p840 = scmp.lt.s32.totalorder %s73, 1
        %s841 = scalar_select %p840, %s73, 1
        %s842 = smul.addr %s841, 8
        %s843 = scalar_lea.vmem %s3, %s842
        %p844 = pneg %p120
        %p845 = pneg %p117
        %p846 = pneg %p141
        %p847 = pneg %p138
        %p848 = pneg %p162
        %p849 = pneg %p159
        %p850 = pneg %p183
        %p851 = pneg %p180
        %p852 = pneg %p204
        %p853 = pneg %p201
        %p854 = pneg %p225
        %p855 = pneg %p222
        %p856 = pneg %p246
        %p857 = pneg %p243
        %p858 = pneg %p267
        %p859 = pneg %p264
        %p860 = pneg %p288
        %p861 = pneg %p285
        %p862 = pneg %p309
        %p863 = pneg %p306
        %p864 = pneg %p330
        %p865 = pneg %p327
        %p866 = pneg %p351
        %p867 = pneg %p348
        %p868 = pneg %p372
        %p869 = pneg %p369
        %p870 = pneg %p393
        %p871 = pneg %p390
        %p872 = pneg %p414
        %p873 = pneg %p411
        %p874 = pneg %p435
        %p875 = pneg %p432
        %p876 = pneg %p456
        %p877 = pneg %p453
        %p878 = pneg %p477
        %p879 = pneg %p474
        %p880 = pneg %p498
        %p881 = pneg %p495
        %p882 = pneg %p519
        %p883 = pneg %p516
        %p884 = pneg %p540
        %p885 = pneg %p537
        %p886 = pneg %p561
        %p887 = pneg %p558
        %p888 = pneg %p582
        %p889 = pneg %p579
        %p890 = pneg %p603
        %p891 = pneg %p600
        %p892 = pneg %p624
        %p893 = pneg %p621
        %p894 = pneg %p645
        %p895 = pneg %p642
        %p896 = pneg %p666
        %p897 = pneg %p663
        %p898 = pneg %p687
        %p899 = pneg %p684
        %p900 = pneg %p713
        %p901 = pneg %p710
        %s902 = sand.u32 %s700, 1
        %s903 = scalar_lea.sflag [#allocation4], %s902
        %s904 = sand.u32 %s700, 1
        %s905 = smul.addr %s904, 8
        %s906 = scalar_lea.vmem [#allocation3], %s905
        %p907 = scmp.lt.s32.totalorder %s73, 1
        %s908 = scalar_select %p907, %s73, 1
        %s909 = smul.addr %s908, 8
        %s910 = scalar_lea.vmem %s1, %s909
        %p911 = scmp.lt.s32.totalorder %s73, 1
        %s912 = scalar_select %p911, %s73, 1
        %s913 = smul.addr %s912, 8
        %s914 = scalar_lea.vmem %s3, %s913
        %v916 = vld [vmem:[%s914] sm:$0xff]
        %v917 = vld [vmem:[%s910] sm:$0xff]
        %v918 = vld [vmem:[%s5] sm:$0xff]
        %v919 = vld [vmem:[%s7] sm:$0xf]
        %v920 = vld [vmem:[%s7 + $0x4] sm:$0xf]
        %v921 = vld [vmem:[%s7 + $0x8] sm:$0xf]
        %v922 = vld [vmem:[%s7 + $0xc] sm:$0xf]
        %v923 = vld [vmem:[%s9] sm:$0x1]
        %v924 = vld [vmem:[%s11] sm:$0xf]
        %v925 = vld [vmem:[%s11 + $0x4] sm:$0xf]
        %v926 = vld [vmem:[%s11 + $0x8] sm:$0xf]
        %v927 = vld [vmem:[%s11 + $0xc] sm:$0xf]
        %v928 = vld [vmem:[%s13] sm:$0x1]
        %v929 = vld [vmem:[%s15] sm:$0xf]
        %v930 = vld [vmem:[%s15 + $0x4] sm:$0xf]
        %v931 = vld [vmem:[%s15 + $0x8] sm:$0xf]
        %v932 = vld [vmem:[%s15 + $0xc] sm:$0xf]
        %v933 = vld [vmem:[%s17] sm:$0x1]
        %v934 = vld [vmem:[%s19] sm:$0xf]
        %v935 = vld [vmem:[%s19 + $0x4] sm:$0xf]
        %v936 = vld [vmem:[%s19 + $0x8] sm:$0xf]
        %v937 = vld [vmem:[%s19 + $0xc] sm:$0xf]
        %v938 = vld [vmem:[%s21] sm:$0x1]
        %v939 = vld [vmem:[%s23] sm:$0x1]
        %v940 = vld [vmem:[%s25] sm:$0x1]
        %v941 = vpack.c.bf16 %v916, %v916
        %v943 = vperm.slane %v923, 0
        %v949 = vunpack.c.l.b16 %v919
        %v950 = vunpack.c.l.b16 %v920
        %v951 = vunpack.c.l.b16 %v921
        %v952 = vunpack.c.l.b16 %v922
        %v953 = vpack.c.b16 %v950, %v949
        %v954 = vpack.c.b16 %v952, %v951
        %vm957 = vcmask 261120
        %v959 = vsel %vm957, %v941, 0
        %961 = vmatpush.bf16.msra.mxu0 0
        %962 = vmatpush.bf16.msra.mxu0 0
        %963 = vmatpush.bf16.msra.mxu0 0
        %964 = vmatpush.bf16.msra.mxu0 0
        %965 = vmatpush.bf16.msra.mxu0 0
        %966 = vmatpush.bf16.msra.mxu0 0
        %967 = vmatpush.bf16.msra.mxu0 %v954
        %968 = vmatpush.bf16.msra.mxu0 %v953
        %969 = vmatmul.bf16.gmra.mxu0 %v959
        %v970 = vpop.f32.mrf.mxu0
        %v971 = vadd.f32 %v943, %v970
        %v972 = vpop.f32.mrf.mxu0
        %973 = vdwg.mxu0
        %v975 = vperm.slane %v928, 0
        %v981 = vunpack.c.l.b16 %v924
        %v982 = vunpack.c.l.b16 %v925
        %v983 = vunpack.c.l.b16 %v926
        %v984 = vunpack.c.l.b16 %v927
        %v985 = vpack.c.b16 %v982, %v981
        %v986 = vpack.c.b16 %v984, %v983
        %989 = vmatpush.bf16.msra.mxu0 0
        %990 = vmatpush.bf16.msra.mxu0 0
        %991 = vmatpush.bf16.msra.mxu0 0
        %992 = vmatpush.bf16.msra.mxu0 0
        %993 = vmatpush.bf16.msra.mxu0 0
        %994 = vmatpush.bf16.msra.mxu0 0
        %995 = vmatpush.bf16.msra.mxu0 %v986
        %996 = vmatpush.bf16.msra.mxu0 %v985
        %997 = vmatmul.bf16.gmra.mxu0 %v959
        %v998 = vpop.f32.mrf.mxu0
        %v999 = vadd.f32 %v975, %v998
        %v1000 = vpop.f32.mrf.mxu0
        %1001 = vdwg.mxu0
        %v1003 = vperm.slane %v933, 0
        %v1009 = vunpack.c.l.b16 %v929
        %v1010 = vunpack.c.l.b16 %v930
        %v1011 = vunpack.c.l.b16 %v931
        %v1012 = vunpack.c.l.b16 %v932
        %v1013 = vpack.c.b16 %v1010, %v1009
        %v1014 = vpack.c.b16 %v1012, %v1011
        %1017 = vmatpush.bf16.msra.mxu0 0
        %1018 = vmatpush.bf16.msra.mxu0 0
        %1019 = vmatpush.bf16.msra.mxu0 0
        %1020 = vmatpush.bf16.msra.mxu0 0
        %1021 = vmatpush.bf16.msra.mxu0 0
        %1022 = vmatpush.bf16.msra.mxu0 0
        %1023 = vmatpush.bf16.msra.mxu0 %v1014
        %1024 = vmatpush.bf16.msra.mxu0 %v1013
        %1025 = vmatmul.bf16.gmra.mxu0 %v959
        %v1026 = vpop.f32.mrf.mxu0
        %v1027 = vadd.f32 %v1003, %v1026
        %v1028 = vpop.f32.mrf.mxu0
        %1029 = vdwg.mxu0
        %1031 = vrot.lane.b32.xlu0 %v971, 120
        %v1032 = vpop.permute.xlu0 %1031
        %1034 = vrot.lane.b32.xlu0 %v971, 112
        %v1035 = vpop.permute.xlu0 %1034
        %1037 = vrot.lane.b32.xlu0 %v971, 104
        %v1038 = vpop.permute.xlu0 %1037
        %v1040 = vpack.c.bf16 %v971, %v971
        %v1041 = vpack.c.bf16 %v1032, %v1032
        %v1042 = vpack.c.bf16 %v1035, %v1035
        %v1043 = vpack.c.bf16 %v1038, %v1038
        %1045 = vrot.lane.b32.xlu0 %v999, 120
        %v1046 = vpop.permute.xlu0 %1045
        %1048 = vrot.lane.b32.xlu0 %v999, 112
        %v1049 = vpop.permute.xlu0 %1048
        %1051 = vrot.lane.b32.xlu0 %v999, 104
        %v1052 = vpop.permute.xlu0 %1051
        %v1054 = vpack.c.bf16 %v999, %v999
        %v1055 = vpack.c.bf16 %v1046, %v1046
        %v1056 = vpack.c.bf16 %v1049, %v1049
        %v1057 = vpack.c.bf16 %v1052, %v1052
        %1059 = vrot.lane.b32.xlu0 %v1027, 120
        %v1060 = vpop.permute.xlu0 %1059
        %1062 = vrot.lane.b32.xlu0 %v1027, 112
        %v1063 = vpop.permute.xlu0 %1062
        %1065 = vrot.lane.b32.xlu0 %v1027, 104
        %v1066 = vpop.permute.xlu0 %1065
        %v1068 = vpack.c.bf16 %v1027, %v1027
        %v1069 = vpack.c.bf16 %v1060, %v1060
        %v1070 = vpack.c.bf16 %v1063, %v1063
        %v1071 = vpack.c.bf16 %v1066, %v1066
        %vm1072 = vcmask 64512
        %v1074 = vsel %vm1072, %v1040, 0
        %v1077 = vsel %vm1072, %v1054, 0
        %1079 = vmatpush.bf16.xpose.msra.mxu0 0
        %1080 = vmatpush.bf16.xpose.msra.mxu0 0
        %1081 = vmatpush.bf16.xpose.msra.mxu0 0
        %1082 = vmatpush.bf16.xpose.msra.mxu0 0
        %1083 = vmatpush.bf16.xpose.msra.mxu0 0
        %1084 = vmatpush.bf16.xpose.msra.mxu0 0
        %1085 = vmatpush.bf16.xpose.msra.mxu0 0
        %1086 = vmatpush.bf16.xpose.msra.mxu0 %v1077
        %1087 = vmatmul.bf16.gmra.mxu0 %v1074
        %v1088 = vpop.f32.mrf.mxu0
        %v1089 = vadd.f32 0.0, %v1088
        %v1090 = vpop.f32.mrf.mxu0
        %1091 = vdwg.mxu0
        %v1093 = vsel %vm1072, %v1041, 0
        %v1096 = vsel %vm1072, %v1055, 0
        %1098 = vmatpush.bf16.xpose.msra.mxu0 0
        %1099 = vmatpush.bf16.xpose.msra.mxu0 0
        %1100 = vmatpush.bf16.xpose.msra.mxu0 0
        %1101 = vmatpush.bf16.xpose.msra.mxu0 0
        %1102 = vmatpush.bf16.xpose.msra.mxu0 0
        %1103 = vmatpush.bf16.xpose.msra.mxu0 0
        %1104 = vmatpush.bf16.xpose.msra.mxu0 0
        %1105 = vmatpush.bf16.xpose.msra.mxu0 %v1096
        %1106 = vmatmul.bf16.gmra.mxu0 %v1093
        %v1107 = vpop.f32.mrf.mxu0
        %v1108 = vadd.f32 0.0, %v1107
        %v1109 = vpop.f32.mrf.mxu0
        %1110 = vdwg.mxu0
        %v1112 = vsel %vm1072, %v1042, 0
        %v1115 = vsel %vm1072, %v1056, 0
        %1117 = vmatpush.bf16.xpose.msra.mxu0 0
        %1118 = vmatpush.bf16.xpose.msra.mxu0 0
        %1119 = vmatpush.bf16.xpose.msra.mxu0 0
        %1120 = vmatpush.bf16.xpose.msra.mxu0 0
        %1121 = vmatpush.bf16.xpose.msra.mxu0 0
        %1122 = vmatpush.bf16.xpose.msra.mxu0 0
        %1123 = vmatpush.bf16.xpose.msra.mxu0 0
        %1124 = vmatpush.bf16.xpose.msra.mxu0 %v1115
        %1125 = vmatmul.bf16.gmra.mxu0 %v1112
        %v1126 = vpop.f32.mrf.mxu0
        %v1127 = vadd.f32 0.0, %v1126
        %v1128 = vpop.f32.mrf.mxu0
        %1129 = vdwg.mxu0
        %v1131 = vsel %vm1072, %v1043, 0
        %v1134 = vsel %vm1072, %v1057, 0
        %1136 = vmatpush.bf16.xpose.msra.mxu0 0
        %1137 = vmatpush.bf16.xpose.msra.mxu0 0
        %1138 = vmatpush.bf16.xpose.msra.mxu0 0
        %1139 = vmatpush.bf16.xpose.msra.mxu0 0
        %1140 = vmatpush.bf16.xpose.msra.mxu0 0
        %1141 = vmatpush.bf16.xpose.msra.mxu0 0
        %1142 = vmatpush.bf16.xpose.msra.mxu0 0
        %1143 = vmatpush.bf16.xpose.msra.mxu0 %v1134
        %1144 = vmatmul.bf16.gmra.mxu0 %v1131
        %v1145 = vpop.f32.mrf.mxu0
        %v1146 = vadd.f32 0.0, %v1145
        %v1147 = vpop.f32.mrf.mxu0
        %1148 = vdwg.mxu0
        %v1149 = vmul.f32 %v1089, 0.35355338
        %v1150 = vmul.f32 %v1108, 0.35355338
        %v1151 = vmul.f32 %v1127, 0.35355338
        %v1152 = vmul.f32 %v1146, 0.35355338
        %v1153 = vadd.f32 %v1149, %v918
        %v1154 = vadd.f32 %v1150, %v918
        %v1155 = vadd.f32 %v1151, %v918
        %v1156 = vadd.f32 %v1152, %v918
        %v1157 = vsel %vm1072, %v1153, -inf
        %1158 = vmax.xlane.f32.xlu0 %v1157
        %v1159 = vpop.xlane.xlu0 %1158
        %v1160 = vsel %vm1072, %v1154, -inf
        %1161 = vmax.xlane.f32.xlu0 %v1160
        %v1162 = vpop.xlane.xlu0 %1161
        %v1163 = vsel %vm1072, %v1155, -inf
        %1164 = vmax.xlane.f32.xlu0 %v1163
        %v1165 = vpop.xlane.xlu0 %1164
        %v1166 = vsel %vm1072, %v1156, -inf
        %1167 = vmax.xlane.f32.xlu0 %v1166
        %v1168 = vpop.xlane.xlu0 %1167
        %v1169 = vsub.f32 %v1153, %v1159
        %v1170 = vsub.f32 %v1154, %v1162
        %v1171 = vsub.f32 %v1155, %v1165
        %v1172 = vsub.f32 %v1156, %v1168
        %v1173 = vmul.f32 %v1169, 1.442695
        %v1174 = vpow.pop %v1173
        %v1175 = vmul.f32 %v1170, 1.442695
        %v1176 = vpow.pop %v1175
        %v1177 = vmul.f32 %v1171, 1.442695
        %v1178 = vpow.pop %v1177
        %v1179 = vmul.f32 %v1172, 1.442695
        %v1180 = vpow.pop %v1179
        %v1181 = vsel %vm1072, %v1174, 0.0
        %1182 = vadd.xlane.f32.xlu0 %v1181
        %v1183 = vpop.xlane.xlu0 %1182
        %v1184 = vsel %vm1072, %v1176, 0.0
        %1185 = vadd.xlane.f32.xlu0 %v1184
        %v1186 = vpop.xlane.xlu0 %1185
        %v1187 = vsel %vm1072, %v1178, 0.0
        %1188 = vadd.xlane.f32.xlu0 %v1187
        %v1189 = vpop.xlane.xlu0 %1188
        %v1190 = vsel %vm1072, %v1180, 0.0
        %1191 = vadd.xlane.f32.xlu0 %v1190
        %v1192 = vpop.xlane.xlu0 %1191
        %v1193 = vrcp.pop %v1183
        %v1194 = vrcp.pop %v1186
        %v1195 = vrcp.pop %v1189
        %v1196 = vrcp.pop %v1192
        %v1197 = vmul.f32 %v1174, %v1193
        %v1198 = vmul.f32 %v1176, %v1194
        %v1199 = vmul.f32 %v1178, %v1195
        %v1200 = vmul.f32 %v1180, %v1196
        %v1201 = vpack.c.bf16 %v1197, %v1197
        %v1202 = vpack.c.bf16 %v1198, %v1198
        %v1203 = vpack.c.bf16 %v1199, %v1199
        %v1204 = vpack.c.bf16 %v1200, %v1200
        %v1206 = vsel %vm1072, %v1201, 0
        %vm1208 = vcmask 1043456
        %v1210 = vsel %vm1208, %v1068, 0
        %1212 = vmatpush.bf16.msra.mxu0 0
        %1213 = vmatpush.bf16.msra.mxu0 0
        %1214 = vmatpush.bf16.msra.mxu0 0
        %1215 = vmatpush.bf16.msra.mxu0 0
        %1216 = vmatpush.bf16.msra.mxu0 0
        %1217 = vmatpush.bf16.msra.mxu0 0
        %1218 = vmatpush.bf16.msra.mxu0 0
        %1219 = vmatpush.bf16.msra.mxu0 %v1210
        %1220 = vmatmul.bf16.gmra.mxu0 %v1206
        %v1221 = vpop.f32.mrf.mxu0
        %v1222 = vadd.f32 0.0, %v1221
        %v1223 = vpop.f32.mrf.mxu0
        %1224 = vdwg.mxu0
        %v1226 = vsel %vm1072, %v1202, 0
        %v1229 = vsel %vm1208, %v1069, 0
        %1231 = vmatpush.bf16.msra.mxu0 0
        %1232 = vmatpush.bf16.msra.mxu0 0
        %1233 = vmatpush.bf16.msra.mxu0 0
        %1234 = vmatpush.bf16.msra.mxu0 0
        %1235 = vmatpush.bf16.msra.mxu0 0
        %1236 = vmatpush.bf16.msra.mxu0 0
        %1237 = vmatpush.bf16.msra.mxu0 0
        %1238 = vmatpush.bf16.msra.mxu0 %v1229
        %1239 = vmatmul.bf16.gmra.mxu0 %v1226
        %v1240 = vpop.f32.mrf.mxu0
        %v1241 = vadd.f32 0.0, %v1240
        %v1242 = vpop.f32.mrf.mxu0
        %1243 = vdwg.mxu0
        %v1245 = vsel %vm1072, %v1203, 0
        %v1248 = vsel %vm1208, %v1070, 0
        %1250 = vmatpush.bf16.msra.mxu0 0
        %1251 = vmatpush.bf16.msra.mxu0 0
        %1252 = vmatpush.bf16.msra.mxu0 0
        %1253 = vmatpush.bf16.msra.mxu0 0
        %1254 = vmatpush.bf16.msra.mxu0 0
        %1255 = vmatpush.bf16.msra.mxu0 0
        %1256 = vmatpush.bf16.msra.mxu0 0
        %1257 = vmatpush.bf16.msra.mxu0 %v1248
        %1258 = vmatmul.bf16.gmra.mxu0 %v1245
        %v1259 = vpop.f32.mrf.mxu0
        %v1260 = vadd.f32 0.0, %v1259
        %v1261 = vpop.f32.mrf.mxu0
        %1262 = vdwg.mxu0
        %v1264 = vsel %vm1072, %v1204, 0
        %v1267 = vsel %vm1208, %v1071, 0
        %1269 = vmatpush.bf16.msra.mxu0 0
        %1270 = vmatpush.bf16.msra.mxu0 0
        %1271 = vmatpush.bf16.msra.mxu0 0
        %1272 = vmatpush.bf16.msra.mxu0 0
        %1273 = vmatpush.bf16.msra.mxu0 0
        %1274 = vmatpush.bf16.msra.mxu0 0
        %1275 = vmatpush.bf16.msra.mxu0 0
        %1276 = vmatpush.bf16.msra.mxu0 %v1267
        %1277 = vmatmul.bf16.gmra.mxu0 %v1264
        %v1278 = vpop.f32.mrf.mxu0
        %v1279 = vadd.f32 0.0, %v1278
        %v1280 = vpop.f32.mrf.mxu0
        %1281 = vdwg.mxu0
        %1282 = vst.msk [vmem:[#allocation2] sm:$0xff] %vm1072, %v1222
        %1283 = vst.msk [vmem:[#allocation2 + $0x8] sm:$0xff] %vm1072, %v1241
        %1284 = vst.msk [vmem:[#allocation2 + $0x10] sm:$0xff] %vm1072, %v1260
        %1285 = vst.msk [vmem:[#allocation2 + $0x18] sm:$0xff] %vm1072, %v1279
        %v1286 = vld [vmem:[#allocation2] ss:$4 sm:$0xff]
        %s1287 = scalar_lea.vmem [#allocation2], 1
        %v1288 = vld [vmem:[%s1287] ss:$4 sm:$0xff]
        %s1289 = scalar_lea.vmem [#allocation2], 2
        %v1290 = vld [vmem:[%s1289] ss:$4 sm:$0xff]
        %s1291 = scalar_lea.vmem [#allocation2], 3
        %v1292 = vld [vmem:[%s1291] ss:$4 sm:$0xff]
        %1294 = vrot.lane.b32.xlu0 %v1288, 8
        %v1295 = vpop.permute.xlu0 %1294
        %1298 = vrot.lane.b32.xlu0 %v1290, 16
        %v1299 = vpop.permute.xlu0 %1298
        %1302 = vrot.lane.b32.xlu0 %v1292, 24
        %v1303 = vpop.permute.xlu0 %1302
        %v1305 = vsel %vm1072, %v1286, %v1295
        %vm1306 = vcmask 130048
        %v1307 = vsel %vm1306, %v1305, %v1299
        %vm1308 = vcmask 195584
        %v1309 = vsel %vm1308, %v1307, %v1303
        %v1310 = vpack.c.bf16 %v1309, %v1309
        %v1312 = vperm.slane %v938, 0
        %v1318 = vunpack.c.l.b16 %v934
        %v1319 = vunpack.c.l.b16 %v935
        %v1320 = vunpack.c.l.b16 %v936
        %v1321 = vunpack.c.l.b16 %v937
        %v1322 = vpack.c.b16 %v1319, %v1318
        %v1323 = vpack.c.b16 %v1321, %v1320
        %v1327 = vsel %vm957, %v1310, 0
        %1329 = vmatpush.bf16.msra.mxu0 0
        %1330 = vmatpush.bf16.msra.mxu0 0
        %1331 = vmatpush.bf16.msra.mxu0 0
        %1332 = vmatpush.bf16.msra.mxu0 0
        %1333 = vmatpush.bf16.msra.mxu0 0
        %1334 = vmatpush.bf16.msra.mxu0 0
        %1335 = vmatpush.bf16.msra.mxu0 %v1323
        %1336 = vmatpush.bf16.msra.mxu0 %v1322
        %1337 = vmatmul.bf16.gmra.mxu0 %v1327
        %v1338 = vpop.f32.mrf.mxu0
        %v1339 = vadd.f32 %v1312, %v1338
        %v1340 = vpop.f32.mrf.mxu0
        %1341 = vdwg.mxu0
        %v1342 = vadd.f32 %v1339, %v916
        %v1343 = vsel %vm957, %v1342, 0.0
        %1344 = vadd.xlane.f32.xlu0 %v1343
        %v1345 = vpop.xlane.xlu0 %1344
        %v1346 = vrcp.pop 32.0
        %v1347 = vmul.f32 32.0, %v1346
        %v1348 = vsub.f32 1.0, %v1347
        %v1349 = vmul.f32 %v1346, %v1348
        %v1350 = vadd.f32 %v1346, %v1349
        %vm1351 = vweird.f32 %v1346
        %v1352 = vsel %vm1351, %v1346, %v1350
        %v1353 = vmul.f32 %v1345, %v1352
        %v1354 = vsub.f32 %v1342, %v1353
        %v1355 = vmul.f32 %v1354, %v1354
        %v1356 = vsel %vm957, %v1355, 0.0
        %1357 = vadd.xlane.f32.xlu0 %v1356
        %v1358 = vpop.xlane.xlu0 %1357
        %v1359 = vmul.f32 %v1358, %v1352
        %v1360 = vadd.f32 %v1359, 1e-05
        %v1361 = vrsqrt.pop %v1360
        %v1362 = vmul.f32 %v1361, %v1360
        %v1363 = vmul.f32 %v1362, %v1361
        %v1364 = vmul.f32 0.5, %v1363
        %v1365 = vsub.f32 1.5, %v1364
        %v1366 = vmul.f32 %v1361, %v1365
        %vm1367 = vweird.f32 %v1360
        %vm1368 = vweird.f32 %v1361
        %vm1369 = vmor %vm1367, %vm1368
        %v1370 = vsel %vm1369, %v1361, %v1366
        %v1371 = vmul.f32 %v1354, %v1370
        %v1373 = vperm.slane %v939, 0
        %v1375 = vmul.f32 %v1373, %v1371
        %v1377 = vperm.slane %v940, 0
        %v1379 = vadd.f32 %v1375, %v1377
        %v1380 = vld [vmem:[%s27] sm:$0xf]
        %v1381 = vld [vmem:[%s27 + $0x4] sm:$0xf]
        %v1382 = vld [vmem:[%s27 + $0x8] sm:$0xf]
        %v1383 = vld [vmem:[%s27 + $0xc] sm:$0xf]
        %v1384 = vld [vmem:[%s29] sm:$0x1]
        %v1385 = vld [vmem:[%s31] sm:$0xf]
        %v1386 = vld [vmem:[%s31 + $0x4] sm:$0xf]
        %v1387 = vld [vmem:[%s31 + $0x8] sm:$0xf]
        %v1388 = vld [vmem:[%s31 + $0xc] sm:$0xf]
        %v1389 = vld [vmem:[%s33] sm:$0x1]
        %v1390 = vld [vmem:[%s35] sm:$0xf]
        %v1391 = vld [vmem:[%s35 + $0x4] sm:$0xf]
        %v1392 = vld [vmem:[%s35 + $0x8] sm:$0xf]
        %v1393 = vld [vmem:[%s35 + $0xc] sm:$0xf]
        %v1394 = vld [vmem:[%s37] sm:$0x1]
        %v1395 = vld [vmem:[%s39] sm:$0xf]
        %v1396 = vld [vmem:[%s39 + $0x4] sm:$0xf]
        %v1397 = vld [vmem:[%s39 + $0x8] sm:$0xf]
        %v1398 = vld [vmem:[%s39 + $0xc] sm:$0xf]
        %v1399 = vld [vmem:[%s41] sm:$0x1]
        %v1400 = vld [vmem:[%s43] sm:$0x1]
        %v1401 = vld [vmem:[%s45] sm:$0x1]
        %v1402 = vpack.c.bf16 %v1379, %v1379
        %v1403 = vpack.c.bf16 %v917, %v917
        %v1405 = vperm.slane %v1384, 0
        %v1411 = vunpack.c.l.b16 %v1380
        %v1412 = vunpack.c.l.b16 %v1381
        %v1413 = vunpack.c.l.b16 %v1382
        %v1414 = vunpack.c.l.b16 %v1383
        %v1415 = vpack.c.b16 %v1412, %v1411
        %v1416 = vpack.c.b16 %v1414, %v1413
        %v1420 = vsel %vm957, %v1403, 0
        %1422 = vmatpush.bf16.msra.mxu0 0
        %1423 = vmatpush.bf16.msra.mxu0 0
        %1424 = vmatpush.bf16.msra.mxu0 0
        %1425 = vmatpush.bf16.msra.mxu0 0
        %1426 = vmatpush.bf16.msra.mxu0 0
        %1427 = vmatpush.bf16.msra.mxu0 0
        %1428 = vmatpush.bf16.msra.mxu0 %v1416
        %1429 = vmatpush.bf16.msra.mxu0 %v1415
        %1430 = vmatmul.bf16.gmra.mxu0 %v1420
        %v1431 = vpop.f32.mrf.mxu0
        %v1432 = vadd.f32 %v1405, %v1431
        %v1433 = vpop.f32.mrf.mxu0
        %1434 = vdwg.mxu0
        %v1436 = vperm.slane %v1389, 0
        %v1442 = vunpack.c.l.b16 %v1385
        %v1443 = vunpack.c.l.b16 %v1386
        %v1444 = vunpack.c.l.b16 %v1387
        %v1445 = vunpack.c.l.b16 %v1388
        %v1446 = vpack.c.b16 %v1443, %v1442
        %v1447 = vpack.c.b16 %v1445, %v1444
        %v1451 = vsel %vm957, %v1402, 0
        %1453 = vmatpush.bf16.msra.mxu0 0
        %1454 = vmatpush.bf16.msra.mxu0 0
        %1455 = vmatpush.bf16.msra.mxu0 0
        %1456 = vmatpush.bf16.msra.mxu0 0
        %1457 = vmatpush.bf16.msra.mxu0 0
        %1458 = vmatpush.bf16.msra.mxu0 0
        %1459 = vmatpush.bf16.msra.mxu0 %v1447
        %1460 = vmatpush.bf16.msra.mxu0 %v1446
        %1461 = vmatmul.bf16.gmra.mxu0 %v1451
        %v1462 = vpop.f32.mrf.mxu0
        %v1463 = vadd.f32 %v1436, %v1462
        %v1464 = vpop.f32.mrf.mxu0
        %1465 = vdwg.mxu0
        %v1467 = vperm.slane %v1394, 0
        %v1473 = vunpack.c.l.b16 %v1390
        %v1474 = vunpack.c.l.b16 %v1391
        %v1475 = vunpack.c.l.b16 %v1392
        %v1476 = vunpack.c.l.b16 %v1393
        %v1477 = vpack.c.b16 %v1474, %v1473
        %v1478 = vpack.c.b16 %v1476, %v1475
        %1481 = vmatpush.bf16.msra.mxu0 0
        %1482 = vmatpush.bf16.msra.mxu0 0
        %1483 = vmatpush.bf16.msra.mxu0 0
        %1484 = vmatpush.bf16.msra.mxu0 0
        %1485 = vmatpush.bf16.msra.mxu0 0
        %1486 = vmatpush.bf16.msra.mxu0 0
        %1487 = vmatpush.bf16.msra.mxu0 %v1478
        %1488 = vmatpush.bf16.msra.mxu0 %v1477
        %1489 = vmatmul.bf16.gmra.mxu0 %v1451
        %v1490 = vpop.f32.mrf.mxu0
        %v1491 = vadd.f32 %v1467, %v1490
        %v1492 = vpop.f32.mrf.mxu0
        %1493 = vdwg.mxu0
        %1495 = vrot.lane.b32.xlu0 %v1432, 120
        %v1496 = vpop.permute.xlu0 %1495
        %1498 = vrot.lane.b32.xlu0 %v1432, 112
        %v1499 = vpop.permute.xlu0 %1498
        %1501 = vrot.lane.b32.xlu0 %v1432, 104
        %v1502 = vpop.permute.xlu0 %1501
        %v1504 = vpack.c.bf16 %v1432, %v1432
        %v1505 = vpack.c.bf16 %v1496, %v1496
        %v1506 = vpack.c.bf16 %v1499, %v1499
        %v1507 = vpack.c.bf16 %v1502, %v1502
        %1509 = vrot.lane.b32.xlu0 %v1463, 120
        %v1510 = vpop.permute.xlu0 %1509
        %1512 = vrot.lane.b32.xlu0 %v1463, 112
        %v1513 = vpop.permute.xlu0 %1512
        %1515 = vrot.lane.b32.xlu0 %v1463, 104
        %v1516 = vpop.permute.xlu0 %1515
        %v1518 = vpack.c.bf16 %v1463, %v1463
        %v1519 = vpack.c.bf16 %v1510, %v1510
        %v1520 = vpack.c.bf16 %v1513, %v1513
        %v1521 = vpack.c.bf16 %v1516, %v1516
        %1523 = vrot.lane.b32.xlu0 %v1491, 120
        %v1524 = vpop.permute.xlu0 %1523
        %1526 = vrot.lane.b32.xlu0 %v1491, 112
        %v1527 = vpop.permute.xlu0 %1526
        %1529 = vrot.lane.b32.xlu0 %v1491, 104
        %v1530 = vpop.permute.xlu0 %1529
        %v1532 = vpack.c.bf16 %v1491, %v1491
        %v1533 = vpack.c.bf16 %v1524, %v1524
        %v1534 = vpack.c.bf16 %v1527, %v1527
        %v1535 = vpack.c.bf16 %v1530, %v1530
        %v1537 = vsel %vm1072, %v1504, 0
        %v1540 = vsel %vm1072, %v1518, 0
        %1542 = vmatpush.bf16.xpose.msra.mxu0 0
        %1543 = vmatpush.bf16.xpose.msra.mxu0 0
        %1544 = vmatpush.bf16.xpose.msra.mxu0 0
        %1545 = vmatpush.bf16.xpose.msra.mxu0 0
        %1546 = vmatpush.bf16.xpose.msra.mxu0 0
        %1547 = vmatpush.bf16.xpose.msra.mxu0 0
        %1548 = vmatpush.bf16.xpose.msra.mxu0 0
        %1549 = vmatpush.bf16.xpose.msra.mxu0 %v1540
        %1550 = vmatmul.bf16.gmra.mxu0 %v1537
        %v1551 = vpop.f32.mrf.mxu0
        %v1552 = vadd.f32 0.0, %v1551
        %v1553 = vpop.f32.mrf.mxu0
        %1554 = vdwg.mxu0
        %v1556 = vsel %vm1072, %v1505, 0
        %v1559 = vsel %vm1072, %v1519, 0
        %1561 = vmatpush.bf16.xpose.msra.mxu0 0
        %1562 = vmatpush.bf16.xpose.msra.mxu0 0
        %1563 = vmatpush.bf16.xpose.msra.mxu0 0
        %1564 = vmatpush.bf16.xpose.msra.mxu0 0
        %1565 = vmatpush.bf16.xpose.msra.mxu0 0
        %1566 = vmatpush.bf16.xpose.msra.mxu0 0
        %1567 = vmatpush.bf16.xpose.msra.mxu0 0
        %1568 = vmatpush.bf16.xpose.msra.mxu0 %v1559
        %1569 = vmatmul.bf16.gmra.mxu0 %v1556
        %v1570 = vpop.f32.mrf.mxu0
        %v1571 = vadd.f32 0.0, %v1570
        %v1572 = vpop.f32.mrf.mxu0
        %1573 = vdwg.mxu0
        %v1575 = vsel %vm1072, %v1506, 0
        %v1578 = vsel %vm1072, %v1520, 0
        %1580 = vmatpush.bf16.xpose.msra.mxu0 0
        %1581 = vmatpush.bf16.xpose.msra.mxu0 0
        %1582 = vmatpush.bf16.xpose.msra.mxu0 0
        %1583 = vmatpush.bf16.xpose.msra.mxu0 0
        %1584 = vmatpush.bf16.xpose.msra.mxu0 0
        %1585 = vmatpush.bf16.xpose.msra.mxu0 0
        %1586 = vmatpush.bf16.xpose.msra.mxu0 0
        %1587 = vmatpush.bf16.xpose.msra.mxu0 %v1578
        %1588 = vmatmul.bf16.gmra.mxu0 %v1575
        %v1589 = vpop.f32.mrf.mxu0
        %v1590 = vadd.f32 0.0, %v1589
        %v1591 = vpop.f32.mrf.mxu0
        %1592 = vdwg.mxu0
        %v1594 = vsel %vm1072, %v1507, 0
        %v1597 = vsel %vm1072, %v1521, 0
        %1599 = vmatpush.bf16.xpose.msra.mxu0 0
        %1600 = vmatpush.bf16.xpose.msra.mxu0 0
        %1601 = vmatpush.bf16.xpose.msra.mxu0 0
        %1602 = vmatpush.bf16.xpose.msra.mxu0 0
        %1603 = vmatpush.bf16.xpose.msra.mxu0 0
        %1604 = vmatpush.bf16.xpose.msra.mxu0 0
        %1605 = vmatpush.bf16.xpose.msra.mxu0 0
        %1606 = vmatpush.bf16.xpose.msra.mxu0 %v1597
        %1607 = vmatmul.bf16.gmra.mxu0 %v1594
        %v1608 = vpop.f32.mrf.mxu0
        %v1609 = vadd.f32 0.0, %v1608
        %v1610 = vpop.f32.mrf.mxu0
        %1611 = vdwg.mxu0
        %v1612 = vmul.f32 %v1552, 0.35355338
        %v1613 = vmul.f32 %v1571, 0.35355338
        %v1614 = vmul.f32 %v1590, 0.35355338
        %v1615 = vmul.f32 %v1609, 0.35355338
        %v1616 = vsel %vm1072, %v1612, -inf
        %1617 = vmax.xlane.f32.xlu0 %v1616
        %v1618 = vpop.xlane.xlu0 %1617
        %v1619 = vsel %vm1072, %v1613, -inf
        %1620 = vmax.xlane.f32.xlu0 %v1619
        %v1621 = vpop.xlane.xlu0 %1620
        %v1622 = vsel %vm1072, %v1614, -inf
        %1623 = vmax.xlane.f32.xlu0 %v1622
        %v1624 = vpop.xlane.xlu0 %1623
        %v1625 = vsel %vm1072, %v1615, -inf
        %1626 = vmax.xlane.f32.xlu0 %v1625
        %v1627 = vpop.xlane.xlu0 %1626
        %v1628 = vsub.f32 %v1612, %v1618
        %v1629 = vsub.f32 %v1613, %v1621
        %v1630 = vsub.f32 %v1614, %v1624
        %v1631 = vsub.f32 %v1615, %v1627
        %v1632 = vmul.f32 %v1628, 1.442695
        %v1633 = vpow.pop %v1632
        %v1634 = vmul.f32 %v1629, 1.442695
        %v1635 = vpow.pop %v1634
        %v1636 = vmul.f32 %v1630, 1.442695
        %v1637 = vpow.pop %v1636
        %v1638 = vmul.f32 %v1631, 1.442695
        %v1639 = vpow.pop %v1638
        %v1640 = vsel %vm1072, %v1633, 0.0
        %1641 = vadd.xlane.f32.xlu0 %v1640
        %v1642 = vpop.xlane.xlu0 %1641
        %v1643 = vsel %vm1072, %v1635, 0.0
        %1644 = vadd.xlane.f32.xlu0 %v1643
        %v1645 = vpop.xlane.xlu0 %1644
        %v1646 = vsel %vm1072, %v1637, 0.0
        %1647 = vadd.xlane.f32.xlu0 %v1646
        %v1648 = vpop.xlane.xlu0 %1647
        %v1649 = vsel %vm1072, %v1639, 0.0
        %1650 = vadd.xlane.f32.xlu0 %v1649
        %v1651 = vpop.xlane.xlu0 %1650
        %v1652 = vrcp.pop %v1642
        %v1653 = vrcp.pop %v1645
        %v1654 = vrcp.pop %v1648
        %v1655 = vrcp.pop %v1651
        %v1656 = vmul.f32 %v1633, %v1652
        %v1657 = vmul.f32 %v1635, %v1653
        %v1658 = vmul.f32 %v1637, %v1654
        %v1659 = vmul.f32 %v1639, %v1655
        %v1660 = vpack.c.bf16 %v1656, %v1656
        %v1661 = vpack.c.bf16 %v1657, %v1657
        %v1662 = vpack.c.bf16 %v1658, %v1658
        %v1663 = vpack.c.bf16 %v1659, %v1659
        %v1665 = vsel %vm1072, %v1660, 0
        %v1668 = vsel %vm1208, %v1532, 0
        %1670 = vmatpush.bf16.msra.mxu0 0
        %1671 = vmatpush.bf16.msra.mxu0 0
        %1672 = vmatpush.bf16.msra.mxu0 0
        %1673 = vmatpush.bf16.msra.mxu0 0
        %1674 = vmatpush.bf16.msra.mxu0 0
        %1675 = vmatpush.bf16.msra.mxu0 0
        %1676 = vmatpush.bf16.msra.mxu0 0
        %1677 = vmatpush.bf16.msra.mxu0 %v1668
        %1678 = vmatmul.bf16.gmra.mxu0 %v1665
        %v1679 = vpop.f32.mrf.mxu0
        %v1680 = vadd.f32 0.0, %v1679
        %v1681 = vpop.f32.mrf.mxu0
        %1682 = vdwg.mxu0
        %v1684 = vsel %vm1072, %v1661, 0
        %v1687 = vsel %vm1208, %v1533, 0
        %1689 = vmatpush.bf16.msra.mxu0 0
        %1690 = vmatpush.bf16.msra.mxu0 0
        %1691 = vmatpush.bf16.msra.mxu0 0
        %1692 = vmatpush.bf16.msra.mxu0 0
        %1693 = vmatpush.bf16.msra.mxu0 0
        %1694 = vmatpush.bf16.msra.mxu0 0
        %1695 = vmatpush.bf16.msra.mxu0 0
        %1696 = vmatpush.bf16.msra.mxu0 %v1687
        %1697 = vmatmul.bf16.gmra.mxu0 %v1684
        %v1698 = vpop.f32.mrf.mxu0
        %v1699 = vadd.f32 0.0, %v1698
        %v1700 = vpop.f32.mrf.mxu0
        %1701 = vdwg.mxu0
        %v1703 = vsel %vm1072, %v1662, 0
        %v1706 = vsel %vm1208, %v1534, 0
        %1708 = vmatpush.bf16.msra.mxu0 0
        %1709 = vmatpush.bf16.msra.mxu0 0
        %1710 = vmatpush.bf16.msra.mxu0 0
        %1711 = vmatpush.bf16.msra.mxu0 0
        %1712 = vmatpush.bf16.msra.mxu0 0
        %1713 = vmatpush.bf16.msra.mxu0 0
        %1714 = vmatpush.bf16.msra.mxu0 0
        %1715 = vmatpush.bf16.msra.mxu0 %v1706
        %1716 = vmatmul.bf16.gmra.mxu0 %v1703
        %v1717 = vpop.f32.mrf.mxu0
        %v1718 = vadd.f32 0.0, %v1717
        %v1719 = vpop.f32.mrf.mxu0
        %1720 = vdwg.mxu0
        %v1722 = vsel %vm1072, %v1663, 0
        %v1725 = vsel %vm1208, %v1535, 0
        %1727 = vmatpush.bf16.msra.mxu0 0
        %1728 = vmatpush.bf16.msra.mxu0 0
        %1729 = vmatpush.bf16.msra.mxu0 0
        %1730 = vmatpush.bf16.msra.mxu0 0
        %1731 = vmatpush.bf16.msra.mxu0 0
        %1732 = vmatpush.bf16.msra.mxu0 0
        %1733 = vmatpush.bf16.msra.mxu0 0
        %1734 = vmatpush.bf16.msra.mxu0 %v1725
        %1735 = vmatmul.bf16.gmra.mxu0 %v1722
        %v1736 = vpop.f32.mrf.mxu0
        %v1737 = vadd.f32 0.0, %v1736
        %v1738 = vpop.f32.mrf.mxu0
        %1739 = vdwg.mxu0
        %1740 = vst.msk [vmem:[#allocation2] sm:$0xff] %vm1072, %v1680
        %1741 = vst.msk [vmem:[#allocation2 + $0x8] sm:$0xff] %vm1072, %v1699
        %1742 = vst.msk [vmem:[#allocation2 + $0x10] sm:$0xff] %vm1072, %v1718
        %1743 = vst.msk [vmem:[#allocation2 + $0x18] sm:$0xff] %vm1072, %v1737
        %v1744 = vld [vmem:[#allocation2] ss:$4 sm:$0xff]
        %v1745 = vld [vmem:[%s1287] ss:$4 sm:$0xff]
        %v1746 = vld [vmem:[%s1289] ss:$4 sm:$0xff]
        %v1747 = vld [vmem:[%s1291] ss:$4 sm:$0xff]
        %1749 = vrot.lane.b32.xlu0 %v1745, 8
        %v1750 = vpop.permute.xlu0 %1749
        %1753 = vrot.lane.b32.xlu0 %v1746, 16
        %v1754 = vpop.permute.xlu0 %1753
        %1757 = vrot.lane.b32.xlu0 %v1747, 24
        %v1758 = vpop.permute.xlu0 %1757
        %v1760 = vsel %vm1072, %v1744, %v1750
        %v1761 = vsel %vm1306, %v1760, %v1754
        %v1762 = vsel %vm1308, %v1761, %v1758
        %v1763 = vpack.c.bf16 %v1762, %v1762
        %v1765 = vperm.slane %v1399, 0
        %v1771 = vunpack.c.l.b16 %v1395
        %v1772 = vunpack.c.l.b16 %v1396
        %v1773 = vunpack.c.l.b16 %v1397
        %v1774 = vunpack.c.l.b16 %v1398
        %v1775 = vpack.c.b16 %v1772, %v1771
        %v1776 = vpack.c.b16 %v1774, %v1773
        %v1780 = vsel %vm957, %v1763, 0
        %1782 = vmatpush.bf16.msra.mxu0 0
        %1783 = vmatpush.bf16.msra.mxu0 0
        %1784 = vmatpush.bf16.msra.mxu0 0
        %1785 = vmatpush.bf16.msra.mxu0 0
        %1786 = vmatpush.bf16.msra.mxu0 0
        %1787 = vmatpush.bf16.msra.mxu0 0
        %1788 = vmatpush.bf16.msra.mxu0 %v1776
        %1789 = vmatpush.bf16.msra.mxu0 %v1775
        %1790 = vmatmul.bf16.gmra.mxu0 %v1780
        %v1791 = vpop.f32.mrf.mxu0
        %v1792 = vadd.f32 %v1765, %v1791
        %v1793 = vpop.f32.mrf.mxu0
        %1794 = vdwg.mxu0
        %v1795 = vadd.f32 %v1792, %v1379
        %v1796 = vsel %vm957, %v1795, 0.0
        %1797 = vadd.xlane.f32.xlu0 %v1796
        %v1798 = vpop.xlane.xlu0 %1797
        %v1799 = vmul.f32 %v1798, %v1352
        %v1800 = vsub.f32 %v1795, %v1799
        %v1801 = vmul.f32 %v1800, %v1800
        %v1802 = vsel %vm957, %v1801, 0.0
        %1803 = vadd.xlane.f32.xlu0 %v1802
        %v1804 = vpop.xlane.xlu0 %1803
        %v1805 = vmul.f32 %v1804, %v1352
        %v1806 = vadd.f32 %v1805, 1e-05
        %v1807 = vrsqrt.pop %v1806
        %v1808 = vmul.f32 %v1807, %v1806
        %v1809 = vmul.f32 %v1808, %v1807
        %v1810 = vmul.f32 0.5, %v1809
        %v1811 = vsub.f32 1.5, %v1810
        %v1812 = vmul.f32 %v1807, %v1811
        %vm1813 = vweird.f32 %v1806
        %vm1814 = vweird.f32 %v1807
        %vm1815 = vmor %vm1813, %vm1814
        %v1816 = vsel %vm1815, %v1807, %v1812
        %v1817 = vmul.f32 %v1800, %v1816
        %v1819 = vperm.slane %v1400, 0
        %v1821 = vmul.f32 %v1819, %v1817
        %v1823 = vperm.slane %v1401, 0
        %v1825 = vadd.f32 %v1821, %v1823
        %v1826 = vld [vmem:[%s47] sm:$0xf]
        %v1827 = vld [vmem:[%s47 + $0x4] sm:$0xf]
        %v1828 = vld [vmem:[%s47 + $0x8] sm:$0xf]
        %v1829 = vld [vmem:[%s47 + $0xc] sm:$0xf]
        %v1830 = vld [vmem:[%s49] sm:$0x1]
        %v1831 = vld [vmem:[%s51] sm:$0xf]
        %v1832 = vld [vmem:[%s51 + $0x4] sm:$0xf]
        %v1833 = vld [vmem:[%s51 + $0x8] sm:$0xf]
        %v1834 = vld [vmem:[%s51 + $0xc] sm:$0xf]
        %v1835 = vld [vmem:[%s51 + $0x10] sm:$0xf]
        %v1836 = vld [vmem:[%s51 + $0x14] sm:$0xf]
        %v1837 = vld [vmem:[%s51 + $0x18] sm:$0xf]
        %v1838 = vld [vmem:[%s51 + $0x1c] sm:$0xf]
        %v1839 = vld [vmem:[%s53] sm:$0x1]
        %v1840 = vld [vmem:[%s55] sm:$0x1]
        %v1841 = vld [vmem:[%s57] sm:$0x1]
        %v1842 = vpack.c.bf16 %v1825, %v1825
        %v1844 = vperm.slane %v1830, 0
        %v1850 = vunpack.c.l.b16 %v1826
        %v1851 = vunpack.c.l.b16 %v1827
        %v1852 = vunpack.c.l.b16 %v1828
        %v1853 = vunpack.c.l.b16 %v1829
        %v1854 = vpack.c.b16 %v1851, %v1850
        %v1855 = vpack.c.b16 %v1853, %v1852
        %v1859 = vsel %vm957, %v1842, 0
        %1861 = vmatpush.bf16.msra.mxu0 0
        %1862 = vmatpush.bf16.msra.mxu0 0
        %1863 = vmatpush.bf16.msra.mxu0 0
        %1864 = vmatpush.bf16.msra.mxu0 0
        %1865 = vmatpush.bf16.msra.mxu0 0
        %1866 = vmatpush.bf16.msra.mxu0 0
        %1867 = vmatpush.bf16.msra.mxu0 %v1855
        %1868 = vmatpush.bf16.msra.mxu0 %v1854
        %1869 = vmatmul.bf16.gmra.mxu0 %v1859
        %v1870 = vpop.f32.mrf.mxu0
        %v1871 = vadd.f32 %v1844, %v1870
        %v1872 = vpop.f32.mrf.mxu0
        %1873 = vdwg.mxu0
        %v1874 = vmax.f32 %v1871, 0.0
        %v1875 = vpack.c.bf16 %v1874, %v1874
        %v1877 = vperm.slane %v1839, 0
        %v1887 = vunpack.c.l.b16 %v1831
        %v1888 = vunpack.c.l.b16 %v1832
        %v1889 = vunpack.c.l.b16 %v1833
        %v1890 = vunpack.c.l.b16 %v1834
        %v1891 = vunpack.c.l.b16 %v1835
        %v1892 = vunpack.c.l.b16 %v1836
        %v1893 = vunpack.c.l.b16 %v1837
        %v1894 = vunpack.c.l.b16 %v1838
        %v1895 = vpack.c.b16 %v1888, %v1887
        %v1896 = vpack.c.b16 %v1890, %v1889
        %v1897 = vpack.c.b16 %v1892, %v1891
        %v1898 = vpack.c.b16 %v1894, %v1893
        %vm1903 = vcmask 523264
        %v1905 = vsel %vm1903, %v1875, 0
        %1907 = vmatpush.bf16.msra.mxu0 0
        %1908 = vmatpush.bf16.msra.mxu0 0
        %1909 = vmatpush.bf16.msra.mxu0 0
        %1910 = vmatpush.bf16.msra.mxu0 0
        %1911 = vmatpush.bf16.msra.mxu0 %v1898
        %1912 = vmatpush.bf16.msra.mxu0 %v1897
        %1913 = vmatpush.bf16.msra.mxu0 %v1896
        %1914 = vmatpush.bf16.msra.mxu0 %v1895
        %1915 = vmatmul.bf16.gmra.mxu0 %v1905
        %v1916 = vpop.f32.mrf.mxu0
        %v1917 = vadd.f32 %v1877, %v1916
        %v1918 = vpop.f32.mrf.mxu0
        %1919 = vdwg.mxu0
        %v1920 = vadd.f32 %v1917, %v1825
        %v1921 = vsel %vm957, %v1920, 0.0
        %1922 = vadd.xlane.f32.xlu0 %v1921
        %v1923 = vpop.xlane.xlu0 %1922
        %v1924 = vmul.f32 %v1923, %v1352
        %v1925 = vsub.f32 %v1920, %v1924
        %v1926 = vmul.f32 %v1925, %v1925
        %v1927 = vsel %vm957, %v1926, 0.0
        %1928 = vadd.xlane.f32.xlu0 %v1927
        %v1929 = vpop.xlane.xlu0 %1928
        %v1930 = vmul.f32 %v1929, %v1352
        %v1931 = vadd.f32 %v1930, 1e-05
        %v1932 = vrsqrt.pop %v1931
        %v1933 = vmul.f32 %v1932, %v1931
        %v1934 = vmul.f32 %v1933, %v1932
        %v1935 = vmul.f32 0.5, %v1934
        %v1936 = vsub.f32 1.5, %v1935
        %v1937 = vmul.f32 %v1932, %v1936
        %vm1938 = vweird.f32 %v1931
        %vm1939 = vweird.f32 %v1932
        %vm1940 = vmor %vm1938, %vm1939
        %v1941 = vsel %vm1940, %v1932, %v1937
        %v1942 = vmul.f32 %v1925, %v1941
        %v1944 = vperm.slane %v1840, 0
        %v1946 = vmul.f32 %v1944, %v1942
        %v1948 = vperm.slane %v1841, 0
        %v1950 = vadd.f32 %v1946, %v1948
        %1951 = vst.msk [vmem:[%s906] sm:$0xff] %vm957, %v1950
        %s1952 = sand.u32 %s700, 1
        %s1953 = scalar_lea.sflag [#allocation4], %s1952
        %s1954 = sand.u32 %s700, 1
        %s1955 = smul.addr %s1954, 8
        %s1956 = scalar_lea.vmem [#allocation3], %s1955
        // Predicated region
        $region137: #{decoder_forward.3} parent=135 // pred_check
          %p1957 = pneg %p710
        $region138: #{decoder_forward.3} parent=135 // pred_check_branch
          %1959 = sbr.rel (%p1957) target = $region140
        $region139: #{decoder_forward.3} parent=135 // pred_region
          %1961 = vsyncadd %s1953, 0
          %s1962 = smul.addr %s73, 8
          %s1963 = scalar_lea.hbm %s59, %s1962
          %s1965 = sshll.u32 %s1956, 4
          %s1966 = int_to_ptr.vmem [resolvable:$true] %s1965
          %s1967 = sshll.u32 %s1963, 4
          %s1968 = int_to_ptr.hbm [resolvable:$true] %s1967
          %1970 = dma.vmem_to_hbm [thread:$0]  %s1966, 128, %s1968, %s1953
        $region140: #{decoder_forward.3} parent=135 // pred_fallthru
          _
      $region136: #{decoder_forward.3} parent=5 // pred_fallthru
        _
      %p1971 = scmp.le.s32.totalorder 2, %s68
      // Predicated region
      $region141: #{decoder_forward.3} parent=5 // pred_check
        %p1972 = pneg %p1971
      $region142: #{decoder_forward.3} parent=5 // pred_check_branch
        %1974 = sbr.rel (%p1972) target = $region144
      $region143: #{decoder_forward.3} parent=5 // pred_region
        %s1975 = ssub.s32 %s68, 2
        // Predicated region
        $region145: #{decoder_forward.3} parent=143 // pred_check
          %p1976 = pneg %p716
        $region146: #{decoder_forward.3} parent=143 // pred_check_branch
          %1978 = sbr.rel (%p1976) target = $region148
        $region147: #{decoder_forward.3} parent=143 // pred_region
          %s1979 = sand.u32 %s701, 1
          %s1980 = scalar_lea.sflag [#allocation4], %s1979
          %s1981 = sand.u32 %s701, 1
          %s1982 = smul.addr %s1981, 8
          %s1983 = scalar_lea.vmem [#allocation3], %s1982
          %1985 = dma.done %s1980, 128
        $region148: #{decoder_forward.3} parent=143 // pred_fallthru
          _
      $region144: #{decoder_forward.3} parent=5 // pred_fallthru
        _
    $region6: #{decoder_forward.3} parent=1 // loop_footer
      %s72 = sadd.s32 1, %s68
    $region7: #{decoder_forward.3} parent=1 // loop_footer_branch
      %67 = sbr.rel target = $region3
    $region8: #{decoder_forward.3} parent=1 // loop_exit
      _
    %1986 = vsyncpa [#allocation4], 1
    %s1987 = scalar_lea.sflag [#allocation4], 1
    %1988 = vsyncpa %s1987, 1

// kernel: decoder_forward.2
$region0: #{decoder_forward.2}
  #allocation0 [shape = 'u32[]', space=smem, size = 0x4, offset = 0x4, fixed_abs, tag = 'smem constant byte address 0x4 - core index']
  #allocation1 [shape = 'u32[72,128]{1,0:T(1,128)}', space=vmem, size = 0x9000, scoped, tag = 'internal scratch']
  #allocation2 [shape = 'f32[32,8]{1,0:T(8,128)}', space=vmem, size = 0x4000, scoped, tag = 'scratch operand']
  %s0 = inlined_call_operand.smem [shape: u32[30], index: -1, kind: input, shape index: {}]
  %s1 = sld [smem:[%s0]]
  %s2 = scalar_lea.smem %s0, 1
  %s3 = sld [smem:[%s2]]
  %s4 = scalar_lea.smem %s0, 2
  %s5 = sld [smem:[%s4]]
  %s6 = scalar_lea.smem %s0, 3
  %s7 = sld [smem:[%s6]]
  %s8 = scalar_lea.smem %s0, 4
  %s9 = sld [smem:[%s8]]
  %s10 = scalar_lea.smem %s0, 5
  %s11 = sld [smem:[%s10]]
  %s12 = scalar_lea.smem %s0, 6
  %s13 = sld [smem:[%s12]]
  %s14 = scalar_lea.smem %s0, 7
  %s15 = sld [smem:[%s14]]
  %s16 = scalar_lea.smem %s0, 8
  %s17 = sld [smem:[%s16]]
  %s18 = scalar_lea.smem %s0, 9
  %s19 = sld [smem:[%s18]]
  %s20 = scalar_lea.smem %s0, 10
  %s21 = sld [smem:[%s20]]
  %s22 = scalar_lea.smem %s0, 11
  %s23 = sld [smem:[%s22]]
  %s24 = scalar_lea.smem %s0, 12
  %s25 = sld [smem:[%s24]]
  %s26 = scalar_lea.smem %s0, 13
  %s27 = sld [smem:[%s26]]
  %s28 = scalar_lea.smem %s0, 14
  %s29 = sld [smem:[%s28]]
  %s30 = scalar_lea.smem %s0, 15
  %s31 = sld [smem:[%s30]]
  %s32 = scalar_lea.smem %s0, 16
  %s33 = sld [smem:[%s32]]
  %s34 = scalar_lea.smem %s0, 17
  %s35 = sld [smem:[%s34]]
  %s36 = scalar_lea.smem %s0, 18
  %s37 = sld [smem:[%s36]]
  %s38 = scalar_lea.smem %s0, 19
  %s39 = sld [smem:[%s38]]
  %s40 = scalar_lea.smem %s0, 20
  %s41 = sld [smem:[%s40]]
  %s42 = scalar_lea.smem %s0, 21
  %s43 = sld [smem:[%s42]]
  %s44 = scalar_lea.smem %s0, 22
  %s45 = sld [smem:[%s44]]
  %s46 = scalar_lea.smem %s0, 23
  %s47 = sld [smem:[%s46]]
  %s48 = scalar_lea.smem %s0, 24
  %s49 = sld [smem:[%s48]]
  %s50 = scalar_lea.smem %s0, 25
  %s51 = sld [smem:[%s50]]
  %s52 = scalar_lea.smem %s0, 26
  %s53 = sld [smem:[%s52]]
  %s54 = scalar_lea.smem %s0, 27
  %s55 = sld [smem:[%s54]]
  %s56 = scalar_lea.smem %s0, 28
  %s57 = sld [smem:[%s56]]
  %s58 = scalar_lea.smem %s0, 29
  %s59 = sld [smem:[%s58]]
  %s60 = sld [smem:[#allocation0]]
  $region149: #{decoder_forward.2} parent=0
    _
  %s62 = ssub.s32 1, %s60
  %s63 = scalar_select 0, %s62, %s60
  loop: start=0, step=1, limit=4
  $region2: #{decoder_forward.2} parent=0 // loop_pre_header
    _
  $region3: #{decoder_forward.2} parent=0 // loop_header
    %s65 = sphi 0, %s69
    %p66 = scmp.ge.s32.totalorder %s65, 4
    %s75 = sphi 0, %s77
    %s78 = sphi 0, %s75
    %s79 = sphi 0, %s78
    %s95 = sphi 0, %s79
    %s101 = sphi 0, %s103
    %s104 = sphi 0, %s101
    %s105 = sphi 0, %s104
    %s121 = sphi 0, %s105
    %s125 = sphi 0, %s125
    %s127 = sphi 0, %s125
    %s128 = sphi 0, %s127
    %s142 = sphi 0, %s128
    %s146 = sphi 0, %s146
    %s148 = sphi 0, %s146
    %s149 = sphi 0, %s148
    %s163 = sphi 0, %s149
    %s167 = sphi 0, %s167
    %s169 = sphi 0, %s167
    %s170 = sphi 0, %s169
    %s184 = sphi 0, %s170
    %s188 = sphi 0, %s188
    %s190 = sphi 0, %s188
    %s191 = sphi 0, %s190
    %s205 = sphi 0, %s191
    %s209 = sphi 0, %s209
    %s211 = sphi 0, %s209
    %s212 = sphi 0, %s211
    %s226 = sphi 0, %s212
    %s230 = sphi 0, %s230
    %s232 = sphi 0, %s230
    %s233 = sphi 0, %s232
    %s247 = sphi 0, %s233
    %s251 = sphi 0, %s251
    %s253 = sphi 0, %s251
    %s254 = sphi 0, %s253
    %s268 = sphi 0, %s254
    %s272 = sphi 0, %s272
    %s274 = sphi 0, %s272
    %s275 = sphi 0, %s274
    %s289 = sphi 0, %s275
    %s293 = sphi 0, %s293
    %s295 = sphi 0, %s293
    %s296 = sphi 0, %s295
    %s310 = sphi 0, %s296
    %s314 = sphi 0, %s314
    %s316 = sphi 0, %s314
    %s317 = sphi 0, %s316
    %s331 = sphi 0, %s317
    %s335 = sphi 0, %s335
    %s337 = sphi 0, %s335
    %s338 = sphi 0, %s337
    %s352 = sphi 0, %s338
    %s356 = sphi 0, %s356
    %s358 = sphi 0, %s356
    %s359 = sphi 0, %s358
    %s373 = sphi 0, %s359
    %s377 = sphi 0, %s377
    %s379 = sphi 0, %s377
    %s380 = sphi 0, %s379
    %s394 = sphi 0, %s380
    %s398 = sphi 0, %s398
    %s400 = sphi 0, %s398
    %s401 = sphi 0, %s400
    %s415 = sphi 0, %s401
    %s419 = sphi 0, %s419
    %s421 = sphi 0, %s419
    %s422 = sphi 0, %s421
    %s436 = sphi 0, %s422
    %s440 = sphi 0, %s440
    %s442 = sphi 0, %s440
    %s443 = sphi 0, %s442
    %s457 = sphi 0, %s443
    %s461 = sphi 0, %s461
    %s463 = sphi 0, %s461
    %s464 = sphi 0, %s463
    %s478 = sphi 0, %s464
    %s482 = sphi 0, %s482
    %s484 = sphi 0, %s482
    %s485 = sphi 0, %s484
    %s499 = sphi 0, %s485
    %s503 = sphi 0, %s503
    %s505 = sphi 0, %s503
    %s506 = sphi 0, %s505
    %s520 = sphi 0, %s506
    %s524 = sphi 0, %s524
    %s526 = sphi 0, %s524
    %s527 = sphi 0, %s526
    %s541 = sphi 0, %s527
    %s545 = sphi 0, %s545
    %s547 = sphi 0, %s545
    %s548 = sphi 0, %s547
    %s562 = sphi 0, %s548
    %s566 = sphi 0, %s566
    %s568 = sphi 0, %s566
    %s569 = sphi 0, %s568
    %s583 = sphi 0, %s569
    %s587 = sphi 0, %s587
    %s589 = sphi 0, %s587
    %s590 = sphi 0, %s589
    %s604 = sphi 0, %s590
    %s608 = sphi 0, %s608
    %s610 = sphi 0, %s608
    %s611 = sphi 0, %s610
    %s625 = sphi 0, %s611
    %s629 = sphi 0, %s629
    %s631 = sphi 0, %s629
    %s632 = sphi 0, %s631
    %s646 = sphi 0, %s632
    %s650 = sphi 0, %s650
    %s652 = sphi 0, %s650
    %s653 = sphi 0, %s652
    %s667 = sphi 0, %s653
    %s671 = sphi 0, %s671
    %s673 = sphi 0, %s671
    %s674 = sphi 0, %s673
    %s688 = sphi 0, %s674
    %s694 = sphi 0, %s696
    %s697 = sphi 0, %s694
    %s698 = sphi 0, %s697
    %s714 = sphi 0, %s698
  $region4: #{decoder_forward.2} parent=0 // loop_header_branch
    %68 = sbr.rel (%p66) target = $region8
  $region5: #{decoder_forward.2} parent=0 // loop_body
    %s70 = ssub.s32 %s65, 1
    %s71 = ssub.s32 %s65, 2
    %s72 = sadd.s32 %s65, 1
    %s73 = ssub.s32 %s65, %s72
    %p74 = scmp.eq.s32.totalorder %s73, 0
    %s76 = sadd.s32 %s75, 1
    %s77 = scalar_select %p74, %s75, %s76
    %p80 = pneg %p74
    %p81 = scmp.eq.s32.totalorder %s65, 1
    %p82 = por %p80, %p81
    %p83 = scmp.ne.s32.totalorder %s75, %s78
    %p84 = scmp.eq.s32.totalorder %s65, 0
    %p85 = por %p83, %p84
    %p86 = scmp.ne.s32.totalorder %s75, %s78
    %p87 = scmp.eq.s32.totalorder %s70, 1
    %p88 = por %p86, %p87
    %p89 = scmp.ne.s32.totalorder %s78, %s79
    %p90 = scmp.eq.s32.totalorder %s70, 0
    %p91 = por %p89, %p90
    %p92 = scmp.ne.s32.totalorder %s78, %s79
    %p93 = scmp.eq.s32.totalorder %s71, 1
    %p94 = por %p92, %p93
    %p96 = scmp.ne.s32.totalorder %s79, %s95
    %p97 = scmp.eq.s32.totalorder %s71, 0
    %p98 = por %p96, %p97
    %s99 = ssub.s32 %s65, %s72
    %p100 = scmp.eq.s32.totalorder %s99, 0
    %s102 = sadd.s32 %s101, 1
    %s103 = scalar_select %p100, %s101, %s102
    %p106 = pneg %p100
    %p107 = scmp.eq.s32.totalorder %s65, 1
    %p108 = por %p106, %p107
    %p109 = scmp.ne.s32.totalorder %s101, %s104
    %p110 = scmp.eq.s32.totalorder %s65, 0
    %p111 = por %p109, %p110
    %p112 = scmp.ne.s32.totalorder %s101, %s104
    %p113 = scmp.eq.s32.totalorder %s70, 1
    %p114 = por %p112, %p113
    %p115 = scmp.ne.s32.totalorder %s104, %s105
    %p116 = scmp.eq.s32.totalorder %s70, 0
    %p117 = por %p115, %p116
    %p118 = scmp.ne.s32.totalorder %s104, %s105
    %p119 = scmp.eq.s32.totalorder %s71, 1
    %p120 = por %p118, %p119
    %p122 = scmp.ne.s32.totalorder %s105, %s121
    %p123 = scmp.eq.s32.totalorder %s71, 0
    %p124 = por %p122, %p123
    %s126 = sadd.s32 %s125, 1
    %p129 = scmp.eq.s32.totalorder %s65, 1
    %p130 = scmp.ne.s32.totalorder %s125, %s127
    %p131 = scmp.eq.s32.totalorder %s65, 0
    %p132 = por %p130, %p131
    %p133 = scmp.ne.s32.totalorder %s125, %s127
    %p134 = scmp.eq.s32.totalorder %s70, 1
    %p135 = por %p133, %p134
    %p136 = scmp.ne.s32.totalorder %s127, %s128
    %p137 = scmp.eq.s32.totalorder %s70, 0
    %p138 = por %p136, %p137
    %p139 = scmp.ne.s32.totalorder %s127, %s128
    %p140 = scmp.eq.s32.totalorder %s71, 1
    %p141 = por %p139, %p140
    %p143 = scmp.ne.s32.totalorder %s128, %s142
    %p144 = scmp.eq.s32.totalorder %s71, 0
    %p145 = por %p143, %p144
    %s147 = sadd.s32 %s146, 1
    %p150 = scmp.eq.s32.totalorder %s65, 1
    %p151 = scmp.ne.s32.totalorder %s146, %s148
    %p152 = scmp.eq.s32.totalorder %s65, 0
    %p153 = por %p151, %p152
    %p154 = scmp.ne.s32.totalorder %s146, %s148
    %p155 = scmp.eq.s32.totalorder %s70, 1
    %p156 = por %p154, %p155
    %p157 = scmp.ne.s32.totalorder %s148, %s149
    %p158 = scmp.eq.s32.totalorder %s70, 0
    %p159 = por %p157, %p158
    %p160 = scmp.ne.s32.totalorder %s148, %s149
    %p161 = scmp.eq.s32.totalorder %s71, 1
    %p162 = por %p160, %p161
    %p164 = scmp.ne.s32.totalorder %s149, %s163
    %p165 = scmp.eq.s32.totalorder %s71, 0
    %p166 = por %p164, %p165
    %s168 = sadd.s32 %s167, 1
    %p171 = scmp.eq.s32.totalorder %s65, 1
    %p172 = scmp.ne.s32.totalorder %s167, %s169
    %p173 = scmp.eq.s32.totalorder %s65, 0
    %p174 = por %p172, %p173
    %p175 = scmp.ne.s32.totalorder %s167, %s169
    %p176 = scmp.eq.s32.totalorder %s70, 1
    %p177 = por %p175, %p176
    %p178 = scmp.ne.s32.totalorder %s169, %s170
    %p179 = scmp.eq.s32.totalorder %s70, 0
    %p180 = por %p178, %p179
    %p181 = scmp.ne.s32.totalorder %s169, %s170
    %p182 = scmp.eq.s32.totalorder %s71, 1
    %p183 = por %p181, %p182
    %p185 = scmp.ne.s32.totalorder %s170, %s184
    %p186 = scmp.eq.s32.totalorder %s71, 0
    %p187 = por %p185, %p186
    %s189 = sadd.s32 %s188, 1
    %p192 = scmp.eq.s32.totalorder %s65, 1
    %p193 = scmp.ne.s32.totalorder %s188, %s190
    %p194 = scmp.eq.s32.totalorder %s65, 0
    %p195 = por %p193, %p194
    %p196 = scmp.ne.s32.totalorder %s188, %s190
    %p197 = scmp.eq.s32.totalorder %s70, 1
    %p198 = por %p196, %p197
    %p199 = scmp.ne.s32.totalorder %s190, %s191
    %p200 = scmp.eq.s32.totalorder %s70, 0
    %p201 = por %p199, %p200
    %p202 = scmp.ne.s32.totalorder %s190, %s191
    %p203 = scmp.eq.s32.totalorder %s71, 1
    %p204 = por %p202, %p203
    %p206 = scmp.ne.s32.totalorder %s191, %s205
    %p207 = scmp.eq.s32.totalorder %s71, 0
    %p208 = por %p206, %p207
    %s210 = sadd.s32 %s209, 1
    %p213 = scmp.eq.s32.totalorder %s65, 1
    %p214 = scmp.ne.s32.totalorder %s209, %s211
    %p215 = scmp.eq.s32.totalorder %s65, 0
    %p216 = por %p214, %p215
    %p217 = scmp.ne.s32.totalorder %s209, %s211
    %p218 = scmp.eq.s32.totalorder %s70, 1
    %p219 = por %p217, %p218
    %p220 = scmp.ne.s32.totalorder %s211, %s212
    %p221 = scmp.eq.s32.totalorder %s70, 0
    %p222 = por %p220, %p221
    %p223 = scmp.ne.s32.totalorder %s211, %s212
    %p224 = scmp.eq.s32.totalorder %s71, 1
    %p225 = por %p223, %p224
    %p227 = scmp.ne.s32.totalorder %s212, %s226
    %p228 = scmp.eq.s32.totalorder %s71, 0
    %p229 = por %p227, %p228
    %s231 = sadd.s32 %s230, 1
    %p234 = scmp.eq.s32.totalorder %s65, 1
    %p235 = scmp.ne.s32.totalorder %s230, %s232
    %p236 = scmp.eq.s32.totalorder %s65, 0
    %p237 = por %p235, %p236
    %p238 = scmp.ne.s32.totalorder %s230, %s232
    %p239 = scmp.eq.s32.totalorder %s70, 1
    %p240 = por %p238, %p239
    %p241 = scmp.ne.s32.totalorder %s232, %s233
    %p242 = scmp.eq.s32.totalorder %s70, 0
    %p243 = por %p241, %p242
    %p244 = scmp.ne.s32.totalorder %s232, %s233
    %p245 = scmp.eq.s32.totalorder %s71, 1
    %p246 = por %p244, %p245
    %p248 = scmp.ne.s32.totalorder %s233, %s247
    %p249 = scmp.eq.s32.totalorder %s71, 0
    %p250 = por %p248, %p249
    %s252 = sadd.s32 %s251, 1
    %p255 = scmp.eq.s32.totalorder %s65, 1
    %p256 = scmp.ne.s32.totalorder %s251, %s253
    %p257 = scmp.eq.s32.totalorder %s65, 0
    %p258 = por %p256, %p257
    %p259 = scmp.ne.s32.totalorder %s251, %s253
    %p260 = scmp.eq.s32.totalorder %s70, 1
    %p261 = por %p259, %p260
    %p262 = scmp.ne.s32.totalorder %s253, %s254
    %p263 = scmp.eq.s32.totalorder %s70, 0
    %p264 = por %p262, %p263
    %p265 = scmp.ne.s32.totalorder %s253, %s254
    %p266 = scmp.eq.s32.totalorder %s71, 1
    %p267 = por %p265, %p266
    %p269 = scmp.ne.s32.totalorder %s254, %s268
    %p270 = scmp.eq.s32.totalorder %s71, 0
    %p271 = por %p269, %p270
    %s273 = sadd.s32 %s272, 1
    %p276 = scmp.eq.s32.totalorder %s65, 1
    %p277 = scmp.ne.s32.totalorder %s272, %s274
    %p278 = scmp.eq.s32.totalorder %s65, 0
    %p279 = por %p277, %p278
    %p280 = scmp.ne.s32.totalorder %s272, %s274
    %p281 = scmp.eq.s32.totalorder %s70, 1
    %p282 = por %p280, %p281
    %p283 = scmp.ne.s32.totalorder %s274, %s275
    %p284 = scmp.eq.s32.totalorder %s70, 0
    %p285 = por %p283, %p284
    %p286 = scmp.ne.s32.totalorder %s274, %s275
    %p287 = scmp.eq.s32.totalorder %s71, 1
    %p288 = por %p286, %p287
    %p290 = scmp.ne.s32.totalorder %s275, %s289
    %p291 = scmp.eq.s32.totalorder %s71, 0
    %p292 = por %p290, %p291
    %s294 = sadd.s32 %s293, 1
    %p297 = scmp.eq.s32.totalorder %s65, 1
    %p298 = scmp.ne.s32.totalorder %s293, %s295
    %p299 = scmp.eq.s32.totalorder %s65, 0
    %p300 = por %p298, %p299
    %p301 = scmp.ne.s32.totalorder %s293, %s295
    %p302 = scmp.eq.s32.totalorder %s70, 1
    %p303 = por %p301, %p302
    %p304 = scmp.ne.s32.totalorder %s295, %s296
    %p305 = scmp.eq.s32.totalorder %s70, 0
    %p306 = por %p304, %p305
    %p307 = scmp.ne.s32.totalorder %s295, %s296
    %p308 = scmp.eq.s32.totalorder %s71, 1
    %p309 = por %p307, %p308
    %p311 = scmp.ne.s32.totalorder %s296, %s310
    %p312 = scmp.eq.s32.totalorder %s71, 0
    %p313 = por %p311, %p312
    %s315 = sadd.s32 %s314, 1
    %p318 = scmp.eq.s32.totalorder %s65, 1
    %p319 = scmp.ne.s32.totalorder %s314, %s316
    %p320 = scmp.eq.s32.totalorder %s65, 0
    %p321 = por %p319, %p320
    %p322 = scmp.ne.s32.totalorder %s314, %s316
    %p323 = scmp.eq.s32.totalorder %s70, 1
    %p324 = por %p322, %p323
    %p325 = scmp.ne.s32.totalorder %s316, %s317
    %p326 = scmp.eq.s32.totalorder %s70, 0
    %p327 = por %p325, %p326
    %p328 = scmp.ne.s32.totalorder %s316, %s317
    %p329 = scmp.eq.s32.totalorder %s71, 1
    %p330 = por %p328, %p329
    %p332 = scmp.ne.s32.totalorder %s317, %s331
    %p333 = scmp.eq.s32.totalorder %s71, 0
    %p334 = por %p332, %p333
    %s336 = sadd.s32 %s335, 1
    %p339 = scmp.eq.s32.totalorder %s65, 1
    %p340 = scmp.ne.s32.totalorder %s335, %s337
    %p341 = scmp.eq.s32.totalorder %s65, 0
    %p342 = por %p340, %p341
    %p343 = scmp.ne.s32.totalorder %s335, %s337
    %p344 = scmp.eq.s32.totalorder %s70, 1
    %p345 = por %p343, %p344
    %p346 = scmp.ne.s32.totalorder %s337, %s338
    %p347 = scmp.eq.s32.totalorder %s70, 0
    %p348 = por %p346, %p347
    %p349 = scmp.ne.s32.totalorder %s337, %s338
    %p350 = scmp.eq.s32.totalorder %s71, 1
    %p351 = por %p349, %p350
    %p353 = scmp.ne.s32.totalorder %s338, %s352
    %p354 = scmp.eq.s32.totalorder %s71, 0
    %p355 = por %p353, %p354
    %s357 = sadd.s32 %s356, 1
    %p360 = scmp.eq.s32.totalorder %s65, 1
    %p361 = scmp.ne.s32.totalorder %s356, %s358
    %p362 = scmp.eq.s32.totalorder %s65, 0
    %p363 = por %p361, %p362
    %p364 = scmp.ne.s32.totalorder %s356, %s358
    %p365 = scmp.eq.s32.totalorder %s70, 1
    %p366 = por %p364, %p365
    %p367 = scmp.ne.s32.totalorder %s358, %s359
    %p368 = scmp.eq.s32.totalorder %s70, 0
    %p369 = por %p367, %p368
    %p370 = scmp.ne.s32.totalorder %s358, %s359
    %p371 = scmp.eq.s32.totalorder %s71, 1
    %p372 = por %p370, %p371
    %p374 = scmp.ne.s32.totalorder %s359, %s373
    %p375 = scmp.eq.s32.totalorder %s71, 0
    %p376 = por %p374, %p375
    %s378 = sadd.s32 %s377, 1
    %p381 = scmp.eq.s32.totalorder %s65, 1
    %p382 = scmp.ne.s32.totalorder %s377, %s379
    %p383 = scmp.eq.s32.totalorder %s65, 0
    %p384 = por %p382, %p383
    %p385 = scmp.ne.s32.totalorder %s377, %s379
    %p386 = scmp.eq.s32.totalorder %s70, 1
    %p387 = por %p385, %p386
    %p388 = scmp.ne.s32.totalorder %s379, %s380
    %p389 = scmp.eq.s32.totalorder %s70, 0
    %p390 = por %p388, %p389
    %p391 = scmp.ne.s32.totalorder %s379, %s380
    %p392 = scmp.eq.s32.totalorder %s71, 1
    %p393 = por %p391, %p392
    %p395 = scmp.ne.s32.totalorder %s380, %s394
    %p396 = scmp.eq.s32.totalorder %s71, 0
    %p397 = por %p395, %p396
    %s399 = sadd.s32 %s398, 1
    %p402 = scmp.eq.s32.totalorder %s65, 1
    %p403 = scmp.ne.s32.totalorder %s398, %s400
    %p404 = scmp.eq.s32.totalorder %s65, 0
    %p405 = por %p403, %p404
    %p406 = scmp.ne.s32.totalorder %s398, %s400
    %p407 = scmp.eq.s32.totalorder %s70, 1
    %p408 = por %p406, %p407
    %p409 = scmp.ne.s32.totalorder %s400, %s401
    %p410 = scmp.eq.s32.totalorder %s70, 0
    %p411 = por %p409, %p410
    %p412 = scmp.ne.s32.totalorder %s400, %s401
    %p413 = scmp.eq.s32.totalorder %s71, 1
    %p414 = por %p412, %p413
    %p416 = scmp.ne.s32.totalorder %s401, %s415
    %p417 = scmp.eq.s32.totalorder %s71, 0
    %p418 = por %p416, %p417
    %s420 = sadd.s32 %s419, 1
    %p423 = scmp.eq.s32.totalorder %s65, 1
    %p424 = scmp.ne.s32.totalorder %s419, %s421
    %p425 = scmp.eq.s32.totalorder %s65, 0
    %p426 = por %p424, %p425
    %p427 = scmp.ne.s32.totalorder %s419, %s421
    %p428 = scmp.eq.s32.totalorder %s70, 1
    %p429 = por %p427, %p428
    %p430 = scmp.ne.s32.totalorder %s421, %s422
    %p431 = scmp.eq.s32.totalorder %s70, 0
    %p432 = por %p430, %p431
    %p433 = scmp.ne.s32.totalorder %s421, %s422
    %p434 = scmp.eq.s32.totalorder %s71, 1
    %p435 = por %p433, %p434
    %p437 = scmp.ne.s32.totalorder %s422, %s436
    %p438 = scmp.eq.s32.totalorder %s71, 0
    %p439 = por %p437, %p438
    %s441 = sadd.s32 %s440, 1
    %p444 = scmp.eq.s32.totalorder %s65, 1
    %p445 = scmp.ne.s32.totalorder %s440, %s442
    %p446 = scmp.eq.s32.totalorder %s65, 0
    %p447 = por %p445, %p446
    %p448 = scmp.ne.s32.totalorder %s440, %s442
    %p449 = scmp.eq.s32.totalorder %s70, 1
    %p450 = por %p448, %p449
    %p451 = scmp.ne.s32.totalorder %s442, %s443
    %p452 = scmp.eq.s32.totalorder %s70, 0
    %p453 = por %p451, %p452
    %p454 = scmp.ne.s32.totalorder %s442, %s443
    %p455 = scmp.eq.s32.totalorder %s71, 1
    %p456 = por %p454, %p455
    %p458 = scmp.ne.s32.totalorder %s443, %s457
    %p459 = scmp.eq.s32.totalorder %s71, 0
    %p460 = por %p458, %p459
    %s462 = sadd.s32 %s461, 1
    %p465 = scmp.eq.s32.totalorder %s65, 1
    %p466 = scmp.ne.s32.totalorder %s461, %s463
    %p467 = scmp.eq.s32.totalorder %s65, 0
    %p468 = por %p466, %p467
    %p469 = scmp.ne.s32.totalorder %s461, %s463
    %p470 = scmp.eq.s32.totalorder %s70, 1
    %p471 = por %p469, %p470
    %p472 = scmp.ne.s32.totalorder %s463, %s464
    %p473 = scmp.eq.s32.totalorder %s70, 0
    %p474 = por %p472, %p473
    %p475 = scmp.ne.s32.totalorder %s463, %s464
    %p476 = scmp.eq.s32.totalorder %s71, 1
    %p477 = por %p475, %p476
    %p479 = scmp.ne.s32.totalorder %s464, %s478
    %p480 = scmp.eq.s32.totalorder %s71, 0
    %p481 = por %p479, %p480
    %s483 = sadd.s32 %s482, 1
    %p486 = scmp.eq.s32.totalorder %s65, 1
    %p487 = scmp.ne.s32.totalorder %s482, %s484
    %p488 = scmp.eq.s32.totalorder %s65, 0
    %p489 = por %p487, %p488
    %p490 = scmp.ne.s32.totalorder %s482, %s484
    %p491 = scmp.eq.s32.totalorder %s70, 1
    %p492 = por %p490, %p491
    %p493 = scmp.ne.s32.totalorder %s484, %s485
    %p494 = scmp.eq.s32.totalorder %s70, 0
    %p495 = por %p493, %p494
    %p496 = scmp.ne.s32.totalorder %s484, %s485
    %p497 = scmp.eq.s32.totalorder %s71, 1
    %p498 = por %p496, %p497
    %p500 = scmp.ne.s32.totalorder %s485, %s499
    %p501 = scmp.eq.s32.totalorder %s71, 0
    %p502 = por %p500, %p501
    %s504 = sadd.s32 %s503, 1
    %p507 = scmp.eq.s32.totalorder %s65, 1
    %p508 = scmp.ne.s32.totalorder %s503, %s505
    %p509 = scmp.eq.s32.totalorder %s65, 0
    %p510 = por %p508, %p509
    %p511 = scmp.ne.s32.totalorder %s503, %s505
    %p512 = scmp.eq.s32.totalorder %s70, 1
    %p513 = por %p511, %p512
    %p514 = scmp.ne.s32.totalorder %s505, %s506
    %p515 = scmp.eq.s32.totalorder %s70, 0
    %p516 = por %p514, %p515
    %p517 = scmp.ne.s32.totalorder %s505, %s506
    %p518 = scmp.eq.s32.totalorder %s71, 1
    %p519 = por %p517, %p518
    %p521 = scmp.ne.s32.totalorder %s506, %s520
    %p522 = scmp.eq.s32.totalorder %s71, 0
    %p523 = por %p521, %p522
    %s525 = sadd.s32 %s524, 1
    %p528 = scmp.eq.s32.totalorder %s65, 1
    %p529 = scmp.ne.s32.totalorder %s524, %s526
    %p530 = scmp.eq.s32.totalorder %s65, 0
    %p531 = por %p529, %p530
    %p532 = scmp.ne.s32.totalorder %s524, %s526
    %p533 = scmp.eq.s32.totalorder %s70, 1
    %p534 = por %p532, %p533
    %p535 = scmp.ne.s32.totalorder %s526, %s527
    %p536 = scmp.eq.s32.totalorder %s70, 0
    %p537 = por %p535, %p536
    %p538 = scmp.ne.s32.totalorder %s526, %s527
    %p539 = scmp.eq.s32.totalorder %s71, 1
    %p540 = por %p538, %p539
    %p542 = scmp.ne.s32.totalorder %s527, %s541
    %p543 = scmp.eq.s32.totalorder %s71, 0
    %p544 = por %p542, %p543
    %s546 = sadd.s32 %s545, 1
    %p549 = scmp.eq.s32.totalorder %s65, 1
    %p550 = scmp.ne.s32.totalorder %s545, %s547
    %p551 = scmp.eq.s32.totalorder %s65, 0
    %p552 = por %p550, %p551
    %p553 = scmp.ne.s32.totalorder %s545, %s547
    %p554 = scmp.eq.s32.totalorder %s70, 1
    %p555 = por %p553, %p554
    %p556 = scmp.ne.s32.totalorder %s547, %s548
    %p557 = scmp.eq.s32.totalorder %s70, 0
    %p558 = por %p556, %p557
    %p559 = scmp.ne.s32.totalorder %s547, %s548
    %p560 = scmp.eq.s32.totalorder %s71, 1
    %p561 = por %p559, %p560
    %p563 = scmp.ne.s32.totalorder %s548, %s562
    %p564 = scmp.eq.s32.totalorder %s71, 0
    %p565 = por %p563, %p564
    %s567 = sadd.s32 %s566, 1
    %p570 = scmp.eq.s32.totalorder %s65, 1
    %p571 = scmp.ne.s32.totalorder %s566, %s568
    %p572 = scmp.eq.s32.totalorder %s65, 0
    %p573 = por %p571, %p572
    %p574 = scmp.ne.s32.totalorder %s566, %s568
    %p575 = scmp.eq.s32.totalorder %s70, 1
    %p576 = por %p574, %p575
    %p577 = scmp.ne.s32.totalorder %s568, %s569
    %p578 = scmp.eq.s32.totalorder %s70, 0
    %p579 = por %p577, %p578
    %p580 = scmp.ne.s32.totalorder %s568, %s569
    %p581 = scmp.eq.s32.totalorder %s71, 1
    %p582 = por %p580, %p581
    %p584 = scmp.ne.s32.totalorder %s569, %s583
    %p585 = scmp.eq.s32.totalorder %s71, 0
    %p586 = por %p584, %p585
    %s588 = sadd.s32 %s587, 1
    %p591 = scmp.eq.s32.totalorder %s65, 1
    %p592 = scmp.ne.s32.totalorder %s587, %s589
    %p593 = scmp.eq.s32.totalorder %s65, 0
    %p594 = por %p592, %p593
    %p595 = scmp.ne.s32.totalorder %s587, %s589
    %p596 = scmp.eq.s32.totalorder %s70, 1
    %p597 = por %p595, %p596
    %p598 = scmp.ne.s32.totalorder %s589, %s590
    %p599 = scmp.eq.s32.totalorder %s70, 0
    %p600 = por %p598, %p599
    %p601 = scmp.ne.s32.totalorder %s589, %s590
    %p602 = scmp.eq.s32.totalorder %s71, 1
    %p603 = por %p601, %p602
    %p605 = scmp.ne.s32.totalorder %s590, %s604
    %p606 = scmp.eq.s32.totalorder %s71, 0
    %p607 = por %p605, %p606
    %s609 = sadd.s32 %s608, 1
    %p612 = scmp.eq.s32.totalorder %s65, 1
    %p613 = scmp.ne.s32.totalorder %s608, %s610
    %p614 = scmp.eq.s32.totalorder %s65, 0
    %p615 = por %p613, %p614
    %p616 = scmp.ne.s32.totalorder %s608, %s610
    %p617 = scmp.eq.s32.totalorder %s70, 1
    %p618 = por %p616, %p617
    %p619 = scmp.ne.s32.totalorder %s610, %s611
    %p620 = scmp.eq.s32.totalorder %s70, 0
    %p621 = por %p619, %p620
    %p622 = scmp.ne.s32.totalorder %s610, %s611
    %p623 = scmp.eq.s32.totalorder %s71, 1
    %p624 = por %p622, %p623
    %p626 = scmp.ne.s32.totalorder %s611, %s625
    %p627 = scmp.eq.s32.totalorder %s71, 0
    %p628 = por %p626, %p627
    %s630 = sadd.s32 %s629, 1
    %p633 = scmp.eq.s32.totalorder %s65, 1
    %p634 = scmp.ne.s32.totalorder %s629, %s631
    %p635 = scmp.eq.s32.totalorder %s65, 0
    %p636 = por %p634, %p635
    %p637 = scmp.ne.s32.totalorder %s629, %s631
    %p638 = scmp.eq.s32.totalorder %s70, 1
    %p639 = por %p637, %p638
    %p640 = scmp.ne.s32.totalorder %s631, %s632
    %p641 = scmp.eq.s32.totalorder %s70, 0
    %p642 = por %p640, %p641
    %p643 = scmp.ne.s32.totalorder %s631, %s632
    %p644 = scmp.eq.s32.totalorder %s71, 1
    %p645 = por %p643, %p644
    %p647 = scmp.ne.s32.totalorder %s632, %s646
    %p648 = scmp.eq.s32.totalorder %s71, 0
    %p649 = por %p647, %p648
    %s651 = sadd.s32 %s650, 1
    %p654 = scmp.eq.s32.totalorder %s65, 1
    %p655 = scmp.ne.s32.totalorder %s650, %s652
    %p656 = scmp.eq.s32.totalorder %s65, 0
    %p657 = por %p655, %p656
    %p658 = scmp.ne.s32.totalorder %s650, %s652
    %p659 = scmp.eq.s32.totalorder %s70, 1
    %p660 = por %p658, %p659
    %p661 = scmp.ne.s32.totalorder %s652, %s653
    %p662 = scmp.eq.s32.totalorder %s70, 0
    %p663 = por %p661, %p662
    %p664 = scmp.ne.s32.totalorder %s652, %s653
    %p665 = scmp.eq.s32.totalorder %s71, 1
    %p666 = por %p664, %p665
    %p668 = scmp.ne.s32.totalorder %s653, %s667
    %p669 = scmp.eq.s32.totalorder %s71, 0
    %p670 = por %p668, %p669
    %s672 = sadd.s32 %s671, 1
    %p675 = scmp.eq.s32.totalorder %s65, 1
    %p676 = scmp.ne.s32.totalorder %s671, %s673
    %p677 = scmp.eq.s32.totalorder %s65, 0
    %p678 = por %p676, %p677
    %p679 = scmp.ne.s32.totalorder %s671, %s673
    %p680 = scmp.eq.s32.totalorder %s70, 1
    %p681 = por %p679, %p680
    %p682 = scmp.ne.s32.totalorder %s673, %s674
    %p683 = scmp.eq.s32.totalorder %s70, 0
    %p684 = por %p682, %p683
    %p685 = scmp.ne.s32.totalorder %s673, %s674
    %p686 = scmp.eq.s32.totalorder %s71, 1
    %p687 = por %p685, %p686
    %p689 = scmp.ne.s32.totalorder %s674, %s688
    %p690 = scmp.eq.s32.totalorder %s71, 0
    %p691 = por %p689, %p690
    %s692 = ssub.s32 %s65, %s72
    %p693 = scmp.eq.s32.totalorder %s692, 0
    %s695 = sadd.s32 %s694, 1
    %s696 = scalar_select %p693, %s694, %s695
    %p699 = pneg %p693
    %p700 = scmp.eq.s32.totalorder %s65, 1
    %p701 = por %p699, %p700
    %p702 = scmp.ne.s32.totalorder %s694, %s697
    %p703 = scmp.eq.s32.totalorder %s65, 0
    %p704 = por %p702, %p703
    %p705 = scmp.ne.s32.totalorder %s694, %s697
    %p706 = scmp.eq.s32.totalorder %s70, 1
    %p707 = por %p705, %p706
    %p708 = scmp.ne.s32.totalorder %s697, %s698
    %p709 = scmp.eq.s32.totalorder %s70, 0
    %p710 = por %p708, %p709
    %p711 = scmp.ne.s32.totalorder %s697, %s698
    %p712 = scmp.eq.s32.totalorder %s71, 1
    %p713 = por %p711, %p712
    %p715 = scmp.ne.s32.totalorder %s698, %s714
    %p716 = scmp.eq.s32.totalorder %s71, 0
    %p717 = por %p715, %p716
    %p718 = scmp.le.s32.totalorder 1, %s65
    %p719 = scmp.lt.s32.totalorder %s65, 3
    %p720 = pnand %p718, %p719
    %p721 = pneg %p720
    // Predicated region
    $region9: #{decoder_forward.2} parent=5 // pred_check
      _
    $region10: #{decoder_forward.2} parent=5 // pred_check_branch
      %723 = sbr.rel (%p720) target = $region12
    $region11: #{decoder_forward.2} parent=5 // pred_region
      %s724 = ssub.s32 %s65, 1
      // Predicated region
      $region13: #{decoder_forward.2} parent=11 // pred_check
        %p725 = pneg %p138
      $region14: #{decoder_forward.2} parent=11 // pred_check_branch
        %727 = sbr.rel (%p725) target = $region16
      $region15: #{decoder_forward.2} parent=11 // pred_region
        _
      $region16: #{decoder_forward.2} parent=11 // pred_fallthru
        _
      // Predicated region
      $region17: #{decoder_forward.2} parent=11 // pred_check
        %p728 = pneg %p159
      $region18: #{decoder_forward.2} parent=11 // pred_check_branch
        %730 = sbr.rel (%p728) target = $region20
      $region19: #{decoder_forward.2} parent=11 // pred_region
        _
      $region20: #{decoder_forward.2} parent=11 // pred_fallthru
        _
      // Predicated region
      $region21: #{decoder_forward.2} parent=11 // pred_check
        %p731 = pneg %p180
      $region22: #{decoder_forward.2} parent=11 // pred_check_branch
        %733 = sbr.rel (%p731) target = $region24
      $region23: #{decoder_forward.2} parent=11 // pred_region
        _
      $region24: #{decoder_forward.2} parent=11 // pred_fallthru
        _
      // Predicated region
      $region25: #{decoder_forward.2} parent=11 // pred_check
        %p734 = pneg %p201
      $region26: #{decoder_forward.2} parent=11 // pred_check_branch
        %736 = sbr.rel (%p734) target = $region28
      $region27: #{decoder_forward.2} parent=11 // pred_region
        _
      $region28: #{decoder_forward.2} parent=11 // pred_fallthru
        _
      // Predicated region
      $region29: #{decoder_forward.2} parent=11 // pred_check
        %p737 = pneg %p222
      $region30: #{decoder_forward.2} parent=11 // pred_check_branch
        %739 = sbr.rel (%p737) target = $region32
      $region31: #{decoder_forward.2} parent=11 // pred_region
        _
      $region32: #{decoder_forward.2} parent=11 // pred_fallthru
        _
      // Predicated region
      $region33: #{decoder_forward.2} parent=11 // pred_check
        %p740 = pneg %p243
      $region34: #{decoder_forward.2} parent=11 // pred_check_branch
        %742 = sbr.rel (%p740) target = $region36
      $region35: #{decoder_forward.2} parent=11 // pred_region
        _
      $region36: #{decoder_forward.2} parent=11 // pred_fallthru
        _
      // Predicated region
      $region37: #{decoder_forward.2} parent=11 // pred_check
        %p743 = pneg %p264
      $region38: #{decoder_forward.2} parent=11 // pred_check_branch
        %745 = sbr.rel (%p743) target = $region40
      $region39: #{decoder_forward.2} parent=11 // pred_region
        _
      $region40: #{decoder_forward.2} parent=11 // pred_fallthru
        _
      // Predicated region
      $region41: #{decoder_forward.2} parent=11 // pred_check
        %p746 = pneg %p285
      $region42: #{decoder_forward.2} parent=11 // pred_check_branch
        %748 = sbr.rel (%p746) target = $region44
      $region43: #{decoder_forward.2} parent=11 // pred_region
        _
      $region44: #{decoder_forward.2} parent=11 // pred_fallthru
        _
      // Predicated region
      $region45: #{decoder_forward.2} parent=11 // pred_check
        %p749 = pneg %p306
      $region46: #{decoder_forward.2} parent=11 // pred_check_branch
        %751 = sbr.rel (%p749) target = $region48
      $region47: #{decoder_forward.2} parent=11 // pred_region
        _
      $region48: #{decoder_forward.2} parent=11 // pred_fallthru
        _
      // Predicated region
      $region49: #{decoder_forward.2} parent=11 // pred_check
        %p752 = pneg %p327
      $region50: #{decoder_forward.2} parent=11 // pred_check_branch
        %754 = sbr.rel (%p752) target = $region52
      $region51: #{decoder_forward.2} parent=11 // pred_region
        _
      $region52: #{decoder_forward.2} parent=11 // pred_fallthru
        _
      // Predicated region
      $region53: #{decoder_forward.2} parent=11 // pred_check
        %p755 = pneg %p348
      $region54: #{decoder_forward.2} parent=11 // pred_check_branch
        %757 = sbr.rel (%p755) target = $region56
      $region55: #{decoder_forward.2} parent=11 // pred_region
        _
      $region56: #{decoder_forward.2} parent=11 // pred_fallthru
        _
      // Predicated region
      $region57: #{decoder_forward.2} parent=11 // pred_check
        %p758 = pneg %p369
      $region58: #{decoder_forward.2} parent=11 // pred_check_branch
        %760 = sbr.rel (%p758) target = $region60
      $region59: #{decoder_forward.2} parent=11 // pred_region
        _
      $region60: #{decoder_forward.2} parent=11 // pred_fallthru
        _
      // Predicated region
      $region61: #{decoder_forward.2} parent=11 // pred_check
        %p761 = pneg %p390
      $region62: #{decoder_forward.2} parent=11 // pred_check_branch
        %763 = sbr.rel (%p761) target = $region64
      $region63: #{decoder_forward.2} parent=11 // pred_region
        _
      $region64: #{decoder_forward.2} parent=11 // pred_fallthru
        _
      // Predicated region
      $region65: #{decoder_forward.2} parent=11 // pred_check
        %p764 = pneg %p411
      $region66: #{decoder_forward.2} parent=11 // pred_check_branch
        %766 = sbr.rel (%p764) target = $region68
      $region67: #{decoder_forward.2} parent=11 // pred_region
        _
      $region68: #{decoder_forward.2} parent=11 // pred_fallthru
        _
      // Predicated region
      $region69: #{decoder_forward.2} parent=11 // pred_check
        %p767 = pneg %p432
      $region70: #{decoder_forward.2} parent=11 // pred_check_branch
        %769 = sbr.rel (%p767) target = $region72
      $region71: #{decoder_forward.2} parent=11 // pred_region
        _
      $region72: #{decoder_forward.2} parent=11 // pred_fallthru
        _
      // Predicated region
      $region73: #{decoder_forward.2} parent=11 // pred_check
        %p770 = pneg %p453
      $region74: #{decoder_forward.2} parent=11 // pred_check_branch
        %772 = sbr.rel (%p770) target = $region76
      $region75: #{decoder_forward.2} parent=11 // pred_region
        _
      $region76: #{decoder_forward.2} parent=11 // pred_fallthru
        _
      // Predicated region
      $region77: #{decoder_forward.2} parent=11 // pred_check
        %p773 = pneg %p474
      $region78: #{decoder_forward.2} parent=11 // pred_check_branch
        %775 = sbr.rel (%p773) target = $region80
      $region79: #{decoder_forward.2} parent=11 // pred_region
        _
      $region80: #{decoder_forward.2} parent=11 // pred_fallthru
        _
      // Predicated region
      $region81: #{decoder_forward.2} parent=11 // pred_check
        %p776 = pneg %p495
      $region82: #{decoder_forward.2} parent=11 // pred_check_branch
        %778 = sbr.rel (%p776) target = $region84
      $region83: #{decoder_forward.2} parent=11 // pred_region
        _
      $region84: #{decoder_forward.2} parent=11 // pred_fallthru
        _
      // Predicated region
      $region85: #{decoder_forward.2} parent=11 // pred_check
        %p779 = pneg %p516
      $region86: #{decoder_forward.2} parent=11 // pred_check_branch
        %781 = sbr.rel (%p779) target = $region88
      $region87: #{decoder_forward.2} parent=11 // pred_region
        _
      $region88: #{decoder_forward.2} parent=11 // pred_fallthru
        _
      // Predicated region
      $region89: #{decoder_forward.2} parent=11 // pred_check
        %p782 = pneg %p537
      $region90: #{decoder_forward.2} parent=11 // pred_check_branch
        %784 = sbr.rel (%p782) target = $region92
      $region91: #{decoder_forward.2} parent=11 // pred_region
        _
      $region92: #{decoder_forward.2} parent=11 // pred_fallthru
        _
      // Predicated region
      $region93: #{decoder_forward.2} parent=11 // pred_check
        %p785 = pneg %p558
      $region94: #{decoder_forward.2} parent=11 // pred_check_branch
        %787 = sbr.rel (%p785) target = $region96
      $region95: #{decoder_forward.2} parent=11 // pred_region
        _
      $region96: #{decoder_forward.2} parent=11 // pred_fallthru
        _
      // Predicated region
      $region97: #{decoder_forward.2} parent=11 // pred_check
        %p788 = pneg %p579
      $region98: #{decoder_forward.2} parent=11 // pred_check_branch
        %790 = sbr.rel (%p788) target = $region100
      $region99: #{decoder_forward.2} parent=11 // pred_region
        _
      $region100: #{decoder_forward.2} parent=11 // pred_fallthru
        _
      // Predicated region
      $region101: #{decoder_forward.2} parent=11 // pred_check
        %p791 = pneg %p600
      $region102: #{decoder_forward.2} parent=11 // pred_check_branch
        %793 = sbr.rel (%p791) target = $region104
      $region103: #{decoder_forward.2} parent=11 // pred_region
        _
      $region104: #{decoder_forward.2} parent=11 // pred_fallthru
        _
      // Predicated region
      $region105: #{decoder_forward.2} parent=11 // pred_check
        %p794 = pneg %p621
      $region106: #{decoder_forward.2} parent=11 // pred_check_branch
        %796 = sbr.rel (%p794) target = $region108
      $region107: #{decoder_forward.2} parent=11 // pred_region
        _
      $region108: #{decoder_forward.2} parent=11 // pred_fallthru
        _
      // Predicated region
      $region109: #{decoder_forward.2} parent=11 // pred_check
        %p797 = pneg %p642
      $region110: #{decoder_forward.2} parent=11 // pred_check_branch
        %799 = sbr.rel (%p797) target = $region112
      $region111: #{decoder_forward.2} parent=11 // pred_region
        _
      $region112: #{decoder_forward.2} parent=11 // pred_fallthru
        _
      // Predicated region
      $region113: #{decoder_forward.2} parent=11 // pred_check
        %p800 = pneg %p663
      $region114: #{decoder_forward.2} parent=11 // pred_check_branch
        %802 = sbr.rel (%p800) target = $region116
      $region115: #{decoder_forward.2} parent=11 // pred_region
        _
      $region116: #{decoder_forward.2} parent=11 // pred_fallthru
        _
      // Predicated region
      $region117: #{decoder_forward.2} parent=11 // pred_check
        %p803 = pneg %p684
      $region118: #{decoder_forward.2} parent=11 // pred_check_branch
        %805 = sbr.rel (%p803) target = $region120
      $region119: #{decoder_forward.2} parent=11 // pred_region
        _
      $region120: #{decoder_forward.2} parent=11 // pred_fallthru
        _
    $region12: #{decoder_forward.2} parent=5 // pred_fallthru
      _
    %p806 = scmp.lt.s32.totalorder %s65, 2
    // Predicated region
    $region121: #{decoder_forward.2} parent=5 // pred_check
      %p807 = pneg %p806
    $region122: #{decoder_forward.2} parent=5 // pred_check_branch
      %809 = sbr.rel (%p807) target = $region124
    $region123: #{decoder_forward.2} parent=5 // pred_region
      // Predicated region
      $region125: #{decoder_forward.2} parent=123 // pred_check
        %p810 = pneg %p85
      $region126: #{decoder_forward.2} parent=123 // pred_check_branch
        %812 = sbr.rel (%p810) target = $region128
      $region127: #{decoder_forward.2} parent=123 // pred_region
        %p813 = scmp.lt.s32.totalorder %s65, 1
        %s814 = scalar_select %p813, %s65, 1
        %s815 = smul.addr %s814, 8
        %s816 = scalar_lea.vmem %s1, %s815
      $region128: #{decoder_forward.2} parent=123 // pred_fallthru
        _
      // Predicated region
      $region129: #{decoder_forward.2} parent=123 // pred_check
        %p817 = pneg %p111
      $region130: #{decoder_forward.2} parent=123 // pred_check_branch
        %819 = sbr.rel (%p817) target = $region132
      $region131: #{decoder_forward.2} parent=123 // pred_region
        %p820 = scmp.lt.s32.totalorder %s65, 1
        %s821 = scalar_select %p820, %s65, 1
        %s822 = smul.addr %s821, 8
        %s823 = scalar_lea.vmem %s3, %s822
      $region132: #{decoder_forward.2} parent=123 // pred_fallthru
        _
    $region124: #{decoder_forward.2} parent=5 // pred_fallthru
      _
    %p824 = scmp.le.s32.totalorder 1, %s65
    %p825 = scmp.lt.s32.totalorder %s65, 3
    %p826 = pnand %p824, %p825
    %p827 = pneg %p826
    // Predicated region
    $region133: #{decoder_forward.2} parent=5 // pred_check
      _
    $region134: #{decoder_forward.2} parent=5 // pred_check_branch
      %829 = sbr.rel (%p826) target = $region136
    $region135: #{decoder_forward.2} parent=5 // pred_region
      %s830 = ssub.s32 %s65, 1
      %p831 = scmp.lt.s32.totalorder %s70, 1
      %s832 = scalar_select %p831, %s70, 1
      %s833 = smul.addr %s832, 8
      %s834 = scalar_lea.vmem %s1, %s833
      %p835 = pneg %p91
      %p836 = pneg %p88
      %p837 = scmp.lt.s32.totalorder %s70, 1
      %s838 = scalar_select %p837, %s70, 1
      %s839 = smul.addr %s838, 8
      %s840 = scalar_lea.vmem %s3, %s839
      %p841 = pneg %p117
      %p842 = pneg %p114
      %p843 = pneg %p138
      %p844 = pneg %p135
      %p845 = pneg %p159
      %p846 = pneg %p156
      %p847 = pneg %p180
      %p848 = pneg %p177
      %p849 = pneg %p201
      %p850 = pneg %p198
      %p851 = pneg %p222
      %p852 = pneg %p219
      %p853 = pneg %p243
      %p854 = pneg %p240
      %p855 = pneg %p264
      %p856 = pneg %p261
      %p857 = pneg %p285
      %p858 = pneg %p282
      %p859 = pneg %p306
      %p860 = pneg %p303
      %p861 = pneg %p327
      %p862 = pneg %p324
      %p863 = pneg %p348
      %p864 = pneg %p345
      %p865 = pneg %p369
      %p866 = pneg %p366
      %p867 = pneg %p390
      %p868 = pneg %p387
      %p869 = pneg %p411
      %p870 = pneg %p408
      %p871 = pneg %p432
      %p872 = pneg %p429
      %p873 = pneg %p453
      %p874 = pneg %p450
      %p875 = pneg %p474
      %p876 = pneg %p471
      %p877 = pneg %p495
      %p878 = pneg %p492
      %p879 = pneg %p516
      %p880 = pneg %p513
      %p881 = pneg %p537
      %p882 = pneg %p534
      %p883 = pneg %p558
      %p884 = pneg %p555
      %p885 = pneg %p579
      %p886 = pneg %p576
      %p887 = pneg %p600
      %p888 = pneg %p597
      %p889 = pneg %p621
      %p890 = pneg %p618
      %p891 = pneg %p642
      %p892 = pneg %p639
      %p893 = pneg %p663
      %p894 = pneg %p660
      %p895 = pneg %p684
      %p896 = pneg %p681
      %p897 = pneg %p710
      %p898 = pneg %p707
      %p899 = scmp.lt.s32.totalorder %s70, 1
      %s900 = scalar_select %p899, %s70, 1
      %s901 = smul.addr %s900, 8
      %s902 = scalar_lea.vmem %s59, %s901
      %p903 = scmp.lt.s32.totalorder %s70, 1
      %s904 = scalar_select %p903, %s70, 1
      %s905 = smul.addr %s904, 8
      %s906 = scalar_lea.vmem %s1, %s905
      %p907 = scmp.lt.s32.totalorder %s70, 1
      %s908 = scalar_select %p907, %s70, 1
      %s909 = smul.addr %s908, 8
      %s910 = scalar_lea.vmem %s3, %s909
      %p911 = scmp.lt.s32.totalorder %s70, 1
      %s912 = scalar_select %p911, %s70, 1
      %s913 = smul.addr %s912, 8
      %s914 = scalar_lea.vmem %s59, %s913
      %v916 = vld [vmem:[%s910] sm:$0xff]
      %v917 = vld [vmem:[%s906] sm:$0xff]
      %v918 = vld [vmem:[%s5] sm:$0xff]
      %v919 = vld [vmem:[%s7] sm:$0xf]
      %v920 = vld [vmem:[%s7 + $0x4] sm:$0xf]
      %v921 = vld [vmem:[%s7 + $0x8] sm:$0xf]
      %v922 = vld [vmem:[%s7 + $0xc] sm:$0xf]
      %v923 = vld [vmem:[%s9] sm:$0x1]
      %v924 = vld [vmem:[%s11] sm:$0xf]
      %v925 = vld [vmem:[%s11 + $0x4] sm:$0xf]
      %v926 = vld [vmem:[%s11 + $0x8] sm:$0xf]
      %v927 = vld [vmem:[%s11 + $0xc] sm:$0xf]
      %v928 = vld [vmem:[%s13] sm:$0x1]
      %v929 = vld [vmem:[%s15] sm:$0xf]
      %v930 = vld [vmem:[%s15 + $0x4] sm:$0xf]
      %v931 = vld [vmem:[%s15 + $0x8] sm:$0xf]
      %v932 = vld [vmem:[%s15 + $0xc] sm:$0xf]
      %v933 = vld [vmem:[%s17] sm:$0x1]
      %v934 = vld [vmem:[%s19] sm:$0xf]
      %v935 = vld [vmem:[%s19 + $0x4] sm:$0xf]
      %v936 = vld [vmem:[%s19 + $0x8] sm:$0xf]
      %v937 = vld [vmem:[%s19 + $0xc] sm:$0xf]
      %v938 = vld [vmem:[%s21] sm:$0x1]
      %v939 = vld [vmem:[%s23] sm:$0x1]
      %v940 = vld [vmem:[%s25] sm:$0x1]
      %v941 = vpack.c.bf16 %v916, %v916
      %v943 = vperm.slane %v923, 0
      %v949 = vunpack.c.l.b16 %v919
      %v950 = vunpack.c.l.b16 %v920
      %v951 = vunpack.c.l.b16 %v921
      %v952 = vunpack.c.l.b16 %v922
      %v953 = vpack.c.b16 %v950, %v949
      %v954 = vpack.c.b16 %v952, %v951
      %vm957 = vcmask 261120
      %v959 = vsel %vm957, %v941, 0
      %961 = vmatpush.bf16.msra.mxu0 0
      %962 = vmatpush.bf16.msra.mxu0 0
      %963 = vmatpush.bf16.msra.mxu0 0
      %964 = vmatpush.bf16.msra.mxu0 0
      %965 = vmatpush.bf16.msra.mxu0 0
      %966 = vmatpush.bf16.msra.mxu0 0
      %967 = vmatpush.bf16.msra.mxu0 %v954
      %968 = vmatpush.bf16.msra.mxu0 %v953
      %969 = vmatmul.bf16.gmra.mxu0 %v959
      %v970 = vpop.f32.mrf.mxu0
      %v971 = vadd.f32 %v943, %v970
      %v972 = vpop.f32.mrf.mxu0
      %973 = vdwg.mxu0
      %v975 = vperm.slane %v928, 0
      %v981 = vunpack.c.l.b16 %v924
      %v982 = vunpack.c.l.b16 %v925
      %v983 = vunpack.c.l.b16 %v926
      %v984 = vunpack.c.l.b16 %v927
      %v985 = vpack.c.b16 %v982, %v981
      %v986 = vpack.c.b16 %v984, %v983
      %989 = vmatpush.bf16.msra.mxu0 0
      %990 = vmatpush.bf16.msra.mxu0 0
      %991 = vmatpush.bf16.msra.mxu0 0
      %992 = vmatpush.bf16.msra.mxu0 0
      %993 = vmatpush.bf16.msra.mxu0 0
      %994 = vmatpush.bf16.msra.mxu0 0
      %995 = vmatpush.bf16.msra.mxu0 %v986
      %996 = vmatpush.bf16.msra.mxu0 %v985
      %997 = vmatmul.bf16.gmra.mxu0 %v959
      %v998 = vpop.f32.mrf.mxu0
      %v999 = vadd.f32 %v975, %v998
      %v1000 = vpop.f32.mrf.mxu0
      %1001 = vdwg.mxu0
      %v1003 = vperm.slane %v933, 0
      %v1009 = vunpack.c.l.b16 %v929
      %v1010 = vunpack.c.l.b16 %v930
      %v1011 = vunpack.c.l.b16 %v931
      %v1012 = vunpack.c.l.b16 %v932
      %v1013 = vpack.c.b16 %v1010, %v1009
      %v1014 = vpack.c.b16 %v1012, %v1011
      %1017 = vmatpush.bf16.msra.mxu0 0
      %1018 = vmatpush.bf16.msra.mxu0 0
      %1019 = vmatpush.bf16.msra.mxu0 0
      %1020 = vmatpush.bf16.msra.mxu0 0
      %1021 = vmatpush.bf16.msra.mxu0 0
      %1022 = vmatpush.bf16.msra.mxu0 0
      %1023 = vmatpush.bf16.msra.mxu0 %v1014
      %1024 = vmatpush.bf16.msra.mxu0 %v1013
      %1025 = vmatmul.bf16.gmra.mxu0 %v959
      %v1026 = vpop.f32.mrf.mxu0
      %v1027 = vadd.f32 %v1003, %v1026
      %v1028 = vpop.f32.mrf.mxu0
      %1029 = vdwg.mxu0
      %1031 = vrot.lane.b32.xlu0 %v971, 120
      %v1032 = vpop.permute.xlu0 %1031
      %1034 = vrot.lane.b32.xlu0 %v971, 112
      %v1035 = vpop.permute.xlu0 %1034
      %1037 = vrot.lane.b32.xlu0 %v971, 104
      %v1038 = vpop.permute.xlu0 %1037
      %v1040 = vpack.c.bf16 %v971, %v971
      %v1041 = vpack.c.bf16 %v1032, %v1032
      %v1042 = vpack.c.bf16 %v1035, %v1035
      %v1043 = vpack.c.bf16 %v1038, %v1038
      %1045 = vrot.lane.b32.xlu0 %v999, 120
      %v1046 = vpop.permute.xlu0 %1045
      %1048 = vrot.lane.b32.xlu0 %v999, 112
      %v1049 = vpop.permute.xlu0 %1048
      %1051 = vrot.lane.b32.xlu0 %v999, 104
      %v1052 = vpop.permute.xlu0 %1051
      %v1054 = vpack.c.bf16 %v999, %v999
      %v1055 = vpack.c.bf16 %v1046, %v1046
      %v1056 = vpack.c.bf16 %v1049, %v1049
      %v1057 = vpack.c.bf16 %v1052, %v1052
      %1059 = vrot.lane.b32.xlu0 %v1027, 120
      %v1060 = vpop.permute.xlu0 %1059
      %1062 = vrot.lane.b32.xlu0 %v1027, 112
      %v1063 = vpop.permute.xlu0 %1062
      %1065 = vrot.lane.b32.xlu0 %v1027, 104
      %v1066 = vpop.permute.xlu0 %1065
      %v1068 = vpack.c.bf16 %v1027, %v1027
      %v1069 = vpack.c.bf16 %v1060, %v1060
      %v1070 = vpack.c.bf16 %v1063, %v1063
      %v1071 = vpack.c.bf16 %v1066, %v1066
      %vm1072 = vcmask 64512
      %v1074 = vsel %vm1072, %v1040, 0
      %v1077 = vsel %vm1072, %v1054, 0
      %1079 = vmatpush.bf16.xpose.msra.mxu0 0
      %1080 = vmatpush.bf16.xpose.msra.mxu0 0
      %1081 = vmatpush.bf16.xpose.msra.mxu0 0
      %1082 = vmatpush.bf16.xpose.msra.mxu0 0
      %1083 = vmatpush.bf16.xpose.msra.mxu0 0
      %1084 = vmatpush.bf16.xpose.msra.mxu0 0
      %1085 = vmatpush.bf16.xpose.msra.mxu0 0
      %1086 = vmatpush.bf16.xpose.msra.mxu0 %v1077
      %1087 = vmatmul.bf16.gmra.mxu0 %v1074
      %v1088 = vpop.f32.mrf.mxu0
      %v1089 = vadd.f32 0.0, %v1088
      %v1090 = vpop.f32.mrf.mxu0
      %1091 = vdwg.mxu0
      %v1093 = vsel %vm1072, %v1041, 0
      %v1096 = vsel %vm1072, %v1055, 0
      %1098 = vmatpush.bf16.xpose.msra.mxu0 0
      %1099 = vmatpush.bf16.xpose.msra.mxu0 0
      %1100 = vmatpush.bf16.xpose.msra.mxu0 0
      %1101 = vmatpush.bf16.xpose.msra.mxu0 0
      %1102 = vmatpush.bf16.xpose.msra.mxu0 0
      %1103 = vmatpush.bf16.xpose.msra.mxu0 0
      %1104 = vmatpush.bf16.xpose.msra.mxu0 0
      %1105 = vmatpush.bf16.xpose.msra.mxu0 %v1096
      %1106 = vmatmul.bf16.gmra.mxu0 %v1093
      %v1107 = vpop.f32.mrf.mxu0
      %v1108 = vadd.f32 0.0, %v1107
      %v1109 = vpop.f32.mrf.mxu0
      %1110 = vdwg.mxu0
      %v1112 = vsel %vm1072, %v1042, 0
      %v1115 = vsel %vm1072, %v1056, 0
      %1117 = vmatpush.bf16.xpose.msra.mxu0 0
      %1118 = vmatpush.bf16.xpose.msra.mxu0 0
      %1119 = vmatpush.bf16.xpose.msra.mxu0 0
      %1120 = vmatpush.bf16.xpose.msra.mxu0 0
      %1121 = vmatpush.bf16.xpose.msra.mxu0 0
      %1122 = vmatpush.bf16.xpose.msra.mxu0 0
      %1123 = vmatpush.bf16.xpose.msra.mxu0 0
      %1124 = vmatpush.bf16.xpose.msra.mxu0 %v1115
      %1125 = vmatmul.bf16.gmra.mxu0 %v1112
      %v1126 = vpop.f32.mrf.mxu0
      %v1127 = vadd.f32 0.0, %v1126
      %v1128 = vpop.f32.mrf.mxu0
      %1129 = vdwg.mxu0
      %v1131 = vsel %vm1072, %v1043, 0
      %v1134 = vsel %vm1072, %v1057, 0
      %1136 = vmatpush.bf16.xpose.msra.mxu0 0
      %1137 = vmatpush.bf16.xpose.msra.mxu0 0
      %1138 = vmatpush.bf16.xpose.msra.mxu0 0
      %1139 = vmatpush.bf16.xpose.msra.mxu0 0
      %1140 = vmatpush.bf16.xpose.msra.mxu0 0
      %1141 = vmatpush.bf16.xpose.msra.mxu0 0
      %1142 = vmatpush.bf16.xpose.msra.mxu0 0
      %1143 = vmatpush.bf16.xpose.msra.mxu0 %v1134
      %1144 = vmatmul.bf16.gmra.mxu0 %v1131
      %v1145 = vpop.f32.mrf.mxu0
      %v1146 = vadd.f32 0.0, %v1145
      %v1147 = vpop.f32.mrf.mxu0
      %1148 = vdwg.mxu0
      %v1149 = vmul.f32 %v1089, 0.35355338
      %v1150 = vmul.f32 %v1108, 0.35355338
      %v1151 = vmul.f32 %v1127, 0.35355338
      %v1152 = vmul.f32 %v1146, 0.35355338
      %v1153 = vadd.f32 %v1149, %v918
      %v1154 = vadd.f32 %v1150, %v918
      %v1155 = vadd.f32 %v1151, %v918
      %v1156 = vadd.f32 %v1152, %v918
      %v1157 = vsel %vm1072, %v1153, -inf
      %1158 = vmax.xlane.f32.xlu0 %v1157
      %v1159 = vpop.xlane.xlu0 %1158
      %v1160 = vsel %vm1072, %v1154, -inf
      %1161 = vmax.xlane.f32.xlu0 %v1160
      %v1162 = vpop.xlane.xlu0 %1161
      %v1163 = vsel %vm1072, %v1155, -inf
      %1164 = vmax.xlane.f32.xlu0 %v1163
      %v1165 = vpop.xlane.xlu0 %1164
      %v1166 = vsel %vm1072, %v1156, -inf
      %1167 = vmax.xlane.f32.xlu0 %v1166
      %v1168 = vpop.xlane.xlu0 %1167
      %v1169 = vsub.f32 %v1153, %v1159
      %v1170 = vsub.f32 %v1154, %v1162
      %v1171 = vsub.f32 %v1155, %v1165
      %v1172 = vsub.f32 %v1156, %v1168
      %v1173 = vmul.f32 %v1169, 1.442695
      %v1174 = vpow.pop %v1173
      %v1175 = vmul.f32 %v1170, 1.442695
      %v1176 = vpow.pop %v1175
      %v1177 = vmul.f32 %v1171, 1.442695
      %v1178 = vpow.pop %v1177
      %v1179 = vmul.f32 %v1172, 1.442695
      %v1180 = vpow.pop %v1179
      %v1181 = vsel %vm1072, %v1174, 0.0
      %1182 = vadd.xlane.f32.xlu0 %v1181
      %v1183 = vpop.xlane.xlu0 %1182
      %v1184 = vsel %vm1072, %v1176, 0.0
      %1185 = vadd.xlane.f32.xlu0 %v1184
      %v1186 = vpop.xlane.xlu0 %1185
      %v1187 = vsel %vm1072, %v1178, 0.0
      %1188 = vadd.xlane.f32.xlu0 %v1187
      %v1189 = vpop.xlane.xlu0 %1188
      %v1190 = vsel %vm1072, %v1180, 0.0
      %1191 = vadd.xlane.f32.xlu0 %v1190
      %v1192 = vpop.xlane.xlu0 %1191
      %v1193 = vrcp.pop %v1183
      %v1194 = vrcp.pop %v1186
      %v1195 = vrcp.pop %v1189
      %v1196 = vrcp.pop %v1192
      %v1197 = vmul.f32 %v1174, %v1193
      %v1198 = vmul.f32 %v1176, %v1194
      %v1199 = vmul.f32 %v1178, %v1195
      %v1200 = vmul.f32 %v1180, %v1196
      %v1201 = vpack.c.bf16 %v1197, %v1197
      %v1202 = vpack.c.bf16 %v1198, %v1198
      %v1203 = vpack.c.bf16 %v1199, %v1199
      %v1204 = vpack.c.bf16 %v1200, %v1200
      %v1206 = vsel %vm1072, %v1201, 0
      %vm1208 = vcmask 1043456
      %v1210 = vsel %vm1208, %v1068, 0
      %1212 = vmatpush.bf16.msra.mxu0 0
      %1213 = vmatpush.bf16.msra.mxu0 0
      %1214 = vmatpush.bf16.msra.mxu0 0
      %1215 = vmatpush.bf16.msra.mxu0 0
      %1216 = vmatpush.bf16.msra.mxu0 0
      %1217 = vmatpush.bf16.msra.mxu0 0
      %1218 = vmatpush.bf16.msra.mxu0 0
      %1219 = vmatpush.bf16.msra.mxu0 %v1210
      %1220 = vmatmul.bf16.gmra.mxu0 %v1206
      %v1221 = vpop.f32.mrf.mxu0
      %v1222 = vadd.f32 0.0, %v1221
      %v1223 = vpop.f32.mrf.mxu0
      %1224 = vdwg.mxu0
      %v1226 = vsel %vm1072, %v1202, 0
      %v1229 = vsel %vm1208, %v1069, 0
      %1231 = vmatpush.bf16.msra.mxu0 0
      %1232 = vmatpush.bf16.msra.mxu0 0
      %1233 = vmatpush.bf16.msra.mxu0 0
      %1234 = vmatpush.bf16.msra.mxu0 0
      %1235 = vmatpush.bf16.msra.mxu0 0
      %1236 = vmatpush.bf16.msra.mxu0 0
      %1237 = vmatpush.bf16.msra.mxu0 0
      %1238 = vmatpush.bf16.msra.mxu0 %v1229
      %1239 = vmatmul.bf16.gmra.mxu0 %v1226
      %v1240 = vpop.f32.mrf.mxu0
      %v1241 = vadd.f32 0.0, %v1240
      %v1242 = vpop.f32.mrf.mxu0
      %1243 = vdwg.mxu0
      %v1245 = vsel %vm1072, %v1203, 0
      %v1248 = vsel %vm1208, %v1070, 0
      %1250 = vmatpush.bf16.msra.mxu0 0
      %1251 = vmatpush.bf16.msra.mxu0 0
      %1252 = vmatpush.bf16.msra.mxu0 0
      %1253 = vmatpush.bf16.msra.mxu0 0
      %1254 = vmatpush.bf16.msra.mxu0 0
      %1255 = vmatpush.bf16.msra.mxu0 0
      %1256 = vmatpush.bf16.msra.mxu0 0
      %1257 = vmatpush.bf16.msra.mxu0 %v1248
      %1258 = vmatmul.bf16.gmra.mxu0 %v1245
      %v1259 = vpop.f32.mrf.mxu0
      %v1260 = vadd.f32 0.0, %v1259
      %v1261 = vpop.f32.mrf.mxu0
      %1262 = vdwg.mxu0
      %v1264 = vsel %vm1072, %v1204, 0
      %v1267 = vsel %vm1208, %v1071, 0
      %1269 = vmatpush.bf16.msra.mxu0 0
      %1270 = vmatpush.bf16.msra.mxu0 0
      %1271 = vmatpush.bf16.msra.mxu0 0
      %1272 = vmatpush.bf16.msra.mxu0 0
      %1273 = vmatpush.bf16.msra.mxu0 0
      %1274 = vmatpush.bf16.msra.mxu0 0
      %1275 = vmatpush.bf16.msra.mxu0 0
      %1276 = vmatpush.bf16.msra.mxu0 %v1267
      %1277 = vmatmul.bf16.gmra.mxu0 %v1264
      %v1278 = vpop.f32.mrf.mxu0
      %v1279 = vadd.f32 0.0, %v1278
      %v1280 = vpop.f32.mrf.mxu0
      %1281 = vdwg.mxu0
      %1282 = vst.msk [vmem:[#allocation2] sm:$0xff] %vm1072, %v1222
      %1283 = vst.msk [vmem:[#allocation2 + $0x8] sm:$0xff] %vm1072, %v1241
      %1284 = vst.msk [vmem:[#allocation2 + $0x10] sm:$0xff] %vm1072, %v1260
      %1285 = vst.msk [vmem:[#allocation2 + $0x18] sm:$0xff] %vm1072, %v1279
      %v1286 = vld [vmem:[#allocation2] ss:$4 sm:$0xff]
      %s1287 = scalar_lea.vmem [#allocation2], 1
      %v1288 = vld [vmem:[%s1287] ss:$4 sm:$0xff]
      %s1289 = scalar_lea.vmem [#allocation2], 2
      %v1290 = vld [vmem:[%s1289] ss:$4 sm:$0xff]
      %s1291 = scalar_lea.vmem [#allocation2], 3
      %v1292 = vld [vmem:[%s1291] ss:$4 sm:$0xff]
      %1294 = vrot.lane.b32.xlu0 %v1288, 8
      %v1295 = vpop.permute.xlu0 %1294
      %1298 = vrot.lane.b32.xlu0 %v1290, 16
      %v1299 = vpop.permute.xlu0 %1298
      %1302 = vrot.lane.b32.xlu0 %v1292, 24
      %v1303 = vpop.permute.xlu0 %1302
      %v1305 = vsel %vm1072, %v1286, %v1295
      %vm1306 = vcmask 130048
      %v1307 = vsel %vm1306, %v1305, %v1299
      %vm1308 = vcmask 195584
      %v1309 = vsel %vm1308, %v1307, %v1303
      %v1310 = vpack.c.bf16 %v1309, %v1309
      %v1312 = vperm.slane %v938, 0
      %v1318 = vunpack.c.l.b16 %v934
      %v1319 = vunpack.c.l.b16 %v935
      %v1320 = vunpack.c.l.b16 %v936
      %v1321 = vunpack.c.l.b16 %v937
      %v1322 = vpack.c.b16 %v1319, %v1318
      %v1323 = vpack.c.b16 %v1321, %v1320
      %v1327 = vsel %vm957, %v1310, 0
      %1329 = vmatpush.bf16.msra.mxu0 0
      %1330 = vmatpush.bf16.msra.mxu0 0
      %1331 = vmatpush.bf16.msra.mxu0 0
      %1332 = vmatpush.bf16.msra.mxu0 0
      %1333 = vmatpush.bf16.msra.mxu0 0
      %1334 = vmatpush.bf16.msra.mxu0 0
      %1335 = vmatpush.bf16.msra.mxu0 %v1323
      %1336 = vmatpush.bf16.msra.mxu0 %v1322
      %1337 = vmatmul.bf16.gmra.mxu0 %v1327
      %v1338 = vpop.f32.mrf.mxu0
      %v1339 = vadd.f32 %v1312, %v1338
      %v1340 = vpop.f32.mrf.mxu0
      %1341 = vdwg.mxu0
      %v1342 = vadd.f32 %v1339, %v916
      %v1343 = vsel %vm957, %v1342, 0.0
      %1344 = vadd.xlane.f32.xlu0 %v1343
      %v1345 = vpop.xlane.xlu0 %1344
      %v1346 = vrcp.pop 32.0
      %v1347 = vmul.f32 32.0, %v1346
      %v1348 = vsub.f32 1.0, %v1347
      %v1349 = vmul.f32 %v1346, %v1348
      %v1350 = vadd.f32 %v1346, %v1349
      %vm1351 = vweird.f32 %v1346
      %v1352 = vsel %vm1351, %v1346, %v1350
      %v1353 = vmul.f32 %v1345, %v1352
      %v1354 = vsub.f32 %v1342, %v1353
      %v1355 = vmul.f32 %v1354, %v1354
      %v1356 = vsel %vm957, %v1355, 0.0
      %1357 = vadd.xlane.f32.xlu0 %v1356
      %v1358 = vpop.xlane.xlu0 %1357
      %v1359 = vmul.f32 %v1358, %v1352
      %v1360 = vadd.f32 %v1359, 1e-05
      %v1361 = vrsqrt.pop %v1360
      %v1362 = vmul.f32 %v1361, %v1360
      %v1363 = vmul.f32 %v1362, %v1361
      %v1364 = vmul.f32 0.5, %v1363
      %v1365 = vsub.f32 1.5, %v1364
      %v1366 = vmul.f32 %v1361, %v1365
      %vm1367 = vweird.f32 %v1360
      %vm1368 = vweird.f32 %v1361
      %vm1369 = vmor %vm1367, %vm1368
      %v1370 = vsel %vm1369, %v1361, %v1366
      %v1371 = vmul.f32 %v1354, %v1370
      %v1373 = vperm.slane %v939, 0
      %v1375 = vmul.f32 %v1373, %v1371
      %v1377 = vperm.slane %v940, 0
      %v1379 = vadd.f32 %v1375, %v1377
      %v1380 = vld [vmem:[%s27] sm:$0xf]
      %v1381 = vld [vmem:[%s27 + $0x4] sm:$0xf]
      %v1382 = vld [vmem:[%s27 + $0x8] sm:$0xf]
      %v1383 = vld [vmem:[%s27 + $0xc] sm:$0xf]
      %v1384 = vld [vmem:[%s29] sm:$0x1]
      %v1385 = vld [vmem:[%s31] sm:$0xf]
      %v1386 = vld [vmem:[%s31 + $0x4] sm:$0xf]
      %v1387 = vld [vmem:[%s31 + $0x8] sm:$0xf]
      %v1388 = vld [vmem:[%s31 + $0xc] sm:$0xf]
      %v1389 = vld [vmem:[%s33] sm:$0x1]
      %v1390 = vld [vmem:[%s35] sm:$0xf]
      %v1391 = vld [vmem:[%s35 + $0x4] sm:$0xf]
      %v1392 = vld [vmem:[%s35 + $0x8] sm:$0xf]
      %v1393 = vld [vmem:[%s35 + $0xc] sm:$0xf]
      %v1394 = vld [vmem:[%s37] sm:$0x1]
      %v1395 = vld [vmem:[%s39] sm:$0xf]
      %v1396 = vld [vmem:[%s39 + $0x4] sm:$0xf]
      %v1397 = vld [vmem:[%s39 + $0x8] sm:$0xf]
      %v1398 = vld [vmem:[%s39 + $0xc] sm:$0xf]
      %v1399 = vld [vmem:[%s41] sm:$0x1]
      %v1400 = vld [vmem:[%s43] sm:$0x1]
      %v1401 = vld [vmem:[%s45] sm:$0x1]
      %v1402 = vpack.c.bf16 %v1379, %v1379
      %v1403 = vpack.c.bf16 %v917, %v917
      %v1405 = vperm.slane %v1384, 0
      %v1411 = vunpack.c.l.b16 %v1380
      %v1412 = vunpack.c.l.b16 %v1381
      %v1413 = vunpack.c.l.b16 %v1382
      %v1414 = vunpack.c.l.b16 %v1383
      %v1415 = vpack.c.b16 %v1412, %v1411
      %v1416 = vpack.c.b16 %v1414, %v1413
      %v1420 = vsel %vm957, %v1403, 0
      %1422 = vmatpush.bf16.msra.mxu0 0
      %1423 = vmatpush.bf16.msra.mxu0 0
      %1424 = vmatpush.bf16.msra.mxu0 0
      %1425 = vmatpush.bf16.msra.mxu0 0
      %1426 = vmatpush.bf16.msra.mxu0 0
      %1427 = vmatpush.bf16.msra.mxu0 0
      %1428 = vmatpush.bf16.msra.mxu0 %v1416
      %1429 = vmatpush.bf16.msra.mxu0 %v1415
      %1430 = vmatmul.bf16.gmra.mxu0 %v1420
      %v1431 = vpop.f32.mrf.mxu0
      %v1432 = vadd.f32 %v1405, %v1431
      %v1433 = vpop.f32.mrf.mxu0
      %1434 = vdwg.mxu0
      %v1436 = vperm.slane %v1389, 0
      %v1442 = vunpack.c.l.b16 %v1385
      %v1443 = vunpack.c.l.b16 %v1386
      %v1444 = vunpack.c.l.b16 %v1387
      %v1445 = vunpack.c.l.b16 %v1388
      %v1446 = vpack.c.b16 %v1443, %v1442
      %v1447 = vpack.c.b16 %v1445, %v1444
      %v1451 = vsel %vm957, %v1402, 0
      %1453 = vmatpush.bf16.msra.mxu0 0
      %1454 = vmatpush.bf16.msra.mxu0 0
      %1455 = vmatpush.bf16.msra.mxu0 0
      %1456 = vmatpush.bf16.msra.mxu0 0
      %1457 = vmatpush.bf16.msra.mxu0 0
      %1458 = vmatpush.bf16.msra.mxu0 0
      %1459 = vmatpush.bf16.msra.mxu0 %v1447
      %1460 = vmatpush.bf16.msra.mxu0 %v1446
      %1461 = vmatmul.bf16.gmra.mxu0 %v1451
      %v1462 = vpop.f32.mrf.mxu0
      %v1463 = vadd.f32 %v1436, %v1462
      %v1464 = vpop.f32.mrf.mxu0
      %1465 = vdwg.mxu0
      %v1467 = vperm.slane %v1394, 0
      %v1473 = vunpack.c.l.b16 %v1390
      %v1474 = vunpack.c.l.b16 %v1391
      %v1475 = vunpack.c.l.b16 %v1392
      %v1476 = vunpack.c.l.b16 %v1393
      %v1477 = vpack.c.b16 %v1474, %v1473
      %v1478 = vpack.c.b16 %v1476, %v1475
      %1481 = vmatpush.bf16.msra.mxu0 0
      %1482 = vmatpush.bf16.msra.mxu0 0
      %1483 = vmatpush.bf16.msra.mxu0 0
      %1484 = vmatpush.bf16.msra.mxu0 0
      %1485 = vmatpush.bf16.msra.mxu0 0
      %1486 = vmatpush.bf16.msra.mxu0 0
      %1487 = vmatpush.bf16.msra.mxu0 %v1478
      %1488 = vmatpush.bf16.msra.mxu0 %v1477
      %1489 = vmatmul.bf16.gmra.mxu0 %v1451
      %v1490 = vpop.f32.mrf.mxu0
      %v1491 = vadd.f32 %v1467, %v1490
      %v1492 = vpop.f32.mrf.mxu0
      %1493 = vdwg.mxu0
      %1495 = vrot.lane.b32.xlu0 %v1432, 120
      %v1496 = vpop.permute.xlu0 %1495
      %1498 = vrot.lane.b32.xlu0 %v1432, 112
      %v1499 = vpop.permute.xlu0 %1498
      %1501 = vrot.lane.b32.xlu0 %v1432, 104
      %v1502 = vpop.permute.xlu0 %1501
      %v1504 = vpack.c.bf16 %v1432, %v1432
      %v1505 = vpack.c.bf16 %v1496, %v1496
      %v1506 = vpack.c.bf16 %v1499, %v1499
      %v1507 = vpack.c.bf16 %v1502, %v1502
      %1509 = vrot.lane.b32.xlu0 %v1463, 120
      %v1510 = vpop.permute.xlu0 %1509
      %1512 = vrot.lane.b32.xlu0 %v1463, 112
      %v1513 = vpop.permute.xlu0 %1512
      %1515 = vrot.lane.b32.xlu0 %v1463, 104
      %v1516 = vpop.permute.xlu0 %1515
      %v1518 = vpack.c.bf16 %v1463, %v1463
      %v1519 = vpack.c.bf16 %v1510, %v1510
      %v1520 = vpack.c.bf16 %v1513, %v1513
      %v1521 = vpack.c.bf16 %v1516, %v1516
      %1523 = vrot.lane.b32.xlu0 %v1491, 120
      %v1524 = vpop.permute.xlu0 %1523
      %1526 = vrot.lane.b32.xlu0 %v1491, 112
      %v1527 = vpop.permute.xlu0 %1526
      %1529 = vrot.lane.b32.xlu0 %v1491, 104
      %v1530 = vpop.permute.xlu0 %1529
      %v1532 = vpack.c.bf16 %v1491, %v1491
      %v1533 = vpack.c.bf16 %v1524, %v1524
      %v1534 = vpack.c.bf16 %v1527, %v1527
      %v1535 = vpack.c.bf16 %v1530, %v1530
      %v1537 = vsel %vm1072, %v1504, 0
      %v1540 = vsel %vm1072, %v1518, 0
      %1542 = vmatpush.bf16.xpose.msra.mxu0 0
      %1543 = vmatpush.bf16.xpose.msra.mxu0 0
      %1544 = vmatpush.bf16.xpose.msra.mxu0 0
      %1545 = vmatpush.bf16.xpose.msra.mxu0 0
      %1546 = vmatpush.bf16.xpose.msra.mxu0 0
      %1547 = vmatpush.bf16.xpose.msra.mxu0 0
      %1548 = vmatpush.bf16.xpose.msra.mxu0 0
      %1549 = vmatpush.bf16.xpose.msra.mxu0 %v1540
      %1550 = vmatmul.bf16.gmra.mxu0 %v1537
      %v1551 = vpop.f32.mrf.mxu0
      %v1552 = vadd.f32 0.0, %v1551
      %v1553 = vpop.f32.mrf.mxu0
      %1554 = vdwg.mxu0
      %v1556 = vsel %vm1072, %v1505, 0
      %v1559 = vsel %vm1072, %v1519, 0
      %1561 = vmatpush.bf16.xpose.msra.mxu0 0
      %1562 = vmatpush.bf16.xpose.msra.mxu0 0
      %1563 = vmatpush.bf16.xpose.msra.mxu0 0
      %1564 = vmatpush.bf16.xpose.msra.mxu0 0
      %1565 = vmatpush.bf16.xpose.msra.mxu0 0
      %1566 = vmatpush.bf16.xpose.msra.mxu0 0
      %1567 = vmatpush.bf16.xpose.msra.mxu0 0
      %1568 = vmatpush.bf16.xpose.msra.mxu0 %v1559
      %1569 = vmatmul.bf16.gmra.mxu0 %v1556
      %v1570 = vpop.f32.mrf.mxu0
      %v1571 = vadd.f32 0.0, %v1570
      %v1572 = vpop.f32.mrf.mxu0
      %1573 = vdwg.mxu0
      %v1575 = vsel %vm1072, %v1506, 0
      %v1578 = vsel %vm1072, %v1520, 0
      %1580 = vmatpush.bf16.xpose.msra.mxu0 0
      %1581 = vmatpush.bf16.xpose.msra.mxu0 0
      %1582 = vmatpush.bf16.xpose.msra.mxu0 0
      %1583 = vmatpush.bf16.xpose.msra.mxu0 0
      %1584 = vmatpush.bf16.xpose.msra.mxu0 0
      %1585 = vmatpush.bf16.xpose.msra.mxu0 0
      %1586 = vmatpush.bf16.xpose.msra.mxu0 0
      %1587 = vmatpush.bf16.xpose.msra.mxu0 %v1578
      %1588 = vmatmul.bf16.gmra.mxu0 %v1575
      %v1589 = vpop.f32.mrf.mxu0
      %v1590 = vadd.f32 0.0, %v1589
      %v1591 = vpop.f32.mrf.mxu0
      %1592 = vdwg.mxu0
      %v1594 = vsel %vm1072, %v1507, 0
      %v1597 = vsel %vm1072, %v1521, 0
      %1599 = vmatpush.bf16.xpose.msra.mxu0 0
      %1600 = vmatpush.bf16.xpose.msra.mxu0 0
      %1601 = vmatpush.bf16.xpose.msra.mxu0 0
      %1602 = vmatpush.bf16.xpose.msra.mxu0 0
      %1603 = vmatpush.bf16.xpose.msra.mxu0 0
      %1604 = vmatpush.bf16.xpose.msra.mxu0 0
      %1605 = vmatpush.bf16.xpose.msra.mxu0 0
      %1606 = vmatpush.bf16.xpose.msra.mxu0 %v1597
      %1607 = vmatmul.bf16.gmra.mxu0 %v1594
      %v1608 = vpop.f32.mrf.mxu0
      %v1609 = vadd.f32 0.0, %v1608
      %v1610 = vpop.f32.mrf.mxu0
      %1611 = vdwg.mxu0
      %v1612 = vmul.f32 %v1552, 0.35355338
      %v1613 = vmul.f32 %v1571, 0.35355338
      %v1614 = vmul.f32 %v1590, 0.35355338
      %v1615 = vmul.f32 %v1609, 0.35355338
      %v1616 = vsel %vm1072, %v1612, -inf
      %1617 = vmax.xlane.f32.xlu0 %v1616
      %v1618 = vpop.xlane.xlu0 %1617
      %v1619 = vsel %vm1072, %v1613, -inf
      %1620 = vmax.xlane.f32.xlu0 %v1619
      %v1621 = vpop.xlane.xlu0 %1620
      %v1622 = vsel %vm1072, %v1614, -inf
      %1623 = vmax.xlane.f32.xlu0 %v1622
      %v1624 = vpop.xlane.xlu0 %1623
      %v1625 = vsel %vm1072, %v1615, -inf
      %1626 = vmax.xlane.f32.xlu0 %v1625
      %v1627 = vpop.xlane.xlu0 %1626
      %v1628 = vsub.f32 %v1612, %v1618
      %v1629 = vsub.f32 %v1613, %v1621
      %v1630 = vsub.f32 %v1614, %v1624
      %v1631 = vsub.f32 %v1615, %v1627
      %v1632 = vmul.f32 %v1628, 1.442695
      %v1633 = vpow.pop %v1632
      %v1634 = vmul.f32 %v1629, 1.442695
      %v1635 = vpow.pop %v1634
      %v1636 = vmul.f32 %v1630, 1.442695
      %v1637 = vpow.pop %v1636
      %v1638 = vmul.f32 %v1631, 1.442695
      %v1639 = vpow.pop %v1638
      %v1640 = vsel %vm1072, %v1633, 0.0
      %1641 = vadd.xlane.f32.xlu0 %v1640
      %v1642 = vpop.xlane.xlu0 %1641
      %v1643 = vsel %vm1072, %v1635, 0.0
      %1644 = vadd.xlane.f32.xlu0 %v1643
      %v1645 = vpop.xlane.xlu0 %1644
      %v1646 = vsel %vm1072, %v1637, 0.0
      %1647 = vadd.xlane.f32.xlu0 %v1646
      %v1648 = vpop.xlane.xlu0 %1647
      %v1649 = vsel %vm1072, %v1639, 0.0
      %1650 = vadd.xlane.f32.xlu0 %v1649
      %v1651 = vpop.xlane.xlu0 %1650
      %v1652 = vrcp.pop %v1642
      %v1653 = vrcp.pop %v1645
      %v1654 = vrcp.pop %v1648
      %v1655 = vrcp.pop %v1651
      %v1656 = vmul.f32 %v1633, %v1652
      %v1657 = vmul.f32 %v1635, %v1653
      %v1658 = vmul.f32 %v1637, %v1654
      %v1659 = vmul.f32 %v1639, %v1655
      %v1660 = vpack.c.bf16 %v1656, %v1656
      %v1661 = vpack.c.bf16 %v1657, %v1657
      %v1662 = vpack.c.bf16 %v1658, %v1658
      %v1663 = vpack.c.bf16 %v1659, %v1659
      %v1665 = vsel %vm1072, %v1660, 0
      %v1668 = vsel %vm1208, %v1532, 0
      %1670 = vmatpush.bf16.msra.mxu0 0
      %1671 = vmatpush.bf16.msra.mxu0 0
      %1672 = vmatpush.bf16.msra.mxu0 0
      %1673 = vmatpush.bf16.msra.mxu0 0
      %1674 = vmatpush.bf16.msra.mxu0 0
      %1675 = vmatpush.bf16.msra.mxu0 0
      %1676 = vmatpush.bf16.msra.mxu0 0
      %1677 = vmatpush.bf16.msra.mxu0 %v1668
      %1678 = vmatmul.bf16.gmra.mxu0 %v1665
      %v1679 = vpop.f32.mrf.mxu0
      %v1680 = vadd.f32 0.0, %v1679
      %v1681 = vpop.f32.mrf.mxu0
      %1682 = vdwg.mxu0
      %v1684 = vsel %vm1072, %v1661, 0
      %v1687 = vsel %vm1208, %v1533, 0
      %1689 = vmatpush.bf16.msra.mxu0 0
      %1690 = vmatpush.bf16.msra.mxu0 0
      %1691 = vmatpush.bf16.msra.mxu0 0
      %1692 = vmatpush.bf16.msra.mxu0 0
      %1693 = vmatpush.bf16.msra.mxu0 0
      %1694 = vmatpush.bf16.msra.mxu0 0
      %1695 = vmatpush.bf16.msra.mxu0 0
      %1696 = vmatpush.bf16.msra.mxu0 %v1687
      %1697 = vmatmul.bf16.gmra.mxu0 %v1684
      %v1698 = vpop.f32.mrf.mxu0
      %v1699 = vadd.f32 0.0, %v1698
      %v1700 = vpop.f32.mrf.mxu0
      %1701 = vdwg.mxu0
      %v1703 = vsel %vm1072, %v1662, 0
      %v1706 = vsel %vm1208, %v1534, 0
      %1708 = vmatpush.bf16.msra.mxu0 0
      %1709 = vmatpush.bf16.msra.mxu0 0
      %1710 = vmatpush.bf16.msra.mxu0 0
      %1711 = vmatpush.bf16.msra.mxu0 0
      %1712 = vmatpush.bf16.msra.mxu0 0
      %1713 = vmatpush.bf16.msra.mxu0 0
      %1714 = vmatpush.bf16.msra.mxu0 0
      %1715 = vmatpush.bf16.msra.mxu0 %v1706
      %1716 = vmatmul.bf16.gmra.mxu0 %v1703
      %v1717 = vpop.f32.mrf.mxu0
      %v1718 = vadd.f32 0.0, %v1717
      %v1719 = vpop.f32.mrf.mxu0
      %1720 = vdwg.mxu0
      %v1722 = vsel %vm1072, %v1663, 0
      %v1725 = vsel %vm1208, %v1535, 0
      %1727 = vmatpush.bf16.msra.mxu0 0
      %1728 = vmatpush.bf16.msra.mxu0 0
      %1729 = vmatpush.bf16.msra.mxu0 0
      %1730 = vmatpush.bf16.msra.mxu0 0
      %1731 = vmatpush.bf16.msra.mxu0 0
      %1732 = vmatpush.bf16.msra.mxu0 0
      %1733 = vmatpush.bf16.msra.mxu0 0
      %1734 = vmatpush.bf16.msra.mxu0 %v1725
      %1735 = vmatmul.bf16.gmra.mxu0 %v1722
      %v1736 = vpop.f32.mrf.mxu0
      %v1737 = vadd.f32 0.0, %v1736
      %v1738 = vpop.f32.mrf.mxu0
      %1739 = vdwg.mxu0
      %1740 = vst.msk [vmem:[#allocation2] sm:$0xff] %vm1072, %v1680
      %1741 = vst.msk [vmem:[#allocation2 + $0x8] sm:$0xff] %vm1072, %v1699
      %1742 = vst.msk [vmem:[#allocation2 + $0x10] sm:$0xff] %vm1072, %v1718
      %1743 = vst.msk [vmem:[#allocation2 + $0x18] sm:$0xff] %vm1072, %v1737
      %v1744 = vld [vmem:[#allocation2] ss:$4 sm:$0xff]
      %v1745 = vld [vmem:[%s1287] ss:$4 sm:$0xff]
      %v1746 = vld [vmem:[%s1289] ss:$4 sm:$0xff]
      %v1747 = vld [vmem:[%s1291] ss:$4 sm:$0xff]
      %1749 = vrot.lane.b32.xlu0 %v1745, 8
      %v1750 = vpop.permute.xlu0 %1749
      %1753 = vrot.lane.b32.xlu0 %v1746, 16
      %v1754 = vpop.permute.xlu0 %1753
      %1757 = vrot.lane.b32.xlu0 %v1747, 24
      %v1758 = vpop.permute.xlu0 %1757
      %v1760 = vsel %vm1072, %v1744, %v1750
      %v1761 = vsel %vm1306, %v1760, %v1754
      %v1762 = vsel %vm1308, %v1761, %v1758
      %v1763 = vpack.c.bf16 %v1762, %v1762
      %v1765 = vperm.slane %v1399, 0
      %v1771 = vunpack.c.l.b16 %v1395
      %v1772 = vunpack.c.l.b16 %v1396
      %v1773 = vunpack.c.l.b16 %v1397
      %v1774 = vunpack.c.l.b16 %v1398
      %v1775 = vpack.c.b16 %v1772, %v1771
      %v1776 = vpack.c.b16 %v1774, %v1773
      %v1780 = vsel %vm957, %v1763, 0
      %1782 = vmatpush.bf16.msra.mxu0 0
      %1783 = vmatpush.bf16.msra.mxu0 0
      %1784 = vmatpush.bf16.msra.mxu0 0
      %1785 = vmatpush.bf16.msra.mxu0 0
      %1786 = vmatpush.bf16.msra.mxu0 0
      %1787 = vmatpush.bf16.msra.mxu0 0
      %1788 = vmatpush.bf16.msra.mxu0 %v1776
      %1789 = vmatpush.bf16.msra.mxu0 %v1775
      %1790 = vmatmul.bf16.gmra.mxu0 %v1780
      %v1791 = vpop.f32.mrf.mxu0
      %v1792 = vadd.f32 %v1765, %v1791
      %v1793 = vpop.f32.mrf.mxu0
      %1794 = vdwg.mxu0
      %v1795 = vadd.f32 %v1792, %v1379
      %v1796 = vsel %vm957, %v1795, 0.0
      %1797 = vadd.xlane.f32.xlu0 %v1796
      %v1798 = vpop.xlane.xlu0 %1797
      %v1799 = vmul.f32 %v1798, %v1352
      %v1800 = vsub.f32 %v1795, %v1799
      %v1801 = vmul.f32 %v1800, %v1800
      %v1802 = vsel %vm957, %v1801, 0.0
      %1803 = vadd.xlane.f32.xlu0 %v1802
      %v1804 = vpop.xlane.xlu0 %1803
      %v1805 = vmul.f32 %v1804, %v1352
      %v1806 = vadd.f32 %v1805, 1e-05
      %v1807 = vrsqrt.pop %v1806
      %v1808 = vmul.f32 %v1807, %v1806
      %v1809 = vmul.f32 %v1808, %v1807
      %v1810 = vmul.f32 0.5, %v1809
      %v1811 = vsub.f32 1.5, %v1810
      %v1812 = vmul.f32 %v1807, %v1811
      %vm1813 = vweird.f32 %v1806
      %vm1814 = vweird.f32 %v1807
      %vm1815 = vmor %vm1813, %vm1814
      %v1816 = vsel %vm1815, %v1807, %v1812
      %v1817 = vmul.f32 %v1800, %v1816
      %v1819 = vperm.slane %v1400, 0
      %v1821 = vmul.f32 %v1819, %v1817
      %v1823 = vperm.slane %v1401, 0
      %v1825 = vadd.f32 %v1821, %v1823
      %v1826 = vld [vmem:[%s47] sm:$0xf]
      %v1827 = vld [vmem:[%s47 + $0x4] sm:$0xf]
      %v1828 = vld [vmem:[%s47 + $0x8] sm:$0xf]
      %v1829 = vld [vmem:[%s47 + $0xc] sm:$0xf]
      %v1830 = vld [vmem:[%s49] sm:$0x1]
      %v1831 = vld [vmem:[%s51] sm:$0xf]
      %v1832 = vld [vmem:[%s51 + $0x4] sm:$0xf]
      %v1833 = vld [vmem:[%s51 + $0x8] sm:$0xf]
      %v1834 = vld [vmem:[%s51 + $0xc] sm:$0xf]
      %v1835 = vld [vmem:[%s51 + $0x10] sm:$0xf]
      %v1836 = vld [vmem:[%s51 + $0x14] sm:$0xf]
      %v1837 = vld [vmem:[%s51 + $0x18] sm:$0xf]
      %v1838 = vld [vmem:[%s51 + $0x1c] sm:$0xf]
      %v1839 = vld [vmem:[%s53] sm:$0x1]
      %v1840 = vld [vmem:[%s55] sm:$0x1]
      %v1841 = vld [vmem:[%s57] sm:$0x1]
      %v1842 = vpack.c.bf16 %v1825, %v1825
      %v1844 = vperm.slane %v1830, 0
      %v1850 = vunpack.c.l.b16 %v1826
      %v1851 = vunpack.c.l.b16 %v1827
      %v1852 = vunpack.c.l.b16 %v1828
      %v1853 = vunpack.c.l.b16 %v1829
      %v1854 = vpack.c.b16 %v1851, %v1850
      %v1855 = vpack.c.b16 %v1853, %v1852
      %v1859 = vsel %vm957, %v1842, 0
      %1861 = vmatpush.bf16.msra.mxu0 0
      %1862 = vmatpush.bf16.msra.mxu0 0
      %1863 = vmatpush.bf16.msra.mxu0 0
      %1864 = vmatpush.bf16.msra.mxu0 0
      %1865 = vmatpush.bf16.msra.mxu0 0
      %1866 = vmatpush.bf16.msra.mxu0 0
      %1867 = vmatpush.bf16.msra.mxu0 %v1855
      %1868 = vmatpush.bf16.msra.mxu0 %v1854
      %1869 = vmatmul.bf16.gmra.mxu0 %v1859
      %v1870 = vpop.f32.mrf.mxu0
      %v1871 = vadd.f32 %v1844, %v1870
      %v1872 = vpop.f32.mrf.mxu0
      %1873 = vdwg.mxu0
      %v1874 = vmax.f32 %v1871, 0.0
      %v1875 = vpack.c.bf16 %v1874, %v1874
      %v1877 = vperm.slane %v1839, 0
      %v1887 = vunpack.c.l.b16 %v1831
      %v1888 = vunpack.c.l.b16 %v1832
      %v1889 = vunpack.c.l.b16 %v1833
      %v1890 = vunpack.c.l.b16 %v1834
      %v1891 = vunpack.c.l.b16 %v1835
      %v1892 = vunpack.c.l.b16 %v1836
      %v1893 = vunpack.c.l.b16 %v1837
      %v1894 = vunpack.c.l.b16 %v1838
      %v1895 = vpack.c.b16 %v1888, %v1887
      %v1896 = vpack.c.b16 %v1890, %v1889
      %v1897 = vpack.c.b16 %v1892, %v1891
      %v1898 = vpack.c.b16 %v1894, %v1893
      %vm1903 = vcmask 523264
      %v1905 = vsel %vm1903, %v1875, 0
      %1907 = vmatpush.bf16.msra.mxu0 0
      %1908 = vmatpush.bf16.msra.mxu0 0
      %1909 = vmatpush.bf16.msra.mxu0 0
      %1910 = vmatpush.bf16.msra.mxu0 0
      %1911 = vmatpush.bf16.msra.mxu0 %v1898
      %1912 = vmatpush.bf16.msra.mxu0 %v1897
      %1913 = vmatpush.bf16.msra.mxu0 %v1896
      %1914 = vmatpush.bf16.msra.mxu0 %v1895
      %1915 = vmatmul.bf16.gmra.mxu0 %v1905
      %v1916 = vpop.f32.mrf.mxu0
      %v1917 = vadd.f32 %v1877, %v1916
      %v1918 = vpop.f32.mrf.mxu0
      %1919 = vdwg.mxu0
      %v1920 = vadd.f32 %v1917, %v1825
      %v1921 = vsel %vm957, %v1920, 0.0
      %1922 = vadd.xlane.f32.xlu0 %v1921
      %v1923 = vpop.xlane.xlu0 %1922
      %v1924 = vmul.f32 %v1923, %v1352
      %v1925 = vsub.f32 %v1920, %v1924
      %v1926 = vmul.f32 %v1925, %v1925
      %v1927 = vsel %vm957, %v1926, 0.0
      %1928 = vadd.xlane.f32.xlu0 %v1927
      %v1929 = vpop.xlane.xlu0 %1928
      %v1930 = vmul.f32 %v1929, %v1352
      %v1931 = vadd.f32 %v1930, 1e-05
      %v1932 = vrsqrt.pop %v1931
      %v1933 = vmul.f32 %v1932, %v1931
      %v1934 = vmul.f32 %v1933, %v1932
      %v1935 = vmul.f32 0.5, %v1934
      %v1936 = vsub.f32 1.5, %v1935
      %v1937 = vmul.f32 %v1932, %v1936
      %vm1938 = vweird.f32 %v1931
      %vm1939 = vweird.f32 %v1932
      %vm1940 = vmor %vm1938, %vm1939
      %v1941 = vsel %vm1940, %v1932, %v1937
      %v1942 = vmul.f32 %v1925, %v1941
      %v1944 = vperm.slane %v1840, 0
      %v1946 = vmul.f32 %v1944, %v1942
      %v1948 = vperm.slane %v1841, 0
      %v1950 = vadd.f32 %v1946, %v1948
      %1951 = vst.msk [vmem:[%s914] sm:$0xff] %vm957, %v1950
      %p1952 = scmp.lt.s32.totalorder %s70, 1
      %s1953 = scalar_select %p1952, %s70, 1
      %s1954 = smul.addr %s1953, 8
      %s1955 = scalar_lea.vmem %s59, %s1954
      // Predicated region
      $region137: #{decoder_forward.2} parent=135 // pred_check
        %p1956 = pneg %p707
      $region138: #{decoder_forward.2} parent=135 // pred_check_branch
        %1958 = sbr.rel (%p1956) target = $region140
      $region139: #{decoder_forward.2} parent=135 // pred_region
        _
      $region140: #{decoder_forward.2} parent=135 // pred_fallthru
        _
    $region136: #{decoder_forward.2} parent=5 // pred_fallthru
      _
    %p1959 = scmp.le.s32.totalorder 2, %s65
    // Predicated region
    $region141: #{decoder_forward.2} parent=5 // pred_check
      %p1960 = pneg %p1959
    $region142: #{decoder_forward.2} parent=5 // pred_check_branch
      %1962 = sbr.rel (%p1960) target = $region144
    $region143: #{decoder_forward.2} parent=5 // pred_region
      %s1963 = ssub.s32 %s65, 2
      // Predicated region
      $region145: #{decoder_forward.2} parent=143 // pred_check
        %p1964 = pneg %p713
      $region146: #{decoder_forward.2} parent=143 // pred_check_branch
        %1966 = sbr.rel (%p1964) target = $region148
      $region147: #{decoder_forward.2} parent=143 // pred_region
        %p1967 = scmp.lt.s32.totalorder %s71, 1
        %s1968 = scalar_select %p1967, %s71, 1
        %s1969 = smul.addr %s1968, 8
        %s1970 = scalar_lea.vmem %s59, %s1969
      $region148: #{decoder_forward.2} parent=143 // pred_fallthru
        _
    $region144: #{decoder_forward.2} parent=5 // pred_fallthru
      _
  $region6: #{decoder_forward.2} parent=0 // loop_footer
    %s69 = sadd.s32 1, %s65
  $region7: #{decoder_forward.2} parent=0 // loop_footer_branch
    %64 = sbr.rel target = $region3
  $region8: #{decoder_forward.2} parent=0 // loop_exit
    _

</llo_original>
